<compile_context>
chip_gen: v6e
topology: v6e:2x2x1
jax: 0.10.0
libtpu: 0.0.40
codegen_flags: <defaults>
</compile_context>

<pallas_src>
import functools

import jax
import jax.numpy as jnp
from jax.experimental import pallas as pl
from jax.experimental.pallas import tpu as pltpu

# ---------------- hyperparameters (small, consistent with the module) -------
VOCAB_SIZE = 65                 # len(chars) for a char-level corpus
VOCAB_PAD  = 128                # vocab padded to a full 128-lane tile
N_EMBED    = 128                # n_embed
N_HEAD     = 4                  # n_head
HEAD_SIZE  = N_EMBED // N_HEAD  # 32
N_LAYER    = 2                  # n_layer
BLOCK_SIZE = 32                 # block_size (max context)
LN_EPS     = 1e-5
NEG_INF    = -1e30


# ------------------------------ fused Pallas kernel --------------------------
def fused_forward_kernel(
    idx_ref,                     # (M, 1)        int32  flattened token ids (M = B*T)
    tok_emb_ref,                 # (Vp, C)       f32    zero-padded rows >= vocab
    pos_emb_ref,                 # (BLOCK, C)    f32
    ln1_g_ref, ln1_b_ref,        # (L, 1, C)     f32
    wqkv_ref,                    # (L, C, 3C)    bf16   [wq*scale | wk | wv]
    proj_w_ref, proj_b_ref,      # (L, C, C) bf16, (L, 1, C) f32
    ln2_g_ref, ln2_b_ref,        # (L, 1, C)     f32
    ff1_w_ref, ff1_b_ref,        # (L, C, 4C) bf16, (L, 1, 4C) f32
    ff2_w_ref, ff2_b_ref,        # (L, 4C, C) bf16, (L, 1, C) f32
    lnf_g_ref, lnf_b_ref,        # (1, C)        f32
    lmw_ref, lmb_ref,            # (C, Vp) bf16, (1, Vp) f32 (pad lanes = -1e30)
    out_ref,                     # (B, T, Vp)    f32
    *, batch, seq,
):
    C = N_EMBED
    m = batch * seq

    def _ln(x, g, b):
        # LayerNorm over last dim, f32 math.
        mu = jnp.mean(x, axis=-1, keepdims=True)
        var = jnp.mean((x - mu) ** 2, axis=-1, keepdims=True)
        return (x - mu) * jax.lax.rsqrt(var + LN_EPS) * g + b

    # ---- fused embedding: one-hot(idx) @ tok_emb  +  pos_emb ----------------
    idx_col = idx_ref[...]                                           # (M, 1) i32
    vocab_iota = jax.lax.broadcasted_iota(jnp.int32, (m, VOCAB_PAD), 1)
    onehot = (idx_col == vocab_iota).astype(jnp.float32)             # (M, Vp)
    x = jnp.dot(onehot, tok_emb_ref[...],
                preferred_element_type=jnp.float32)                  # (M, C) f32
    pos = pos_emb_ref[...][:seq]                                     # (T, C) static slice
    x = x + jnp.concatenate([pos] * batch, axis=0)                   # tile over batch

    # ---- constants hoisted out of the layer loop (broadcasts aren't CSE'd) --
    row = jax.lax.broadcasted_iota(jnp.int32, (seq, seq), 0)
    col = jax.lax.broadcasted_iota(jnp.int32, (seq, seq), 1)
    causal_add = jnp.where(col <= row, 0.0, NEG_INF).astype(jnp.float32)
    lane = jax.lax.broadcasted_iota(jnp.int32, (1, C), 1)
    head_masks = [((lane >= h * HEAD_SIZE) & (lane < (h + 1) * HEAD_SIZE)
                   ).astype(jnp.float32) for h in range(N_HEAD)]     # (1, C) each

    for l in range(N_LAYER):                                         # static unroll
        # ---- x = x + MHA(LN1(x)) ----
        xn = _ln(x, ln1_g_ref[l], ln1_b_ref[l])                      # (M, C) f32
        qkv = jnp.dot(xn.astype(jnp.bfloat16), wqkv_ref[l],
                      preferred_element_type=jnp.float32)            # (M, 3C) f32
        # 128-lane-aligned slices (no sub-tile relayout); score scale is already
        # folded into the Q columns of wqkv.
        q = qkv[:, :C]
        k = qkv[:, C:2 * C]
        v = qkv[:, 2 * C:3 * C]

        att_rows = []
        for b in range(batch):                                       # static unroll
            lo = b * seq
            q_b = q[lo:lo + seq]
            k_b = k[lo:lo + seq].astype(jnp.bfloat16)
            v_b = v[lo:lo + seq]
            att_b = jnp.zeros((seq, C), jnp.float32)
            for h in range(N_HEAD):                                  # static unroll
                # lane-masked Q keeps the matmul 128-lane dense; zero lanes of Q
                # kill the cross-head contributions in the contraction.
                qm = (q_b * head_masks[h]).astype(jnp.bfloat16)
                s = jax.lax.dot_general(
                    qm, k_b, (((1,), (1,)), ((), ())),
                    preferred_element_type=jnp.float32)              # (T, T)
                s = s + causal_add
                s = s - jnp.max(s, axis=-1, keepdims=True)
                p = jnp.exp(s)
                p = p * pl.reciprocal(jnp.sum(p, axis=-1, keepdims=True),
                                      approx=True)
                vm = (v_b * head_masks[h]).astype(jnp.bfloat16)      # (T, C)
                # only head h's lanes of vm are nonzero -> accumulates per head
                # output into the right lanes of att_b (no concat needed).
                att_b = att_b + jnp.dot(p.astype(jnp.bfloat16), vm,
                                        preferred_element_type=jnp.float32)
            att_rows.append(att_b)
        att = jnp.concatenate(att_rows, axis=0) if batch > 1 else att_rows[0]

        sa = jnp.dot(att.astype(jnp.bfloat16), proj_w_ref[l],
                     preferred_element_type=jnp.float32) + proj_b_ref[l]
        x = x + sa

        # ---- x = x + FFN(LN2(x)) ----
        xn = _ln(x, ln2_g_ref[l], ln2_b_ref[l])
        h1 = jnp.dot(xn.astype(jnp.bfloat16), ff1_w_ref[l],
                     preferred_element_type=jnp.float32) + ff1_b_ref[l]
        h1 = jnp.maximum(h1, 0.0)                                    # ReLU in f32
        ff = jnp.dot(h1.astype(jnp.bfloat16), ff2_w_ref[l],
                     preferred_element_type=jnp.float32) + ff2_b_ref[l]
        x = x + ff

    # ---- logits = lm_head(LN_f(x)), padded to 128 lanes ----------------------
    xn = _ln(x, lnf_g_ref[...], lnf_b_ref[...])
    logits = jnp.dot(xn.astype(jnp.bfloat16), lmw_ref[...],
                     preferred_element_type=jnp.float32) + lmb_ref[...]   # (M, Vp)
    for b in range(batch):                                           # static sublane writes
        out_ref[b] = logits[b * seq:(b + 1) * seq].astype(out_ref.dtype)


# ------------------------------ params --------------------------------------
def init_params(key):
    def nrm(k, shape, scale=0.02):
        return (scale * jax.random.normal(k, shape)).astype(jnp.float32)

    keys = jax.random.split(key, 4 + N_LAYER)
    tok = nrm(keys[0], (VOCAB_SIZE, N_EMBED))
    params = {
        # token table zero-padded to 128 rows (pad rows are never selected)
        "tok_emb": jnp.pad(tok, ((0, VOCAB_PAD - VOCAB_SIZE), (0, 0))),
        "pos_emb": nrm(keys[1], (BLOCK_SIZE, N_EMBED)),
        "ln_f_g": jnp.ones((1, N_EMBED), jnp.float32),
        "ln_f_b": jnp.zeros((1, N_EMBED), jnp.float32),
    }
    # lm_head padded vocab 65 -> 128; padded bias lanes get -1e30 so padded
    # logits are safe for downstream softmax/argmax without slicing.
    lm_w = nrm(keys[2], (N_EMBED, VOCAB_SIZE))
    params["lm_head_w"] = jnp.pad(
        lm_w, ((0, 0), (0, VOCAB_PAD - VOCAB_SIZE))).astype(jnp.bfloat16)
    params["lm_head_b"] = jnp.concatenate(
        [jnp.zeros((1, VOCAB_SIZE), jnp.float32),
         jnp.full((1, VOCAB_PAD - VOCAB_SIZE), NEG_INF, jnp.float32)], axis=1)

    # reference Head scales scores by C**(-0.5) with C = n_embed; fold into wq.
    scale = float(N_EMBED) ** -0.5

    ln1_g, ln1_b, ln2_g, ln2_b = [], [], [], []
    wqkv, proj_w, proj_b = [], [], []
    ff1_w, ff1_b, ff2_w, ff2_b = [], [], [], []
    for li in range(N_LAYER):
        bk = jax.random.split(keys[4 + li], 6)
        ln1_g.append(jnp.ones((1, N_EMBED), jnp.float32))
        ln1_b.append(jnp.zeros((1, N_EMBED), jnp.float32))
        ln2_g.append(jnp.ones((1, N_EMBED), jnp.float32))
        ln2_b.append(jnp.zeros((1, N_EMBED), jnp.float32))
        wq = nrm(bk[0], (N_EMBED, N_EMBED)) * scale      # scale folded into Q
        wk = nrm(bk[1], (N_EMBED, N_EMBED))
        wv = nrm(bk[2], (N_EMBED, N_EMBED))
        wqkv.append(jnp.concatenate([wq, wk, wv], axis=1))        # (C, 3C)
        proj_w.append(nrm(bk[3], (N_EMBED, N_EMBED)))
        proj_b.append(jnp.zeros((1, N_EMBED), jnp.float32))
        ff1_w.append(nrm(bk[4], (N_EMBED, 4 * N_EMBED)))
        ff1_b.append(jnp.zeros((1, 4 * N_EMBED), jnp.float32))
        ff2_w.append(nrm(bk[5], (4 * N_EMBED, N_EMBED)))
        ff2_b.append(jnp.zeros((1, N_EMBED), jnp.float32))

    params.update({
        "ln1_g": jnp.stack(ln1_g), "ln1_b": jnp.stack(ln1_b),
        "ln2_g": jnp.stack(ln2_g), "ln2_b": jnp.stack(ln2_b),
        "wqkv": jnp.stack(wqkv).astype(jnp.bfloat16),
        "proj_w": jnp.stack(proj_w).astype(jnp.bfloat16),
        "proj_b": jnp.stack(proj_b),
        "ff1_w": jnp.stack(ff1_w).astype(jnp.bfloat16),
        "ff1_b": jnp.stack(ff1_b),
        "ff2_w": jnp.stack(ff2_w).astype(jnp.bfloat16),
        "ff2_b": jnp.stack(ff2_b),
    })
    return params


# ------------------------------ forward --------------------------------------
def bigram_lm_forward(params, idx):
    """idx: (B, T) int32 token ids. Returns (logits (B, T, vocab), None)."""
    b, t = idx.shape
    m = b * t
    c, l, vp = N_EMBED, N_LAYER, VOCAB_PAD

    idx_flat = idx.reshape(m, 1).astype(jnp.int32)       # (M, 1) — tiny metadata op

    kernel = functools.partial(fused_forward_kernel, batch=b, seq=t)

    z2 = lambda i: (0, 0)
    z3 = lambda i: (0, 0, 0)
    in_specs = [
        pl.BlockSpec((m, 1), z2),                # idx (flattened)
        pl.BlockSpec((vp, c), z2),               # tok_emb (padded)
        pl.BlockSpec((BLOCK_SIZE, c), z2),       # pos_emb
        pl.BlockSpec((l, 1, c), z3),             # ln1_g
        pl.BlockSpec((l, 1, c), z3),             # ln1_b
        pl.BlockSpec((l, c, 3 * c), z3),         # wqkv
        pl.BlockSpec((l, c, c), z3),             # proj_w
        pl.BlockSpec((l, 1, c), z3),             # proj_b
        pl.BlockSpec((l, 1, c), z3),             # ln2_g
        pl.BlockSpec((l, 1, c), z3),             # ln2_b
        pl.BlockSpec((l, c, 4 * c), z3),         # ff1_w
        pl.BlockSpec((l, 1, 4 * c), z3),         # ff1_b
        pl.BlockSpec((l, 4 * c, c), z3),         # ff2_w
        pl.BlockSpec((l, 1, c), z3),             # ff2_b
        pl.BlockSpec((1, c), z2),                # ln_f_g
        pl.BlockSpec((1, c), z2),                # ln_f_b
        pl.BlockSpec((c, vp), z2),               # lm_head_w (padded)
        pl.BlockSpec((1, vp), z2),               # lm_head_b (padded, -1e30 lanes)
    ]
    out_spec = pl.BlockSpec((b, t, vp), z3)

    logits_padded = pl.pallas_call(
        kernel,
        out_shape=jax.ShapeDtypeStruct((b, t, vp), jnp.float32),
        grid=(1,),                               # whole batch resident per call
        in_specs=in_specs,
        out_specs=out_spec,
        compiler_params=pltpu.CompilerParams(
            dimension_semantics=("arbitrary",)),
    )(
        idx_flat,
        params["tok_emb"], params["pos_emb"],
        params["ln1_g"], params["ln1_b"],
        params["wqkv"],
        params["proj_w"], params["proj_b"],
        params["ln2_g"], params["ln2_b"],
        params["ff1_w"], params["ff1_b"],
        params["ff2_w"], params["ff2_b"],
        params["ln_f_g"], params["ln_f_b"],
        params["lm_head_w"], params["lm_head_b"],
    )
    # Slice off vocab padding only to preserve the reference output shape; a
    # downstream softmax/argmax could consume the padded logits directly since
    # padded lanes are -1e30.
    logits = logits_padded[:, :, :VOCAB_SIZE]
    return logits, None


# ----------------------------------- main ------------------------------------
if __name__ == "__main__":
    key = jax.random.PRNGKey(0)
    pkey, ikey = jax.random.split(key)

    params = init_params(pkey)

    B, T = 2, 16
    idx = jax.random.randint(ikey, (B, T), 0, VOCAB_SIZE, dtype=jnp.int32)

    logits, loss = jax.jit(bigram_lm_forward)(params, idx)
    logits = jax.block_until_ready(logits)

    assert logits.shape == (B, T, VOCAB_SIZE), logits.shape
    assert loss is None
    assert bool(jnp.all(jnp.isfinite(logits)))
    print("KERNEL_OK")
</pallas_src>

<mosaic_0001>
module attributes {stable_mosaic.version = 11 : i64} {
  func.func @fused_forward_kernel(%arg0: i32, %arg1: memref<32x1xi32, #tpu.memory_space<vmem>>, %arg2: memref<128x128xf32, #tpu.memory_space<vmem>>, %arg3: memref<32x128xf32, #tpu.memory_space<vmem>>, %arg4: memref<2x1x128xf32, #tpu.memory_space<vmem>>, %arg5: memref<2x1x128xf32, #tpu.memory_space<vmem>>, %arg6: memref<2x128x384xbf16, #tpu.memory_space<vmem>>, %arg7: memref<2x128x128xbf16, #tpu.memory_space<vmem>>, %arg8: memref<2x1x128xf32, #tpu.memory_space<vmem>>, %arg9: memref<2x1x128xf32, #tpu.memory_space<vmem>>, %arg10: memref<2x1x128xf32, #tpu.memory_space<vmem>>, %arg11: memref<2x128x512xbf16, #tpu.memory_space<vmem>>, %arg12: memref<2x1x512xf32, #tpu.memory_space<vmem>>, %arg13: memref<2x512x128xbf16, #tpu.memory_space<vmem>>, %arg14: memref<2x1x128xf32, #tpu.memory_space<vmem>>, %arg15: memref<1x128xf32, #tpu.memory_space<vmem>>, %arg16: memref<1x128xf32, #tpu.memory_space<vmem>>, %arg17: memref<128x128xbf16, #tpu.memory_space<vmem>>, %arg18: memref<1x128xf32, #tpu.memory_space<vmem>>, %arg19: memref<2x16x128xf32, #tpu.memory_space<vmem>>) attributes {dimension_semantics = [#tpu.dimension_semantics<arbitrary>], iteration_bounds = array<i64: 1>, scalar_prefetch = 0 : i64, scratch_operands = 0 : i64, tpu.core_type = #tpu.core_type<tc>, window_params = [{pipeline_mode = #tpu.pipeline_mode<synchronous>, transform_indices = @transform_0, window_bounds = array<i64: 32, 1>}, {pipeline_mode = #tpu.pipeline_mode<synchronous>, transform_indices = @transform_1, window_bounds = array<i64: 128, 128>}, {pipeline_mode = #tpu.pipeline_mode<synchronous>, transform_indices = @transform_2, window_bounds = array<i64: 32, 128>}, {pipeline_mode = #tpu.pipeline_mode<synchronous>, transform_indices = @transform_3, window_bounds = array<i64: 2, 1, 128>}, {pipeline_mode = #tpu.pipeline_mode<synchronous>, transform_indices = @transform_4, window_bounds = array<i64: 2, 1, 128>}, {pipeline_mode = #tpu.pipeline_mode<synchronous>, transform_indices = @transform_5, window_bounds = array<i64: 2, 128, 384>}, {pipeline_mode = #tpu.pipeline_mode<synchronous>, transform_indices = @transform_6, window_bounds = array<i64: 2, 128, 128>}, {pipeline_mode = #tpu.pipeline_mode<synchronous>, transform_indices = @transform_7, window_bounds = array<i64: 2, 1, 128>}, {pipeline_mode = #tpu.pipeline_mode<synchronous>, transform_indices = @transform_8, window_bounds = array<i64: 2, 1, 128>}, {pipeline_mode = #tpu.pipeline_mode<synchronous>, transform_indices = @transform_9, window_bounds = array<i64: 2, 1, 128>}, {pipeline_mode = #tpu.pipeline_mode<synchronous>, transform_indices = @transform_10, window_bounds = array<i64: 2, 128, 512>}, {pipeline_mode = #tpu.pipeline_mode<synchronous>, transform_indices = @transform_11, window_bounds = array<i64: 2, 1, 512>}, {pipeline_mode = #tpu.pipeline_mode<synchronous>, transform_indices = @transform_12, window_bounds = array<i64: 2, 512, 128>}, {pipeline_mode = #tpu.pipeline_mode<synchronous>, transform_indices = @transform_13, window_bounds = array<i64: 2, 1, 128>}, {pipeline_mode = #tpu.pipeline_mode<synchronous>, transform_indices = @transform_14, window_bounds = array<i64: 1, 128>}, {pipeline_mode = #tpu.pipeline_mode<synchronous>, transform_indices = @transform_15, window_bounds = array<i64: 1, 128>}, {pipeline_mode = #tpu.pipeline_mode<synchronous>, transform_indices = @transform_16, window_bounds = array<i64: 128, 128>}, {pipeline_mode = #tpu.pipeline_mode<synchronous>, transform_indices = @transform_17, window_bounds = array<i64: 1, 128>}, {pipeline_mode = #tpu.pipeline_mode<synchronous>, transform_indices = @transform_18, window_bounds = array<i64: 2, 16, 128>}]} {
    %c0 = arith.constant 0 : index
    %c0_0 = arith.constant 0 : index
    %0 = vector.load %arg1[%c0, %c0_0] : memref<32x1xi32, #tpu.memory_space<vmem>>, vector<32x1xi32>
    %1 = tpu.iota {dimensions = array<i32: 1>} : vector<32x128xi32>
    %2 = vector.broadcast %0 : vector<32x1xi32> to vector<32x128xi32>
    %3 = arith.cmpi eq, %2, %1 : vector<32x128xi32>
    %4 = arith.extui %3 : vector<32x128xi1> to vector<32x128xi32>
    %5 = arith.sitofp %4 : vector<32x128xi32> to vector<32x128xf32>
    %c0_1 = arith.constant 0 : index
    %c0_2 = arith.constant 0 : index
    %6 = vector.load %arg2[%c0_1, %c0_2] : memref<128x128xf32, #tpu.memory_space<vmem>>, vector<128x128xf32>
    %cst = arith.constant dense<0.000000e+00> : vector<32x128xf32>
    %7 = tpu.matmul %5, %6, %cst {dimension_numbers = #tpu.dot_dimension_numbers<[1], [0], [0], [1], [0, 0, 1, 1], [], []>} : vector<32x128xf32>, vector<128x128xf32>, vector<32x128xf32> -> vector<32x128xf32>
    %c0_3 = arith.constant 0 : index
    %c0_4 = arith.constant 0 : index
    %8 = vector.load %arg3[%c0_3, %c0_4] : memref<32x128xf32, #tpu.memory_space<vmem>>, vector<32x128xf32>
    %9 = vector.extract_strided_slice %8 {offsets = [0, 0], sizes = [16, 128], strides = [1, 1]} : vector<32x128xf32> to vector<16x128xf32>
    %10 = tpu.concatenate %9, %9 in 0 : vector<16x128xf32>, vector<16x128xf32> -> vector<32x128xf32>
    %11 = arith.addf %7, %10 : vector<32x128xf32>
    %12 = tpu.iota {dimensions = array<i32: 0>} : vector<16x16xi32>
    %13 = tpu.iota {dimensions = array<i32: 1>} : vector<16x16xi32>
    %14 = arith.cmpi sle, %13, %12 : vector<16x16xi32>
    %cst_5 = arith.constant 0.000000e+00 : f32
    %cst_6 = arith.constant -1.000000e+30 : f32
    %15 = vector.broadcast %cst_5 : f32 to vector<16x16xf32>
    %16 = vector.broadcast %cst_6 : f32 to vector<16x16xf32>
    %17 = arith.select %14, %15, %16 : vector<16x16xi1>, vector<16x16xf32>
    %18 = tpu.iota {dimensions = array<i32: 1>} : vector<1x128xi32>
    %c0_i32 = arith.constant 0 : i32
    %19 = vector.broadcast %c0_i32 : i32 to vector<1x128xi32>
    %20 = arith.cmpi sge, %18, %19 : vector<1x128xi32>
    %c32_i32 = arith.constant 32 : i32
    %21 = vector.broadcast %c32_i32 : i32 to vector<1x128xi32>
    %22 = arith.cmpi slt, %18, %21 : vector<1x128xi32>
    %23 = arith.andi %20, %22 : vector<1x128xi1>
    %24 = arith.extui %23 : vector<1x128xi1> to vector<1x128xi32>
    %25 = arith.sitofp %24 : vector<1x128xi32> to vector<1x128xf32>
    %c32_i32_7 = arith.constant 32 : i32
    %26 = vector.broadcast %c32_i32_7 : i32 to vector<1x128xi32>
    %27 = arith.cmpi sge, %18, %26 : vector<1x128xi32>
    %c64_i32 = arith.constant 64 : i32
    %28 = vector.broadcast %c64_i32 : i32 to vector<1x128xi32>
    %29 = arith.cmpi slt, %18, %28 : vector<1x128xi32>
    %30 = arith.andi %27, %29 : vector<1x128xi1>
    %31 = arith.extui %30 : vector<1x128xi1> to vector<1x128xi32>
    %32 = arith.sitofp %31 : vector<1x128xi32> to vector<1x128xf32>
    %c64_i32_8 = arith.constant 64 : i32
    %33 = vector.broadcast %c64_i32_8 : i32 to vector<1x128xi32>
    %34 = arith.cmpi sge, %18, %33 : vector<1x128xi32>
    %c96_i32 = arith.constant 96 : i32
    %35 = vector.broadcast %c96_i32 : i32 to vector<1x128xi32>
    %36 = arith.cmpi slt, %18, %35 : vector<1x128xi32>
    %37 = arith.andi %34, %36 : vector<1x128xi1>
    %38 = arith.extui %37 : vector<1x128xi1> to vector<1x128xi32>
    %39 = arith.sitofp %38 : vector<1x128xi32> to vector<1x128xf32>
    %c96_i32_9 = arith.constant 96 : i32
    %40 = vector.broadcast %c96_i32_9 : i32 to vector<1x128xi32>
    %41 = arith.cmpi sge, %18, %40 : vector<1x128xi32>
    %c128_i32 = arith.constant 128 : i32
    %42 = vector.broadcast %c128_i32 : i32 to vector<1x128xi32>
    %43 = arith.cmpi slt, %18, %42 : vector<1x128xi32>
    %44 = arith.andi %41, %43 : vector<1x128xi1>
    %45 = arith.extui %44 : vector<1x128xi1> to vector<1x128xi32>
    %46 = arith.sitofp %45 : vector<1x128xi32> to vector<1x128xf32>
    %c0_10 = arith.constant 0 : index
    %c0_11 = arith.constant 0 : index
    %c0_12 = arith.constant 0 : index
    %47 = vector.load %arg4[%c0_10, %c0_11, %c0_12] : memref<2x1x128xf32, #tpu.memory_space<vmem>>, vector<1x1x128xf32>
    %48 = vector.shape_cast %47 : vector<1x1x128xf32> to vector<1x128xf32>
    %c0_13 = arith.constant 0 : index
    %c0_14 = arith.constant 0 : index
    %c0_15 = arith.constant 0 : index
    %49 = vector.load %arg5[%c0_13, %c0_14, %c0_15] : memref<2x1x128xf32, #tpu.memory_space<vmem>>, vector<1x1x128xf32>
    %50 = vector.shape_cast %49 : vector<1x1x128xf32> to vector<1x128xf32>
    %cst_16 = arith.constant dense<0.000000e+00> : vector<32xf32>
    %51 = vector.multi_reduction <add>, %11, %cst_16 [1] : vector<32x128xf32> to vector<32xf32>
    %52 = vector.shape_cast %51 : vector<32xf32> to vector<32x1xf32>
    %cst_17 = arith.constant 1.280000e+02 : f32
    %53 = vector.broadcast %cst_17 : f32 to vector<32x1xf32>
    %54 = arith.divf %52, %53 : vector<32x1xf32>
    %55 = vector.broadcast %54 : vector<32x1xf32> to vector<32x128xf32>
    %56 = arith.subf %11, %55 : vector<32x128xf32>
    %57 = arith.mulf %56, %56 : vector<32x128xf32>
    %cst_18 = arith.constant dense<0.000000e+00> : vector<32xf32>
    %58 = vector.multi_reduction <add>, %57, %cst_18 [1] : vector<32x128xf32> to vector<32xf32>
    %59 = vector.shape_cast %58 : vector<32xf32> to vector<32x1xf32>
    %cst_19 = arith.constant 1.280000e+02 : f32
    %60 = vector.broadcast %cst_19 : f32 to vector<32x1xf32>
    %61 = arith.divf %59, %60 : vector<32x1xf32>
    %62 = vector.broadcast %54 : vector<32x1xf32> to vector<32x128xf32>
    %63 = arith.subf %11, %62 : vector<32x128xf32>
    %cst_20 = arith.constant 9.99999974E-6 : f32
    %64 = vector.broadcast %cst_20 : f32 to vector<32x1xf32>
    %65 = arith.addf %61, %64 : vector<32x1xf32>
    %66 = math.rsqrt %65 : vector<32x1xf32>
    %67 = vector.broadcast %66 : vector<32x1xf32> to vector<32x128xf32>
    %68 = arith.mulf %63, %67 : vector<32x128xf32>
    %69 = vector.broadcast %48 : vector<1x128xf32> to vector<32x128xf32>
    %70 = arith.mulf %68, %69 : vector<32x128xf32>
    %71 = vector.broadcast %50 : vector<1x128xf32> to vector<32x128xf32>
    %72 = arith.addf %70, %71 : vector<32x128xf32>
    %73 = arith.truncf %72 : vector<32x128xf32> to vector<32x128xbf16>
    %c0_21 = arith.constant 0 : index
    %c0_22 = arith.constant 0 : index
    %c0_23 = arith.constant 0 : index
    %74 = vector.load %arg6[%c0_21, %c0_22, %c0_23] : memref<2x128x384xbf16, #tpu.memory_space<vmem>>, vector<1x128x384xbf16>
    %75 = vector.shape_cast %74 : vector<1x128x384xbf16> to vector<128x384xbf16>
    %cst_24 = arith.constant dense<0.000000e+00> : vector<32x384xf32>
    %76 = tpu.matmul %73, %75, %cst_24 {dimension_numbers = #tpu.dot_dimension_numbers<[1], [0], [0], [1], [0, 0, 1, 1], [], []>} : vector<32x128xbf16>, vector<128x384xbf16>, vector<32x384xf32> -> vector<32x384xf32>
    %77 = vector.extract_strided_slice %76 {offsets = [0, 0], sizes = [32, 128], strides = [1, 1]} : vector<32x384xf32> to vector<32x128xf32>
    %78 = vector.extract_strided_slice %76 {offsets = [0, 128], sizes = [32, 128], strides = [1, 1]} : vector<32x384xf32> to vector<32x128xf32>
    %79 = vector.extract_strided_slice %76 {offsets = [0, 256], sizes = [32, 128], strides = [1, 1]} : vector<32x384xf32> to vector<32x128xf32>
    %80 = vector.extract_strided_slice %77 {offsets = [0, 0], sizes = [16, 128], strides = [1, 1]} : vector<32x128xf32> to vector<16x128xf32>
    %81 = vector.extract_strided_slice %78 {offsets = [0, 0], sizes = [16, 128], strides = [1, 1]} : vector<32x128xf32> to vector<16x128xf32>
    %82 = arith.truncf %81 : vector<16x128xf32> to vector<16x128xbf16>
    %83 = vector.extract_strided_slice %79 {offsets = [0, 0], sizes = [16, 128], strides = [1, 1]} : vector<32x128xf32> to vector<16x128xf32>
    %cst_25 = arith.constant 0.000000e+00 : f32
    %84 = vector.broadcast %cst_25 : f32 to vector<16x128xf32>
    %85 = vector.broadcast %25 : vector<1x128xf32> to vector<16x128xf32>
    %86 = arith.mulf %80, %85 : vector<16x128xf32>
    %87 = arith.truncf %86 : vector<16x128xf32> to vector<16x128xbf16>
    %cst_26 = arith.constant dense<0.000000e+00> : vector<16x16xf32>
    %88 = tpu.matmul %87, %82, %cst_26 {dimension_numbers = #tpu.dot_dimension_numbers<[1], [1], [0], [0], [0, 0, 1, 0], [], []>} : vector<16x128xbf16>, vector<16x128xbf16>, vector<16x16xf32> -> vector<16x16xf32>
    %89 = arith.addf %88, %17 : vector<16x16xf32>
    %cst_27 = arith.constant dense<0xFF800000> : vector<16xf32>
    %90 = vector.multi_reduction <maximumf>, %89, %cst_27 [1] : vector<16x16xf32> to vector<16xf32>
    %91 = vector.shape_cast %90 : vector<16xf32> to vector<16x1xf32>
    %92 = vector.broadcast %91 : vector<16x1xf32> to vector<16x16xf32>
    %93 = arith.subf %89, %92 : vector<16x16xf32>
    %94 = math.exp %93 : vector<16x16xf32>
    %cst_28 = arith.constant dense<0.000000e+00> : vector<16xf32>
    %95 = vector.multi_reduction <add>, %94, %cst_28 [1] : vector<16x16xf32> to vector<16xf32>
    %96 = vector.shape_cast %95 : vector<16xf32> to vector<16x1xf32>
    %97 = tpu.reciprocal %96 {approx = true} : vector<16x1xf32> -> vector<16x1xf32>
    %98 = vector.broadcast %97 : vector<16x1xf32> to vector<16x16xf32>
    %99 = arith.mulf %94, %98 : vector<16x16xf32>
    %100 = vector.broadcast %25 : vector<1x128xf32> to vector<16x128xf32>
    %101 = arith.mulf %83, %100 : vector<16x128xf32>
    %102 = arith.truncf %101 : vector<16x128xf32> to vector<16x128xbf16>
    %103 = arith.truncf %99 : vector<16x16xf32> to vector<16x16xbf16>
    %cst_29 = arith.constant dense<0.000000e+00> : vector<16x128xf32>
    %104 = tpu.matmul %103, %102, %cst_29 {dimension_numbers = #tpu.dot_dimension_numbers<[1], [0], [0], [1], [0, 0, 1, 1], [], []>} : vector<16x16xbf16>, vector<16x128xbf16>, vector<16x128xf32> -> vector<16x128xf32>
    %105 = arith.addf %84, %104 : vector<16x128xf32>
    %106 = vector.broadcast %32 : vector<1x128xf32> to vector<16x128xf32>
    %107 = arith.mulf %80, %106 : vector<16x128xf32>
    %108 = arith.truncf %107 : vector<16x128xf32> to vector<16x128xbf16>
    %cst_30 = arith.constant dense<0.000000e+00> : vector<16x16xf32>
    %109 = tpu.matmul %108, %82, %cst_30 {dimension_numbers = #tpu.dot_dimension_numbers<[1], [1], [0], [0], [0, 0, 1, 0], [], []>} : vector<16x128xbf16>, vector<16x128xbf16>, vector<16x16xf32> -> vector<16x16xf32>
    %110 = arith.addf %109, %17 : vector<16x16xf32>
    %cst_31 = arith.constant dense<0xFF800000> : vector<16xf32>
    %111 = vector.multi_reduction <maximumf>, %110, %cst_31 [1] : vector<16x16xf32> to vector<16xf32>
    %112 = vector.shape_cast %111 : vector<16xf32> to vector<16x1xf32>
    %113 = vector.broadcast %112 : vector<16x1xf32> to vector<16x16xf32>
    %114 = arith.subf %110, %113 : vector<16x16xf32>
    %115 = math.exp %114 : vector<16x16xf32>
    %cst_32 = arith.constant dense<0.000000e+00> : vector<16xf32>
    %116 = vector.multi_reduction <add>, %115, %cst_32 [1] : vector<16x16xf32> to vector<16xf32>
    %117 = vector.shape_cast %116 : vector<16xf32> to vector<16x1xf32>
    %118 = tpu.reciprocal %117 {approx = true} : vector<16x1xf32> -> vector<16x1xf32>
    %119 = vector.broadcast %118 : vector<16x1xf32> to vector<16x16xf32>
    %120 = arith.mulf %115, %119 : vector<16x16xf32>
    %121 = vector.broadcast %32 : vector<1x128xf32> to vector<16x128xf32>
    %122 = arith.mulf %83, %121 : vector<16x128xf32>
    %123 = arith.truncf %122 : vector<16x128xf32> to vector<16x128xbf16>
    %124 = arith.truncf %120 : vector<16x16xf32> to vector<16x16xbf16>
    %cst_33 = arith.constant dense<0.000000e+00> : vector<16x128xf32>
    %125 = tpu.matmul %124, %123, %cst_33 {dimension_numbers = #tpu.dot_dimension_numbers<[1], [0], [0], [1], [0, 0, 1, 1], [], []>} : vector<16x16xbf16>, vector<16x128xbf16>, vector<16x128xf32> -> vector<16x128xf32>
    %126 = arith.addf %105, %125 : vector<16x128xf32>
    %127 = vector.broadcast %39 : vector<1x128xf32> to vector<16x128xf32>
    %128 = arith.mulf %80, %127 : vector<16x128xf32>
    %129 = arith.truncf %128 : vector<16x128xf32> to vector<16x128xbf16>
    %cst_34 = arith.constant dense<0.000000e+00> : vector<16x16xf32>
    %130 = tpu.matmul %129, %82, %cst_34 {dimension_numbers = #tpu.dot_dimension_numbers<[1], [1], [0], [0], [0, 0, 1, 0], [], []>} : vector<16x128xbf16>, vector<16x128xbf16>, vector<16x16xf32> -> vector<16x16xf32>
    %131 = arith.addf %130, %17 : vector<16x16xf32>
    %cst_35 = arith.constant dense<0xFF800000> : vector<16xf32>
    %132 = vector.multi_reduction <maximumf>, %131, %cst_35 [1] : vector<16x16xf32> to vector<16xf32>
    %133 = vector.shape_cast %132 : vector<16xf32> to vector<16x1xf32>
    %134 = vector.broadcast %133 : vector<16x1xf32> to vector<16x16xf32>
    %135 = arith.subf %131, %134 : vector<16x16xf32>
    %136 = math.exp %135 : vector<16x16xf32>
    %cst_36 = arith.constant dense<0.000000e+00> : vector<16xf32>
    %137 = vector.multi_reduction <add>, %136, %cst_36 [1] : vector<16x16xf32> to vector<16xf32>
    %138 = vector.shape_cast %137 : vector<16xf32> to vector<16x1xf32>
    %139 = tpu.reciprocal %138 {approx = true} : vector<16x1xf32> -> vector<16x1xf32>
    %140 = vector.broadcast %139 : vector<16x1xf32> to vector<16x16xf32>
    %141 = arith.mulf %136, %140 : vector<16x16xf32>
    %142 = vector.broadcast %39 : vector<1x128xf32> to vector<16x128xf32>
    %143 = arith.mulf %83, %142 : vector<16x128xf32>
    %144 = arith.truncf %143 : vector<16x128xf32> to vector<16x128xbf16>
    %145 = arith.truncf %141 : vector<16x16xf32> to vector<16x16xbf16>
    %cst_37 = arith.constant dense<0.000000e+00> : vector<16x128xf32>
    %146 = tpu.matmul %145, %144, %cst_37 {dimension_numbers = #tpu.dot_dimension_numbers<[1], [0], [0], [1], [0, 0, 1, 1], [], []>} : vector<16x16xbf16>, vector<16x128xbf16>, vector<16x128xf32> -> vector<16x128xf32>
    %147 = arith.addf %126, %146 : vector<16x128xf32>
    %148 = vector.broadcast %46 : vector<1x128xf32> to vector<16x128xf32>
    %149 = arith.mulf %80, %148 : vector<16x128xf32>
    %150 = arith.truncf %149 : vector<16x128xf32> to vector<16x128xbf16>
    %cst_38 = arith.constant dense<0.000000e+00> : vector<16x16xf32>
    %151 = tpu.matmul %150, %82, %cst_38 {dimension_numbers = #tpu.dot_dimension_numbers<[1], [1], [0], [0], [0, 0, 1, 0], [], []>} : vector<16x128xbf16>, vector<16x128xbf16>, vector<16x16xf32> -> vector<16x16xf32>
    %152 = arith.addf %151, %17 : vector<16x16xf32>
    %cst_39 = arith.constant dense<0xFF800000> : vector<16xf32>
    %153 = vector.multi_reduction <maximumf>, %152, %cst_39 [1] : vector<16x16xf32> to vector<16xf32>
    %154 = vector.shape_cast %153 : vector<16xf32> to vector<16x1xf32>
    %155 = vector.broadcast %154 : vector<16x1xf32> to vector<16x16xf32>
    %156 = arith.subf %152, %155 : vector<16x16xf32>
    %157 = math.exp %156 : vector<16x16xf32>
    %cst_40 = arith.constant dense<0.000000e+00> : vector<16xf32>
    %158 = vector.multi_reduction <add>, %157, %cst_40 [1] : vector<16x16xf32> to vector<16xf32>
    %159 = vector.shape_cast %158 : vector<16xf32> to vector<16x1xf32>
    %160 = tpu.reciprocal %159 {approx = true} : vector<16x1xf32> -> vector<16x1xf32>
    %161 = vector.broadcast %160 : vector<16x1xf32> to vector<16x16xf32>
    %162 = arith.mulf %157, %161 : vector<16x16xf32>
    %163 = vector.broadcast %46 : vector<1x128xf32> to vector<16x128xf32>
    %164 = arith.mulf %83, %163 : vector<16x128xf32>
    %165 = arith.truncf %164 : vector<16x128xf32> to vector<16x128xbf16>
    %166 = arith.truncf %162 : vector<16x16xf32> to vector<16x16xbf16>
    %cst_41 = arith.constant dense<0.000000e+00> : vector<16x128xf32>
    %167 = tpu.matmul %166, %165, %cst_41 {dimension_numbers = #tpu.dot_dimension_numbers<[1], [0], [0], [1], [0, 0, 1, 1], [], []>} : vector<16x16xbf16>, vector<16x128xbf16>, vector<16x128xf32> -> vector<16x128xf32>
    %168 = arith.addf %147, %167 : vector<16x128xf32>
    %169 = vector.extract_strided_slice %77 {offsets = [16, 0], sizes = [16, 128], strides = [1, 1]} : vector<32x128xf32> to vector<16x128xf32>
    %170 = vector.extract_strided_slice %78 {offsets = [16, 0], sizes = [16, 128], strides = [1, 1]} : vector<32x128xf32> to vector<16x128xf32>
    %171 = arith.truncf %170 : vector<16x128xf32> to vector<16x128xbf16>
    %172 = vector.extract_strided_slice %79 {offsets = [16, 0], sizes = [16, 128], strides = [1, 1]} : vector<32x128xf32> to vector<16x128xf32>
    %cst_42 = arith.constant 0.000000e+00 : f32
    %173 = vector.broadcast %cst_42 : f32 to vector<16x128xf32>
    %174 = vector.broadcast %25 : vector<1x128xf32> to vector<16x128xf32>
    %175 = arith.mulf %169, %174 : vector<16x128xf32>
    %176 = arith.truncf %175 : vector<16x128xf32> to vector<16x128xbf16>
    %cst_43 = arith.constant dense<0.000000e+00> : vector<16x16xf32>
    %177 = tpu.matmul %176, %171, %cst_43 {dimension_numbers = #tpu.dot_dimension_numbers<[1], [1], [0], [0], [0, 0, 1, 0], [], []>} : vector<16x128xbf16>, vector<16x128xbf16>, vector<16x16xf32> -> vector<16x16xf32>
    %178 = arith.addf %177, %17 : vector<16x16xf32>
    %cst_44 = arith.constant dense<0xFF800000> : vector<16xf32>
    %179 = vector.multi_reduction <maximumf>, %178, %cst_44 [1] : vector<16x16xf32> to vector<16xf32>
    %180 = vector.shape_cast %179 : vector<16xf32> to vector<16x1xf32>
    %181 = vector.broadcast %180 : vector<16x1xf32> to vector<16x16xf32>
    %182 = arith.subf %178, %181 : vector<16x16xf32>
    %183 = math.exp %182 : vector<16x16xf32>
    %cst_45 = arith.constant dense<0.000000e+00> : vector<16xf32>
    %184 = vector.multi_reduction <add>, %183, %cst_45 [1] : vector<16x16xf32> to vector<16xf32>
    %185 = vector.shape_cast %184 : vector<16xf32> to vector<16x1xf32>
    %186 = tpu.reciprocal %185 {approx = true} : vector<16x1xf32> -> vector<16x1xf32>
    %187 = vector.broadcast %186 : vector<16x1xf32> to vector<16x16xf32>
    %188 = arith.mulf %183, %187 : vector<16x16xf32>
    %189 = vector.broadcast %25 : vector<1x128xf32> to vector<16x128xf32>
    %190 = arith.mulf %172, %189 : vector<16x128xf32>
    %191 = arith.truncf %190 : vector<16x128xf32> to vector<16x128xbf16>
    %192 = arith.truncf %188 : vector<16x16xf32> to vector<16x16xbf16>
    %cst_46 = arith.constant dense<0.000000e+00> : vector<16x128xf32>
    %193 = tpu.matmul %192, %191, %cst_46 {dimension_numbers = #tpu.dot_dimension_numbers<[1], [0], [0], [1], [0, 0, 1, 1], [], []>} : vector<16x16xbf16>, vector<16x128xbf16>, vector<16x128xf32> -> vector<16x128xf32>
    %194 = arith.addf %173, %193 : vector<16x128xf32>
    %195 = vector.broadcast %32 : vector<1x128xf32> to vector<16x128xf32>
    %196 = arith.mulf %169, %195 : vector<16x128xf32>
    %197 = arith.truncf %196 : vector<16x128xf32> to vector<16x128xbf16>
    %cst_47 = arith.constant dense<0.000000e+00> : vector<16x16xf32>
    %198 = tpu.matmul %197, %171, %cst_47 {dimension_numbers = #tpu.dot_dimension_numbers<[1], [1], [0], [0], [0, 0, 1, 0], [], []>} : vector<16x128xbf16>, vector<16x128xbf16>, vector<16x16xf32> -> vector<16x16xf32>
    %199 = arith.addf %198, %17 : vector<16x16xf32>
    %cst_48 = arith.constant dense<0xFF800000> : vector<16xf32>
    %200 = vector.multi_reduction <maximumf>, %199, %cst_48 [1] : vector<16x16xf32> to vector<16xf32>
    %201 = vector.shape_cast %200 : vector<16xf32> to vector<16x1xf32>
    %202 = vector.broadcast %201 : vector<16x1xf32> to vector<16x16xf32>
    %203 = arith.subf %199, %202 : vector<16x16xf32>
    %204 = math.exp %203 : vector<16x16xf32>
    %cst_49 = arith.constant dense<0.000000e+00> : vector<16xf32>
    %205 = vector.multi_reduction <add>, %204, %cst_49 [1] : vector<16x16xf32> to vector<16xf32>
    %206 = vector.shape_cast %205 : vector<16xf32> to vector<16x1xf32>
    %207 = tpu.reciprocal %206 {approx = true} : vector<16x1xf32> -> vector<16x1xf32>
    %208 = vector.broadcast %207 : vector<16x1xf32> to vector<16x16xf32>
    %209 = arith.mulf %204, %208 : vector<16x16xf32>
    %210 = vector.broadcast %32 : vector<1x128xf32> to vector<16x128xf32>
    %211 = arith.mulf %172, %210 : vector<16x128xf32>
    %212 = arith.truncf %211 : vector<16x128xf32> to vector<16x128xbf16>
    %213 = arith.truncf %209 : vector<16x16xf32> to vector<16x16xbf16>
    %cst_50 = arith.constant dense<0.000000e+00> : vector<16x128xf32>
    %214 = tpu.matmul %213, %212, %cst_50 {dimension_numbers = #tpu.dot_dimension_numbers<[1], [0], [0], [1], [0, 0, 1, 1], [], []>} : vector<16x16xbf16>, vector<16x128xbf16>, vector<16x128xf32> -> vector<16x128xf32>
    %215 = arith.addf %194, %214 : vector<16x128xf32>
    %216 = vector.broadcast %39 : vector<1x128xf32> to vector<16x128xf32>
    %217 = arith.mulf %169, %216 : vector<16x128xf32>
    %218 = arith.truncf %217 : vector<16x128xf32> to vector<16x128xbf16>
    %cst_51 = arith.constant dense<0.000000e+00> : vector<16x16xf32>
    %219 = tpu.matmul %218, %171, %cst_51 {dimension_numbers = #tpu.dot_dimension_numbers<[1], [1], [0], [0], [0, 0, 1, 0], [], []>} : vector<16x128xbf16>, vector<16x128xbf16>, vector<16x16xf32> -> vector<16x16xf32>
    %220 = arith.addf %219, %17 : vector<16x16xf32>
    %cst_52 = arith.constant dense<0xFF800000> : vector<16xf32>
    %221 = vector.multi_reduction <maximumf>, %220, %cst_52 [1] : vector<16x16xf32> to vector<16xf32>
    %222 = vector.shape_cast %221 : vector<16xf32> to vector<16x1xf32>
    %223 = vector.broadcast %222 : vector<16x1xf32> to vector<16x16xf32>
    %224 = arith.subf %220, %223 : vector<16x16xf32>
    %225 = math.exp %224 : vector<16x16xf32>
    %cst_53 = arith.constant dense<0.000000e+00> : vector<16xf32>
    %226 = vector.multi_reduction <add>, %225, %cst_53 [1] : vector<16x16xf32> to vector<16xf32>
    %227 = vector.shape_cast %226 : vector<16xf32> to vector<16x1xf32>
    %228 = tpu.reciprocal %227 {approx = true} : vector<16x1xf32> -> vector<16x1xf32>
    %229 = vector.broadcast %228 : vector<16x1xf32> to vector<16x16xf32>
    %230 = arith.mulf %225, %229 : vector<16x16xf32>
    %231 = vector.broadcast %39 : vector<1x128xf32> to vector<16x128xf32>
    %232 = arith.mulf %172, %231 : vector<16x128xf32>
    %233 = arith.truncf %232 : vector<16x128xf32> to vector<16x128xbf16>
    %234 = arith.truncf %230 : vector<16x16xf32> to vector<16x16xbf16>
    %cst_54 = arith.constant dense<0.000000e+00> : vector<16x128xf32>
    %235 = tpu.matmul %234, %233, %cst_54 {dimension_numbers = #tpu.dot_dimension_numbers<[1], [0], [0], [1], [0, 0, 1, 1], [], []>} : vector<16x16xbf16>, vector<16x128xbf16>, vector<16x128xf32> -> vector<16x128xf32>
    %236 = arith.addf %215, %235 : vector<16x128xf32>
    %237 = vector.broadcast %46 : vector<1x128xf32> to vector<16x128xf32>
    %238 = arith.mulf %169, %237 : vector<16x128xf32>
    %239 = arith.truncf %238 : vector<16x128xf32> to vector<16x128xbf16>
    %cst_55 = arith.constant dense<0.000000e+00> : vector<16x16xf32>
    %240 = tpu.matmul %239, %171, %cst_55 {dimension_numbers = #tpu.dot_dimension_numbers<[1], [1], [0], [0], [0, 0, 1, 0], [], []>} : vector<16x128xbf16>, vector<16x128xbf16>, vector<16x16xf32> -> vector<16x16xf32>
    %241 = arith.addf %240, %17 : vector<16x16xf32>
    %cst_56 = arith.constant dense<0xFF800000> : vector<16xf32>
    %242 = vector.multi_reduction <maximumf>, %241, %cst_56 [1] : vector<16x16xf32> to vector<16xf32>
    %243 = vector.shape_cast %242 : vector<16xf32> to vector<16x1xf32>
    %244 = vector.broadcast %243 : vector<16x1xf32> to vector<16x16xf32>
    %245 = arith.subf %241, %244 : vector<16x16xf32>
    %246 = math.exp %245 : vector<16x16xf32>
    %cst_57 = arith.constant dense<0.000000e+00> : vector<16xf32>
    %247 = vector.multi_reduction <add>, %246, %cst_57 [1] : vector<16x16xf32> to vector<16xf32>
    %248 = vector.shape_cast %247 : vector<16xf32> to vector<16x1xf32>
    %249 = tpu.reciprocal %248 {approx = true} : vector<16x1xf32> -> vector<16x1xf32>
    %250 = vector.broadcast %249 : vector<16x1xf32> to vector<16x16xf32>
    %251 = arith.mulf %246, %250 : vector<16x16xf32>
    %252 = vector.broadcast %46 : vector<1x128xf32> to vector<16x128xf32>
    %253 = arith.mulf %172, %252 : vector<16x128xf32>
    %254 = arith.truncf %253 : vector<16x128xf32> to vector<16x128xbf16>
    %255 = arith.truncf %251 : vector<16x16xf32> to vector<16x16xbf16>
    %cst_58 = arith.constant dense<0.000000e+00> : vector<16x128xf32>
    %256 = tpu.matmul %255, %254, %cst_58 {dimension_numbers = #tpu.dot_dimension_numbers<[1], [0], [0], [1], [0, 0, 1, 1], [], []>} : vector<16x16xbf16>, vector<16x128xbf16>, vector<16x128xf32> -> vector<16x128xf32>
    %257 = arith.addf %236, %256 : vector<16x128xf32>
    %258 = tpu.concatenate %168, %257 in 0 : vector<16x128xf32>, vector<16x128xf32> -> vector<32x128xf32>
    %259 = arith.truncf %258 : vector<32x128xf32> to vector<32x128xbf16>
    %c0_59 = arith.constant 0 : index
    %c0_60 = arith.constant 0 : index
    %c0_61 = arith.constant 0 : index
    %260 = vector.load %arg7[%c0_59, %c0_60, %c0_61] : memref<2x128x128xbf16, #tpu.memory_space<vmem>>, vector<1x128x128xbf16>
    %261 = vector.shape_cast %260 : vector<1x128x128xbf16> to vector<128x128xbf16>
    %cst_62 = arith.constant dense<0.000000e+00> : vector<32x128xf32>
    %262 = tpu.matmul %259, %261, %cst_62 {dimension_numbers = #tpu.dot_dimension_numbers<[1], [0], [0], [1], [0, 0, 1, 1], [], []>} : vector<32x128xbf16>, vector<128x128xbf16>, vector<32x128xf32> -> vector<32x128xf32>
    %c0_63 = arith.constant 0 : index
    %c0_64 = arith.constant 0 : index
    %c0_65 = arith.constant 0 : index
    %263 = vector.load %arg8[%c0_63, %c0_64, %c0_65] : memref<2x1x128xf32, #tpu.memory_space<vmem>>, vector<1x1x128xf32>
    %264 = vector.shape_cast %263 : vector<1x1x128xf32> to vector<1x128xf32>
    %265 = vector.broadcast %264 : vector<1x128xf32> to vector<32x128xf32>
    %266 = arith.addf %262, %265 : vector<32x128xf32>
    %267 = arith.addf %11, %266 : vector<32x128xf32>
    %c0_66 = arith.constant 0 : index
    %c0_67 = arith.constant 0 : index
    %c0_68 = arith.constant 0 : index
    %268 = vector.load %arg9[%c0_66, %c0_67, %c0_68] : memref<2x1x128xf32, #tpu.memory_space<vmem>>, vector<1x1x128xf32>
    %269 = vector.shape_cast %268 : vector<1x1x128xf32> to vector<1x128xf32>
    %c0_69 = arith.constant 0 : index
    %c0_70 = arith.constant 0 : index
    %c0_71 = arith.constant 0 : index
    %270 = vector.load %arg10[%c0_69, %c0_70, %c0_71] : memref<2x1x128xf32, #tpu.memory_space<vmem>>, vector<1x1x128xf32>
    %271 = vector.shape_cast %270 : vector<1x1x128xf32> to vector<1x128xf32>
    %cst_72 = arith.constant dense<0.000000e+00> : vector<32xf32>
    %272 = vector.multi_reduction <add>, %267, %cst_72 [1] : vector<32x128xf32> to vector<32xf32>
    %273 = vector.shape_cast %272 : vector<32xf32> to vector<32x1xf32>
    %cst_73 = arith.constant 1.280000e+02 : f32
    %274 = vector.broadcast %cst_73 : f32 to vector<32x1xf32>
    %275 = arith.divf %273, %274 : vector<32x1xf32>
    %276 = vector.broadcast %275 : vector<32x1xf32> to vector<32x128xf32>
    %277 = arith.subf %267, %276 : vector<32x128xf32>
    %278 = arith.mulf %277, %277 : vector<32x128xf32>
    %cst_74 = arith.constant dense<0.000000e+00> : vector<32xf32>
    %279 = vector.multi_reduction <add>, %278, %cst_74 [1] : vector<32x128xf32> to vector<32xf32>
    %280 = vector.shape_cast %279 : vector<32xf32> to vector<32x1xf32>
    %cst_75 = arith.constant 1.280000e+02 : f32
    %281 = vector.broadcast %cst_75 : f32 to vector<32x1xf32>
    %282 = arith.divf %280, %281 : vector<32x1xf32>
    %283 = vector.broadcast %275 : vector<32x1xf32> to vector<32x128xf32>
    %284 = arith.subf %267, %283 : vector<32x128xf32>
    %cst_76 = arith.constant 9.99999974E-6 : f32
    %285 = vector.broadcast %cst_76 : f32 to vector<32x1xf32>
    %286 = arith.addf %282, %285 : vector<32x1xf32>
    %287 = math.rsqrt %286 : vector<32x1xf32>
    %288 = vector.broadcast %287 : vector<32x1xf32> to vector<32x128xf32>
    %289 = arith.mulf %284, %288 : vector<32x128xf32>
    %290 = vector.broadcast %269 : vector<1x128xf32> to vector<32x128xf32>
    %291 = arith.mulf %289, %290 : vector<32x128xf32>
    %292 = vector.broadcast %271 : vector<1x128xf32> to vector<32x128xf32>
    %293 = arith.addf %291, %292 : vector<32x128xf32>
    %294 = arith.truncf %293 : vector<32x128xf32> to vector<32x128xbf16>
    %c0_77 = arith.constant 0 : index
    %c0_78 = arith.constant 0 : index
    %c0_79 = arith.constant 0 : index
    %295 = vector.load %arg11[%c0_77, %c0_78, %c0_79] : memref<2x128x512xbf16, #tpu.memory_space<vmem>>, vector<1x128x512xbf16>
    %296 = vector.shape_cast %295 : vector<1x128x512xbf16> to vector<128x512xbf16>
    %cst_80 = arith.constant dense<0.000000e+00> : vector<32x512xf32>
    %297 = tpu.matmul %294, %296, %cst_80 {dimension_numbers = #tpu.dot_dimension_numbers<[1], [0], [0], [1], [0, 0, 1, 1], [], []>} : vector<32x128xbf16>, vector<128x512xbf16>, vector<32x512xf32> -> vector<32x512xf32>
    %c0_81 = arith.constant 0 : index
    %c0_82 = arith.constant 0 : index
    %c0_83 = arith.constant 0 : index
    %298 = vector.load %arg12[%c0_81, %c0_82, %c0_83] : memref<2x1x512xf32, #tpu.memory_space<vmem>>, vector<1x1x512xf32>
    %299 = vector.shape_cast %298 : vector<1x1x512xf32> to vector<1x512xf32>
    %300 = vector.broadcast %299 : vector<1x512xf32> to vector<32x512xf32>
    %301 = arith.addf %297, %300 : vector<32x512xf32>
    %cst_84 = arith.constant 0.000000e+00 : f32
    %302 = vector.broadcast %cst_84 : f32 to vector<32x512xf32>
    %303 = arith.maximumf %301, %302 : vector<32x512xf32>
    %304 = arith.truncf %303 : vector<32x512xf32> to vector<32x512xbf16>
    %c0_85 = arith.constant 0 : index
    %c0_86 = arith.constant 0 : index
    %c0_87 = arith.constant 0 : index
    %305 = vector.load %arg13[%c0_85, %c0_86, %c0_87] : memref<2x512x128xbf16, #tpu.memory_space<vmem>>, vector<1x512x128xbf16>
    %306 = vector.shape_cast %305 : vector<1x512x128xbf16> to vector<512x128xbf16>
    %cst_88 = arith.constant dense<0.000000e+00> : vector<32x128xf32>
    %307 = tpu.matmul %304, %306, %cst_88 {dimension_numbers = #tpu.dot_dimension_numbers<[1], [0], [0], [1], [0, 0, 1, 1], [], []>} : vector<32x512xbf16>, vector<512x128xbf16>, vector<32x128xf32> -> vector<32x128xf32>
    %c0_89 = arith.constant 0 : index
    %c0_90 = arith.constant 0 : index
    %c0_91 = arith.constant 0 : index
    %308 = vector.load %arg14[%c0_89, %c0_90, %c0_91] : memref<2x1x128xf32, #tpu.memory_space<vmem>>, vector<1x1x128xf32>
    %309 = vector.shape_cast %308 : vector<1x1x128xf32> to vector<1x128xf32>
    %310 = vector.broadcast %309 : vector<1x128xf32> to vector<32x128xf32>
    %311 = arith.addf %307, %310 : vector<32x128xf32>
    %312 = arith.addf %267, %311 : vector<32x128xf32>
    %c1 = arith.constant 1 : index
    %c0_92 = arith.constant 0 : index
    %c0_93 = arith.constant 0 : index
    %313 = vector.load %arg4[%c1, %c0_92, %c0_93] : memref<2x1x128xf32, #tpu.memory_space<vmem>>, vector<1x1x128xf32>
    %314 = vector.shape_cast %313 : vector<1x1x128xf32> to vector<1x128xf32>
    %c1_94 = arith.constant 1 : index
    %c0_95 = arith.constant 0 : index
    %c0_96 = arith.constant 0 : index
    %315 = vector.load %arg5[%c1_94, %c0_95, %c0_96] : memref<2x1x128xf32, #tpu.memory_space<vmem>>, vector<1x1x128xf32>
    %316 = vector.shape_cast %315 : vector<1x1x128xf32> to vector<1x128xf32>
    %cst_97 = arith.constant dense<0.000000e+00> : vector<32xf32>
    %317 = vector.multi_reduction <add>, %312, %cst_97 [1] : vector<32x128xf32> to vector<32xf32>
    %318 = vector.shape_cast %317 : vector<32xf32> to vector<32x1xf32>
    %cst_98 = arith.constant 1.280000e+02 : f32
    %319 = vector.broadcast %cst_98 : f32 to vector<32x1xf32>
    %320 = arith.divf %318, %319 : vector<32x1xf32>
    %321 = vector.broadcast %320 : vector<32x1xf32> to vector<32x128xf32>
    %322 = arith.subf %312, %321 : vector<32x128xf32>
    %323 = arith.mulf %322, %322 : vector<32x128xf32>
    %cst_99 = arith.constant dense<0.000000e+00> : vector<32xf32>
    %324 = vector.multi_reduction <add>, %323, %cst_99 [1] : vector<32x128xf32> to vector<32xf32>
    %325 = vector.shape_cast %324 : vector<32xf32> to vector<32x1xf32>
    %cst_100 = arith.constant 1.280000e+02 : f32
    %326 = vector.broadcast %cst_100 : f32 to vector<32x1xf32>
    %327 = arith.divf %325, %326 : vector<32x1xf32>
    %328 = vector.broadcast %320 : vector<32x1xf32> to vector<32x128xf32>
    %329 = arith.subf %312, %328 : vector<32x128xf32>
    %cst_101 = arith.constant 9.99999974E-6 : f32
    %330 = vector.broadcast %cst_101 : f32 to vector<32x1xf32>
    %331 = arith.addf %327, %330 : vector<32x1xf32>
    %332 = math.rsqrt %331 : vector<32x1xf32>
    %333 = vector.broadcast %332 : vector<32x1xf32> to vector<32x128xf32>
    %334 = arith.mulf %329, %333 : vector<32x128xf32>
    %335 = vector.broadcast %314 : vector<1x128xf32> to vector<32x128xf32>
    %336 = arith.mulf %334, %335 : vector<32x128xf32>
    %337 = vector.broadcast %316 : vector<1x128xf32> to vector<32x128xf32>
    %338 = arith.addf %336, %337 : vector<32x128xf32>
    %339 = arith.truncf %338 : vector<32x128xf32> to vector<32x128xbf16>
    %c1_102 = arith.constant 1 : index
    %c0_103 = arith.constant 0 : index
    %c0_104 = arith.constant 0 : index
    %340 = vector.load %arg6[%c1_102, %c0_103, %c0_104] : memref<2x128x384xbf16, #tpu.memory_space<vmem>>, vector<1x128x384xbf16>
    %341 = vector.shape_cast %340 : vector<1x128x384xbf16> to vector<128x384xbf16>
    %cst_105 = arith.constant dense<0.000000e+00> : vector<32x384xf32>
    %342 = tpu.matmul %339, %341, %cst_105 {dimension_numbers = #tpu.dot_dimension_numbers<[1], [0], [0], [1], [0, 0, 1, 1], [], []>} : vector<32x128xbf16>, vector<128x384xbf16>, vector<32x384xf32> -> vector<32x384xf32>
    %343 = vector.extract_strided_slice %342 {offsets = [0, 0], sizes = [32, 128], strides = [1, 1]} : vector<32x384xf32> to vector<32x128xf32>
    %344 = vector.extract_strided_slice %342 {offsets = [0, 128], sizes = [32, 128], strides = [1, 1]} : vector<32x384xf32> to vector<32x128xf32>
    %345 = vector.extract_strided_slice %342 {offsets = [0, 256], sizes = [32, 128], strides = [1, 1]} : vector<32x384xf32> to vector<32x128xf32>
    %346 = vector.extract_strided_slice %343 {offsets = [0, 0], sizes = [16, 128], strides = [1, 1]} : vector<32x128xf32> to vector<16x128xf32>
    %347 = vector.extract_strided_slice %344 {offsets = [0, 0], sizes = [16, 128], strides = [1, 1]} : vector<32x128xf32> to vector<16x128xf32>
    %348 = arith.truncf %347 : vector<16x128xf32> to vector<16x128xbf16>
    %349 = vector.extract_strided_slice %345 {offsets = [0, 0], sizes = [16, 128], strides = [1, 1]} : vector<32x128xf32> to vector<16x128xf32>
    %cst_106 = arith.constant 0.000000e+00 : f32
    %350 = vector.broadcast %cst_106 : f32 to vector<16x128xf32>
    %351 = vector.broadcast %25 : vector<1x128xf32> to vector<16x128xf32>
    %352 = arith.mulf %346, %351 : vector<16x128xf32>
    %353 = arith.truncf %352 : vector<16x128xf32> to vector<16x128xbf16>
    %cst_107 = arith.constant dense<0.000000e+00> : vector<16x16xf32>
    %354 = tpu.matmul %353, %348, %cst_107 {dimension_numbers = #tpu.dot_dimension_numbers<[1], [1], [0], [0], [0, 0, 1, 0], [], []>} : vector<16x128xbf16>, vector<16x128xbf16>, vector<16x16xf32> -> vector<16x16xf32>
    %355 = arith.addf %354, %17 : vector<16x16xf32>
    %cst_108 = arith.constant dense<0xFF800000> : vector<16xf32>
    %356 = vector.multi_reduction <maximumf>, %355, %cst_108 [1] : vector<16x16xf32> to vector<16xf32>
    %357 = vector.shape_cast %356 : vector<16xf32> to vector<16x1xf32>
    %358 = vector.broadcast %357 : vector<16x1xf32> to vector<16x16xf32>
    %359 = arith.subf %355, %358 : vector<16x16xf32>
    %360 = math.exp %359 : vector<16x16xf32>
    %cst_109 = arith.constant dense<0.000000e+00> : vector<16xf32>
    %361 = vector.multi_reduction <add>, %360, %cst_109 [1] : vector<16x16xf32> to vector<16xf32>
    %362 = vector.shape_cast %361 : vector<16xf32> to vector<16x1xf32>
    %363 = tpu.reciprocal %362 {approx = true} : vector<16x1xf32> -> vector<16x1xf32>
    %364 = vector.broadcast %363 : vector<16x1xf32> to vector<16x16xf32>
    %365 = arith.mulf %360, %364 : vector<16x16xf32>
    %366 = vector.broadcast %25 : vector<1x128xf32> to vector<16x128xf32>
    %367 = arith.mulf %349, %366 : vector<16x128xf32>
    %368 = arith.truncf %367 : vector<16x128xf32> to vector<16x128xbf16>
    %369 = arith.truncf %365 : vector<16x16xf32> to vector<16x16xbf16>
    %cst_110 = arith.constant dense<0.000000e+00> : vector<16x128xf32>
    %370 = tpu.matmul %369, %368, %cst_110 {dimension_numbers = #tpu.dot_dimension_numbers<[1], [0], [0], [1], [0, 0, 1, 1], [], []>} : vector<16x16xbf16>, vector<16x128xbf16>, vector<16x128xf32> -> vector<16x128xf32>
    %371 = arith.addf %350, %370 : vector<16x128xf32>
    %372 = vector.broadcast %32 : vector<1x128xf32> to vector<16x128xf32>
    %373 = arith.mulf %346, %372 : vector<16x128xf32>
    %374 = arith.truncf %373 : vector<16x128xf32> to vector<16x128xbf16>
    %cst_111 = arith.constant dense<0.000000e+00> : vector<16x16xf32>
    %375 = tpu.matmul %374, %348, %cst_111 {dimension_numbers = #tpu.dot_dimension_numbers<[1], [1], [0], [0], [0, 0, 1, 0], [], []>} : vector<16x128xbf16>, vector<16x128xbf16>, vector<16x16xf32> -> vector<16x16xf32>
    %376 = arith.addf %375, %17 : vector<16x16xf32>
    %cst_112 = arith.constant dense<0xFF800000> : vector<16xf32>
    %377 = vector.multi_reduction <maximumf>, %376, %cst_112 [1] : vector<16x16xf32> to vector<16xf32>
    %378 = vector.shape_cast %377 : vector<16xf32> to vector<16x1xf32>
    %379 = vector.broadcast %378 : vector<16x1xf32> to vector<16x16xf32>
    %380 = arith.subf %376, %379 : vector<16x16xf32>
    %381 = math.exp %380 : vector<16x16xf32>
    %cst_113 = arith.constant dense<0.000000e+00> : vector<16xf32>
    %382 = vector.multi_reduction <add>, %381, %cst_113 [1] : vector<16x16xf32> to vector<16xf32>
    %383 = vector.shape_cast %382 : vector<16xf32> to vector<16x1xf32>
    %384 = tpu.reciprocal %383 {approx = true} : vector<16x1xf32> -> vector<16x1xf32>
    %385 = vector.broadcast %384 : vector<16x1xf32> to vector<16x16xf32>
    %386 = arith.mulf %381, %385 : vector<16x16xf32>
    %387 = vector.broadcast %32 : vector<1x128xf32> to vector<16x128xf32>
    %388 = arith.mulf %349, %387 : vector<16x128xf32>
    %389 = arith.truncf %388 : vector<16x128xf32> to vector<16x128xbf16>
    %390 = arith.truncf %386 : vector<16x16xf32> to vector<16x16xbf16>
    %cst_114 = arith.constant dense<0.000000e+00> : vector<16x128xf32>
    %391 = tpu.matmul %390, %389, %cst_114 {dimension_numbers = #tpu.dot_dimension_numbers<[1], [0], [0], [1], [0, 0, 1, 1], [], []>} : vector<16x16xbf16>, vector<16x128xbf16>, vector<16x128xf32> -> vector<16x128xf32>
    %392 = arith.addf %371, %391 : vector<16x128xf32>
    %393 = vector.broadcast %39 : vector<1x128xf32> to vector<16x128xf32>
    %394 = arith.mulf %346, %393 : vector<16x128xf32>
    %395 = arith.truncf %394 : vector<16x128xf32> to vector<16x128xbf16>
    %cst_115 = arith.constant dense<0.000000e+00> : vector<16x16xf32>
    %396 = tpu.matmul %395, %348, %cst_115 {dimension_numbers = #tpu.dot_dimension_numbers<[1], [1], [0], [0], [0, 0, 1, 0], [], []>} : vector<16x128xbf16>, vector<16x128xbf16>, vector<16x16xf32> -> vector<16x16xf32>
    %397 = arith.addf %396, %17 : vector<16x16xf32>
    %cst_116 = arith.constant dense<0xFF800000> : vector<16xf32>
    %398 = vector.multi_reduction <maximumf>, %397, %cst_116 [1] : vector<16x16xf32> to vector<16xf32>
    %399 = vector.shape_cast %398 : vector<16xf32> to vector<16x1xf32>
    %400 = vector.broadcast %399 : vector<16x1xf32> to vector<16x16xf32>
    %401 = arith.subf %397, %400 : vector<16x16xf32>
    %402 = math.exp %401 : vector<16x16xf32>
    %cst_117 = arith.constant dense<0.000000e+00> : vector<16xf32>
    %403 = vector.multi_reduction <add>, %402, %cst_117 [1] : vector<16x16xf32> to vector<16xf32>
    %404 = vector.shape_cast %403 : vector<16xf32> to vector<16x1xf32>
    %405 = tpu.reciprocal %404 {approx = true} : vector<16x1xf32> -> vector<16x1xf32>
    %406 = vector.broadcast %405 : vector<16x1xf32> to vector<16x16xf32>
    %407 = arith.mulf %402, %406 : vector<16x16xf32>
    %408 = vector.broadcast %39 : vector<1x128xf32> to vector<16x128xf32>
    %409 = arith.mulf %349, %408 : vector<16x128xf32>
    %410 = arith.truncf %409 : vector<16x128xf32> to vector<16x128xbf16>
    %411 = arith.truncf %407 : vector<16x16xf32> to vector<16x16xbf16>
    %cst_118 = arith.constant dense<0.000000e+00> : vector<16x128xf32>
    %412 = tpu.matmul %411, %410, %cst_118 {dimension_numbers = #tpu.dot_dimension_numbers<[1], [0], [0], [1], [0, 0, 1, 1], [], []>} : vector<16x16xbf16>, vector<16x128xbf16>, vector<16x128xf32> -> vector<16x128xf32>
    %413 = arith.addf %392, %412 : vector<16x128xf32>
    %414 = vector.broadcast %46 : vector<1x128xf32> to vector<16x128xf32>
    %415 = arith.mulf %346, %414 : vector<16x128xf32>
    %416 = arith.truncf %415 : vector<16x128xf32> to vector<16x128xbf16>
    %cst_119 = arith.constant dense<0.000000e+00> : vector<16x16xf32>
    %417 = tpu.matmul %416, %348, %cst_119 {dimension_numbers = #tpu.dot_dimension_numbers<[1], [1], [0], [0], [0, 0, 1, 0], [], []>} : vector<16x128xbf16>, vector<16x128xbf16>, vector<16x16xf32> -> vector<16x16xf32>
    %418 = arith.addf %417, %17 : vector<16x16xf32>
    %cst_120 = arith.constant dense<0xFF800000> : vector<16xf32>
    %419 = vector.multi_reduction <maximumf>, %418, %cst_120 [1] : vector<16x16xf32> to vector<16xf32>
    %420 = vector.shape_cast %419 : vector<16xf32> to vector<16x1xf32>
    %421 = vector.broadcast %420 : vector<16x1xf32> to vector<16x16xf32>
    %422 = arith.subf %418, %421 : vector<16x16xf32>
    %423 = math.exp %422 : vector<16x16xf32>
    %cst_121 = arith.constant dense<0.000000e+00> : vector<16xf32>
    %424 = vector.multi_reduction <add>, %423, %cst_121 [1] : vector<16x16xf32> to vector<16xf32>
    %425 = vector.shape_cast %424 : vector<16xf32> to vector<16x1xf32>
    %426 = tpu.reciprocal %425 {approx = true} : vector<16x1xf32> -> vector<16x1xf32>
    %427 = vector.broadcast %426 : vector<16x1xf32> to vector<16x16xf32>
    %428 = arith.mulf %423, %427 : vector<16x16xf32>
    %429 = vector.broadcast %46 : vector<1x128xf32> to vector<16x128xf32>
    %430 = arith.mulf %349, %429 : vector<16x128xf32>
    %431 = arith.truncf %430 : vector<16x128xf32> to vector<16x128xbf16>
    %432 = arith.truncf %428 : vector<16x16xf32> to vector<16x16xbf16>
    %cst_122 = arith.constant dense<0.000000e+00> : vector<16x128xf32>
    %433 = tpu.matmul %432, %431, %cst_122 {dimension_numbers = #tpu.dot_dimension_numbers<[1], [0], [0], [1], [0, 0, 1, 1], [], []>} : vector<16x16xbf16>, vector<16x128xbf16>, vector<16x128xf32> -> vector<16x128xf32>
    %434 = arith.addf %413, %433 : vector<16x128xf32>
    %435 = vector.extract_strided_slice %343 {offsets = [16, 0], sizes = [16, 128], strides = [1, 1]} : vector<32x128xf32> to vector<16x128xf32>
    %436 = vector.extract_strided_slice %344 {offsets = [16, 0], sizes = [16, 128], strides = [1, 1]} : vector<32x128xf32> to vector<16x128xf32>
    %437 = arith.truncf %436 : vector<16x128xf32> to vector<16x128xbf16>
    %438 = vector.extract_strided_slice %345 {offsets = [16, 0], sizes = [16, 128], strides = [1, 1]} : vector<32x128xf32> to vector<16x128xf32>
    %cst_123 = arith.constant 0.000000e+00 : f32
    %439 = vector.broadcast %cst_123 : f32 to vector<16x128xf32>
    %440 = vector.broadcast %25 : vector<1x128xf32> to vector<16x128xf32>
    %441 = arith.mulf %435, %440 : vector<16x128xf32>
    %442 = arith.truncf %441 : vector<16x128xf32> to vector<16x128xbf16>
    %cst_124 = arith.constant dense<0.000000e+00> : vector<16x16xf32>
    %443 = tpu.matmul %442, %437, %cst_124 {dimension_numbers = #tpu.dot_dimension_numbers<[1], [1], [0], [0], [0, 0, 1, 0], [], []>} : vector<16x128xbf16>, vector<16x128xbf16>, vector<16x16xf32> -> vector<16x16xf32>
    %444 = arith.addf %443, %17 : vector<16x16xf32>
    %cst_125 = arith.constant dense<0xFF800000> : vector<16xf32>
    %445 = vector.multi_reduction <maximumf>, %444, %cst_125 [1] : vector<16x16xf32> to vector<16xf32>
    %446 = vector.shape_cast %445 : vector<16xf32> to vector<16x1xf32>
    %447 = vector.broadcast %446 : vector<16x1xf32> to vector<16x16xf32>
    %448 = arith.subf %444, %447 : vector<16x16xf32>
    %449 = math.exp %448 : vector<16x16xf32>
    %cst_126 = arith.constant dense<0.000000e+00> : vector<16xf32>
    %450 = vector.multi_reduction <add>, %449, %cst_126 [1] : vector<16x16xf32> to vector<16xf32>
    %451 = vector.shape_cast %450 : vector<16xf32> to vector<16x1xf32>
    %452 = tpu.reciprocal %451 {approx = true} : vector<16x1xf32> -> vector<16x1xf32>
    %453 = vector.broadcast %452 : vector<16x1xf32> to vector<16x16xf32>
    %454 = arith.mulf %449, %453 : vector<16x16xf32>
    %455 = vector.broadcast %25 : vector<1x128xf32> to vector<16x128xf32>
    %456 = arith.mulf %438, %455 : vector<16x128xf32>
    %457 = arith.truncf %456 : vector<16x128xf32> to vector<16x128xbf16>
    %458 = arith.truncf %454 : vector<16x16xf32> to vector<16x16xbf16>
    %cst_127 = arith.constant dense<0.000000e+00> : vector<16x128xf32>
    %459 = tpu.matmul %458, %457, %cst_127 {dimension_numbers = #tpu.dot_dimension_numbers<[1], [0], [0], [1], [0, 0, 1, 1], [], []>} : vector<16x16xbf16>, vector<16x128xbf16>, vector<16x128xf32> -> vector<16x128xf32>
    %460 = arith.addf %439, %459 : vector<16x128xf32>
    %461 = vector.broadcast %32 : vector<1x128xf32> to vector<16x128xf32>
    %462 = arith.mulf %435, %461 : vector<16x128xf32>
    %463 = arith.truncf %462 : vector<16x128xf32> to vector<16x128xbf16>
    %cst_128 = arith.constant dense<0.000000e+00> : vector<16x16xf32>
    %464 = tpu.matmul %463, %437, %cst_128 {dimension_numbers = #tpu.dot_dimension_numbers<[1], [1], [0], [0], [0, 0, 1, 0], [], []>} : vector<16x128xbf16>, vector<16x128xbf16>, vector<16x16xf32> -> vector<16x16xf32>
    %465 = arith.addf %464, %17 : vector<16x16xf32>
    %cst_129 = arith.constant dense<0xFF800000> : vector<16xf32>
    %466 = vector.multi_reduction <maximumf>, %465, %cst_129 [1] : vector<16x16xf32> to vector<16xf32>
    %467 = vector.shape_cast %466 : vector<16xf32> to vector<16x1xf32>
    %468 = vector.broadcast %467 : vector<16x1xf32> to vector<16x16xf32>
    %469 = arith.subf %465, %468 : vector<16x16xf32>
    %470 = math.exp %469 : vector<16x16xf32>
    %cst_130 = arith.constant dense<0.000000e+00> : vector<16xf32>
    %471 = vector.multi_reduction <add>, %470, %cst_130 [1] : vector<16x16xf32> to vector<16xf32>
    %472 = vector.shape_cast %471 : vector<16xf32> to vector<16x1xf32>
    %473 = tpu.reciprocal %472 {approx = true} : vector<16x1xf32> -> vector<16x1xf32>
    %474 = vector.broadcast %473 : vector<16x1xf32> to vector<16x16xf32>
    %475 = arith.mulf %470, %474 : vector<16x16xf32>
    %476 = vector.broadcast %32 : vector<1x128xf32> to vector<16x128xf32>
    %477 = arith.mulf %438, %476 : vector<16x128xf32>
    %478 = arith.truncf %477 : vector<16x128xf32> to vector<16x128xbf16>
    %479 = arith.truncf %475 : vector<16x16xf32> to vector<16x16xbf16>
    %cst_131 = arith.constant dense<0.000000e+00> : vector<16x128xf32>
    %480 = tpu.matmul %479, %478, %cst_131 {dimension_numbers = #tpu.dot_dimension_numbers<[1], [0], [0], [1], [0, 0, 1, 1], [], []>} : vector<16x16xbf16>, vector<16x128xbf16>, vector<16x128xf32> -> vector<16x128xf32>
    %481 = arith.addf %460, %480 : vector<16x128xf32>
    %482 = vector.broadcast %39 : vector<1x128xf32> to vector<16x128xf32>
    %483 = arith.mulf %435, %482 : vector<16x128xf32>
    %484 = arith.truncf %483 : vector<16x128xf32> to vector<16x128xbf16>
    %cst_132 = arith.constant dense<0.000000e+00> : vector<16x16xf32>
    %485 = tpu.matmul %484, %437, %cst_132 {dimension_numbers = #tpu.dot_dimension_numbers<[1], [1], [0], [0], [0, 0, 1, 0], [], []>} : vector<16x128xbf16>, vector<16x128xbf16>, vector<16x16xf32> -> vector<16x16xf32>
    %486 = arith.addf %485, %17 : vector<16x16xf32>
    %cst_133 = arith.constant dense<0xFF800000> : vector<16xf32>
    %487 = vector.multi_reduction <maximumf>, %486, %cst_133 [1] : vector<16x16xf32> to vector<16xf32>
    %488 = vector.shape_cast %487 : vector<16xf32> to vector<16x1xf32>
    %489 = vector.broadcast %488 : vector<16x1xf32> to vector<16x16xf32>
    %490 = arith.subf %486, %489 : vector<16x16xf32>
    %491 = math.exp %490 : vector<16x16xf32>
    %cst_134 = arith.constant dense<0.000000e+00> : vector<16xf32>
    %492 = vector.multi_reduction <add>, %491, %cst_134 [1] : vector<16x16xf32> to vector<16xf32>
    %493 = vector.shape_cast %492 : vector<16xf32> to vector<16x1xf32>
    %494 = tpu.reciprocal %493 {approx = true} : vector<16x1xf32> -> vector<16x1xf32>
    %495 = vector.broadcast %494 : vector<16x1xf32> to vector<16x16xf32>
    %496 = arith.mulf %491, %495 : vector<16x16xf32>
    %497 = vector.broadcast %39 : vector<1x128xf32> to vector<16x128xf32>
    %498 = arith.mulf %438, %497 : vector<16x128xf32>
    %499 = arith.truncf %498 : vector<16x128xf32> to vector<16x128xbf16>
    %500 = arith.truncf %496 : vector<16x16xf32> to vector<16x16xbf16>
    %cst_135 = arith.constant dense<0.000000e+00> : vector<16x128xf32>
    %501 = tpu.matmul %500, %499, %cst_135 {dimension_numbers = #tpu.dot_dimension_numbers<[1], [0], [0], [1], [0, 0, 1, 1], [], []>} : vector<16x16xbf16>, vector<16x128xbf16>, vector<16x128xf32> -> vector<16x128xf32>
    %502 = arith.addf %481, %501 : vector<16x128xf32>
    %503 = vector.broadcast %46 : vector<1x128xf32> to vector<16x128xf32>
    %504 = arith.mulf %435, %503 : vector<16x128xf32>
    %505 = arith.truncf %504 : vector<16x128xf32> to vector<16x128xbf16>
    %cst_136 = arith.constant dense<0.000000e+00> : vector<16x16xf32>
    %506 = tpu.matmul %505, %437, %cst_136 {dimension_numbers = #tpu.dot_dimension_numbers<[1], [1], [0], [0], [0, 0, 1, 0], [], []>} : vector<16x128xbf16>, vector<16x128xbf16>, vector<16x16xf32> -> vector<16x16xf32>
    %507 = arith.addf %506, %17 : vector<16x16xf32>
    %cst_137 = arith.constant dense<0xFF800000> : vector<16xf32>
    %508 = vector.multi_reduction <maximumf>, %507, %cst_137 [1] : vector<16x16xf32> to vector<16xf32>
    %509 = vector.shape_cast %508 : vector<16xf32> to vector<16x1xf32>
    %510 = vector.broadcast %509 : vector<16x1xf32> to vector<16x16xf32>
    %511 = arith.subf %507, %510 : vector<16x16xf32>
    %512 = math.exp %511 : vector<16x16xf32>
    %cst_138 = arith.constant dense<0.000000e+00> : vector<16xf32>
    %513 = vector.multi_reduction <add>, %512, %cst_138 [1] : vector<16x16xf32> to vector<16xf32>
    %514 = vector.shape_cast %513 : vector<16xf32> to vector<16x1xf32>
    %515 = tpu.reciprocal %514 {approx = true} : vector<16x1xf32> -> vector<16x1xf32>
    %516 = vector.broadcast %515 : vector<16x1xf32> to vector<16x16xf32>
    %517 = arith.mulf %512, %516 : vector<16x16xf32>
    %518 = vector.broadcast %46 : vector<1x128xf32> to vector<16x128xf32>
    %519 = arith.mulf %438, %518 : vector<16x128xf32>
    %520 = arith.truncf %519 : vector<16x128xf32> to vector<16x128xbf16>
    %521 = arith.truncf %517 : vector<16x16xf32> to vector<16x16xbf16>
    %cst_139 = arith.constant dense<0.000000e+00> : vector<16x128xf32>
    %522 = tpu.matmul %521, %520, %cst_139 {dimension_numbers = #tpu.dot_dimension_numbers<[1], [0], [0], [1], [0, 0, 1, 1], [], []>} : vector<16x16xbf16>, vector<16x128xbf16>, vector<16x128xf32> -> vector<16x128xf32>
    %523 = arith.addf %502, %522 : vector<16x128xf32>
    %524 = tpu.concatenate %434, %523 in 0 : vector<16x128xf32>, vector<16x128xf32> -> vector<32x128xf32>
    %525 = arith.truncf %524 : vector<32x128xf32> to vector<32x128xbf16>
    %c1_140 = arith.constant 1 : index
    %c0_141 = arith.constant 0 : index
    %c0_142 = arith.constant 0 : index
    %526 = vector.load %arg7[%c1_140, %c0_141, %c0_142] : memref<2x128x128xbf16, #tpu.memory_space<vmem>>, vector<1x128x128xbf16>
    %527 = vector.shape_cast %526 : vector<1x128x128xbf16> to vector<128x128xbf16>
    %cst_143 = arith.constant dense<0.000000e+00> : vector<32x128xf32>
    %528 = tpu.matmul %525, %527, %cst_143 {dimension_numbers = #tpu.dot_dimension_numbers<[1], [0], [0], [1], [0, 0, 1, 1], [], []>} : vector<32x128xbf16>, vector<128x128xbf16>, vector<32x128xf32> -> vector<32x128xf32>
    %c1_144 = arith.constant 1 : index
    %c0_145 = arith.constant 0 : index
    %c0_146 = arith.constant 0 : index
    %529 = vector.load %arg8[%c1_144, %c0_145, %c0_146] : memref<2x1x128xf32, #tpu.memory_space<vmem>>, vector<1x1x128xf32>
    %530 = vector.shape_cast %529 : vector<1x1x128xf32> to vector<1x128xf32>
    %531 = vector.broadcast %530 : vector<1x128xf32> to vector<32x128xf32>
    %532 = arith.addf %528, %531 : vector<32x128xf32>
    %533 = arith.addf %312, %532 : vector<32x128xf32>
    %c1_147 = arith.constant 1 : index
    %c0_148 = arith.constant 0 : index
    %c0_149 = arith.constant 0 : index
    %534 = vector.load %arg9[%c1_147, %c0_148, %c0_149] : memref<2x1x128xf32, #tpu.memory_space<vmem>>, vector<1x1x128xf32>
    %535 = vector.shape_cast %534 : vector<1x1x128xf32> to vector<1x128xf32>
    %c1_150 = arith.constant 1 : index
    %c0_151 = arith.constant 0 : index
    %c0_152 = arith.constant 0 : index
    %536 = vector.load %arg10[%c1_150, %c0_151, %c0_152] : memref<2x1x128xf32, #tpu.memory_space<vmem>>, vector<1x1x128xf32>
    %537 = vector.shape_cast %536 : vector<1x1x128xf32> to vector<1x128xf32>
    %cst_153 = arith.constant dense<0.000000e+00> : vector<32xf32>
    %538 = vector.multi_reduction <add>, %533, %cst_153 [1] : vector<32x128xf32> to vector<32xf32>
    %539 = vector.shape_cast %538 : vector<32xf32> to vector<32x1xf32>
    %cst_154 = arith.constant 1.280000e+02 : f32
    %540 = vector.broadcast %cst_154 : f32 to vector<32x1xf32>
    %541 = arith.divf %539, %540 : vector<32x1xf32>
    %542 = vector.broadcast %541 : vector<32x1xf32> to vector<32x128xf32>
    %543 = arith.subf %533, %542 : vector<32x128xf32>
    %544 = arith.mulf %543, %543 : vector<32x128xf32>
    %cst_155 = arith.constant dense<0.000000e+00> : vector<32xf32>
    %545 = vector.multi_reduction <add>, %544, %cst_155 [1] : vector<32x128xf32> to vector<32xf32>
    %546 = vector.shape_cast %545 : vector<32xf32> to vector<32x1xf32>
    %cst_156 = arith.constant 1.280000e+02 : f32
    %547 = vector.broadcast %cst_156 : f32 to vector<32x1xf32>
    %548 = arith.divf %546, %547 : vector<32x1xf32>
    %549 = vector.broadcast %541 : vector<32x1xf32> to vector<32x128xf32>
    %550 = arith.subf %533, %549 : vector<32x128xf32>
    %cst_157 = arith.constant 9.99999974E-6 : f32
    %551 = vector.broadcast %cst_157 : f32 to vector<32x1xf32>
    %552 = arith.addf %548, %551 : vector<32x1xf32>
    %553 = math.rsqrt %552 : vector<32x1xf32>
    %554 = vector.broadcast %553 : vector<32x1xf32> to vector<32x128xf32>
    %555 = arith.mulf %550, %554 : vector<32x128xf32>
    %556 = vector.broadcast %535 : vector<1x128xf32> to vector<32x128xf32>
    %557 = arith.mulf %555, %556 : vector<32x128xf32>
    %558 = vector.broadcast %537 : vector<1x128xf32> to vector<32x128xf32>
    %559 = arith.addf %557, %558 : vector<32x128xf32>
    %560 = arith.truncf %559 : vector<32x128xf32> to vector<32x128xbf16>
    %c1_158 = arith.constant 1 : index
    %c0_159 = arith.constant 0 : index
    %c0_160 = arith.constant 0 : index
    %561 = vector.load %arg11[%c1_158, %c0_159, %c0_160] : memref<2x128x512xbf16, #tpu.memory_space<vmem>>, vector<1x128x512xbf16>
    %562 = vector.shape_cast %561 : vector<1x128x512xbf16> to vector<128x512xbf16>
    %cst_161 = arith.constant dense<0.000000e+00> : vector<32x512xf32>
    %563 = tpu.matmul %560, %562, %cst_161 {dimension_numbers = #tpu.dot_dimension_numbers<[1], [0], [0], [1], [0, 0, 1, 1], [], []>} : vector<32x128xbf16>, vector<128x512xbf16>, vector<32x512xf32> -> vector<32x512xf32>
    %c1_162 = arith.constant 1 : index
    %c0_163 = arith.constant 0 : index
    %c0_164 = arith.constant 0 : index
    %564 = vector.load %arg12[%c1_162, %c0_163, %c0_164] : memref<2x1x512xf32, #tpu.memory_space<vmem>>, vector<1x1x512xf32>
    %565 = vector.shape_cast %564 : vector<1x1x512xf32> to vector<1x512xf32>
    %566 = vector.broadcast %565 : vector<1x512xf32> to vector<32x512xf32>
    %567 = arith.addf %563, %566 : vector<32x512xf32>
    %cst_165 = arith.constant 0.000000e+00 : f32
    %568 = vector.broadcast %cst_165 : f32 to vector<32x512xf32>
    %569 = arith.maximumf %567, %568 : vector<32x512xf32>
    %570 = arith.truncf %569 : vector<32x512xf32> to vector<32x512xbf16>
    %c1_166 = arith.constant 1 : index
    %c0_167 = arith.constant 0 : index
    %c0_168 = arith.constant 0 : index
    %571 = vector.load %arg13[%c1_166, %c0_167, %c0_168] : memref<2x512x128xbf16, #tpu.memory_space<vmem>>, vector<1x512x128xbf16>
    %572 = vector.shape_cast %571 : vector<1x512x128xbf16> to vector<512x128xbf16>
    %cst_169 = arith.constant dense<0.000000e+00> : vector<32x128xf32>
    %573 = tpu.matmul %570, %572, %cst_169 {dimension_numbers = #tpu.dot_dimension_numbers<[1], [0], [0], [1], [0, 0, 1, 1], [], []>} : vector<32x512xbf16>, vector<512x128xbf16>, vector<32x128xf32> -> vector<32x128xf32>
    %c1_170 = arith.constant 1 : index
    %c0_171 = arith.constant 0 : index
    %c0_172 = arith.constant 0 : index
    %574 = vector.load %arg14[%c1_170, %c0_171, %c0_172] : memref<2x1x128xf32, #tpu.memory_space<vmem>>, vector<1x1x128xf32>
    %575 = vector.shape_cast %574 : vector<1x1x128xf32> to vector<1x128xf32>
    %576 = vector.broadcast %575 : vector<1x128xf32> to vector<32x128xf32>
    %577 = arith.addf %573, %576 : vector<32x128xf32>
    %578 = arith.addf %533, %577 : vector<32x128xf32>
    %c0_173 = arith.constant 0 : index
    %c0_174 = arith.constant 0 : index
    %579 = vector.load %arg15[%c0_173, %c0_174] : memref<1x128xf32, #tpu.memory_space<vmem>>, vector<1x128xf32>
    %c0_175 = arith.constant 0 : index
    %c0_176 = arith.constant 0 : index
    %580 = vector.load %arg16[%c0_175, %c0_176] : memref<1x128xf32, #tpu.memory_space<vmem>>, vector<1x128xf32>
    %cst_177 = arith.constant dense<0.000000e+00> : vector<32xf32>
    %581 = vector.multi_reduction <add>, %578, %cst_177 [1] : vector<32x128xf32> to vector<32xf32>
    %582 = vector.shape_cast %581 : vector<32xf32> to vector<32x1xf32>
    %cst_178 = arith.constant 1.280000e+02 : f32
    %583 = vector.broadcast %cst_178 : f32 to vector<32x1xf32>
    %584 = arith.divf %582, %583 : vector<32x1xf32>
    %585 = vector.broadcast %584 : vector<32x1xf32> to vector<32x128xf32>
    %586 = arith.subf %578, %585 : vector<32x128xf32>
    %587 = arith.mulf %586, %586 : vector<32x128xf32>
    %cst_179 = arith.constant dense<0.000000e+00> : vector<32xf32>
    %588 = vector.multi_reduction <add>, %587, %cst_179 [1] : vector<32x128xf32> to vector<32xf32>
    %589 = vector.shape_cast %588 : vector<32xf32> to vector<32x1xf32>
    %cst_180 = arith.constant 1.280000e+02 : f32
    %590 = vector.broadcast %cst_180 : f32 to vector<32x1xf32>
    %591 = arith.divf %589, %590 : vector<32x1xf32>
    %592 = vector.broadcast %584 : vector<32x1xf32> to vector<32x128xf32>
    %593 = arith.subf %578, %592 : vector<32x128xf32>
    %cst_181 = arith.constant 9.99999974E-6 : f32
    %594 = vector.broadcast %cst_181 : f32 to vector<32x1xf32>
    %595 = arith.addf %591, %594 : vector<32x1xf32>
    %596 = math.rsqrt %595 : vector<32x1xf32>
    %597 = vector.broadcast %596 : vector<32x1xf32> to vector<32x128xf32>
    %598 = arith.mulf %593, %597 : vector<32x128xf32>
    %599 = vector.broadcast %579 : vector<1x128xf32> to vector<32x128xf32>
    %600 = arith.mulf %598, %599 : vector<32x128xf32>
    %601 = vector.broadcast %580 : vector<1x128xf32> to vector<32x128xf32>
    %602 = arith.addf %600, %601 : vector<32x128xf32>
    %603 = arith.truncf %602 : vector<32x128xf32> to vector<32x128xbf16>
    %c0_182 = arith.constant 0 : index
    %c0_183 = arith.constant 0 : index
    %604 = vector.load %arg17[%c0_182, %c0_183] : memref<128x128xbf16, #tpu.memory_space<vmem>>, vector<128x128xbf16>
    %cst_184 = arith.constant dense<0.000000e+00> : vector<32x128xf32>
    %605 = tpu.matmul %603, %604, %cst_184 {dimension_numbers = #tpu.dot_dimension_numbers<[1], [0], [0], [1], [0, 0, 1, 1], [], []>} : vector<32x128xbf16>, vector<128x128xbf16>, vector<32x128xf32> -> vector<32x128xf32>
    %c0_185 = arith.constant 0 : index
    %c0_186 = arith.constant 0 : index
    %606 = vector.load %arg18[%c0_185, %c0_186] : memref<1x128xf32, #tpu.memory_space<vmem>>, vector<1x128xf32>
    %607 = vector.broadcast %606 : vector<1x128xf32> to vector<32x128xf32>
    %608 = arith.addf %605, %607 : vector<32x128xf32>
    %609 = vector.extract_strided_slice %608 {offsets = [0, 0], sizes = [16, 128], strides = [1, 1]} : vector<32x128xf32> to vector<16x128xf32>
    %c0_187 = arith.constant 0 : index
    %c0_188 = arith.constant 0 : index
    %c0_189 = arith.constant 0 : index
    %610 = vector.load %arg19[%c0_187, %c0_188, %c0_189] : memref<2x16x128xf32, #tpu.memory_space<vmem>>, vector<1x16x128xf32>
    %611 = vector.shape_cast %610 : vector<1x16x128xf32> to vector<16x128xf32>
    %612 = vector.shape_cast %609 : vector<16x128xf32> to vector<1x16x128xf32>
    tpu.vector_store %arg19[%c0_187, %c0_188, %c0_189], %612 {strides = array<i32>} : memref<2x16x128xf32, #tpu.memory_space<vmem>>, vector<1x16x128xf32>,
    %613 = vector.extract_strided_slice %608 {offsets = [16, 0], sizes = [16, 128], strides = [1, 1]} : vector<32x128xf32> to vector<16x128xf32>
    %c1_190 = arith.constant 1 : index
    %c0_191 = arith.constant 0 : index
    %c0_192 = arith.constant 0 : index
    %614 = vector.load %arg19[%c1_190, %c0_191, %c0_192] : memref<2x16x128xf32, #tpu.memory_space<vmem>>, vector<1x16x128xf32>
    %615 = vector.shape_cast %614 : vector<1x16x128xf32> to vector<16x128xf32>
    %616 = vector.shape_cast %613 : vector<16x128xf32> to vector<1x16x128xf32>
    tpu.vector_store %arg19[%c1_190, %c0_191, %c0_192], %616 {strides = array<i32>} : memref<2x16x128xf32, #tpu.memory_space<vmem>>, vector<1x16x128xf32>,
    return
  }
  func.func @transform_0(%arg0: i32) -> (i32, i32) {
    %c0_i32 = arith.constant 0 : i32
    %c0_i32_0 = arith.constant 0 : i32
    %c0_i32_1 = arith.constant 0 : i32
    return %c0_i32, %c0_i32_0 : i32, i32
  }
  func.func @transform_1(%arg0: i32) -> (i32, i32) {
    %c0_i32 = arith.constant 0 : i32
    %c0_i32_0 = arith.constant 0 : i32
    %c0_i32_1 = arith.constant 0 : i32
    return %c0_i32, %c0_i32_0 : i32, i32
  }
  func.func @transform_2(%arg0: i32) -> (i32, i32) {
    %c0_i32 = arith.constant 0 : i32
    %c0_i32_0 = arith.constant 0 : i32
    %c0_i32_1 = arith.constant 0 : i32
    return %c0_i32, %c0_i32_0 : i32, i32
  }
  func.func @transform_3(%arg0: i32) -> (i32, i32, i32) {
    %c0_i32 = arith.constant 0 : i32
    %c0_i32_0 = arith.constant 0 : i32
    %c0_i32_1 = arith.constant 0 : i32
    %c0_i32_2 = arith.constant 0 : i32
    return %c0_i32, %c0_i32_0, %c0_i32_1 : i32, i32, i32
  }
  func.func @transform_4(%arg0: i32) -> (i32, i32, i32) {
    %c0_i32 = arith.constant 0 : i32
    %c0_i32_0 = arith.constant 0 : i32
    %c0_i32_1 = arith.constant 0 : i32
    %c0_i32_2 = arith.constant 0 : i32
    return %c0_i32, %c0_i32_0, %c0_i32_1 : i32, i32, i32
  }
  func.func @transform_5(%arg0: i32) -> (i32, i32, i32) {
    %c0_i32 = arith.constant 0 : i32
    %c0_i32_0 = arith.constant 0 : i32
    %c0_i32_1 = arith.constant 0 : i32
    %c0_i32_2 = arith.constant 0 : i32
    return %c0_i32, %c0_i32_0, %c0_i32_1 : i32, i32, i32
  }
  func.func @transform_6(%arg0: i32) -> (i32, i32, i32) {
    %c0_i32 = arith.constant 0 : i32
    %c0_i32_0 = arith.constant 0 : i32
    %c0_i32_1 = arith.constant 0 : i32
    %c0_i32_2 = arith.constant 0 : i32
    return %c0_i32, %c0_i32_0, %c0_i32_1 : i32, i32, i32
  }
  func.func @transform_7(%arg0: i32) -> (i32, i32, i32) {
    %c0_i32 = arith.constant 0 : i32
    %c0_i32_0 = arith.constant 0 : i32
    %c0_i32_1 = arith.constant 0 : i32
    %c0_i32_2 = arith.constant 0 : i32
    return %c0_i32, %c0_i32_0, %c0_i32_1 : i32, i32, i32
  }
  func.func @transform_8(%arg0: i32) -> (i32, i32, i32) {
    %c0_i32 = arith.constant 0 : i32
    %c0_i32_0 = arith.constant 0 : i32
    %c0_i32_1 = arith.constant 0 : i32
    %c0_i32_2 = arith.constant 0 : i32
    return %c0_i32, %c0_i32_0, %c0_i32_1 : i32, i32, i32
  }
  func.func @transform_9(%arg0: i32) -> (i32, i32, i32) {
    %c0_i32 = arith.constant 0 : i32
    %c0_i32_0 = arith.constant 0 : i32
    %c0_i32_1 = arith.constant 0 : i32
    %c0_i32_2 = arith.constant 0 : i32
    return %c0_i32, %c0_i32_0, %c0_i32_1 : i32, i32, i32
  }
  func.func @transform_10(%arg0: i32) -> (i32, i32, i32) {
    %c0_i32 = arith.constant 0 : i32
    %c0_i32_0 = arith.constant 0 : i32
    %c0_i32_1 = arith.constant 0 : i32
    %c0_i32_2 = arith.constant 0 : i32
    return %c0_i32, %c0_i32_0, %c0_i32_1 : i32, i32, i32
  }
  func.func @transform_11(%arg0: i32) -> (i32, i32, i32) {
    %c0_i32 = arith.constant 0 : i32
    %c0_i32_0 = arith.constant 0 : i32
    %c0_i32_1 = arith.constant 0 : i32
    %c0_i32_2 = arith.constant 0 : i32
    return %c0_i32, %c0_i32_0, %c0_i32_1 : i32, i32, i32
  }
  func.func @transform_12(%arg0: i32) -> (i32, i32, i32) {
    %c0_i32 = arith.constant 0 : i32
    %c0_i32_0 = arith.constant 0 : i32
    %c0_i32_1 = arith.constant 0 : i32
    %c0_i32_2 = arith.constant 0 : i32
    return %c0_i32, %c0_i32_0, %c0_i32_1 : i32, i32, i32
  }
  func.func @transform_13(%arg0: i32) -> (i32, i32, i32) {
    %c0_i32 = arith.constant 0 : i32
    %c0_i32_0 = arith.constant 0 : i32
    %c0_i32_1 = arith.constant 0 : i32
    %c0_i32_2 = arith.constant 0 : i32
    return %c0_i32, %c0_i32_0, %c0_i32_1 : i32, i32, i32
  }
  func.func @transform_14(%arg0: i32) -> (i32, i32) {
    %c0_i32 = arith.constant 0 : i32
    %c0_i32_0 = arith.constant 0 : i32
    %c0_i32_1 = arith.constant 0 : i32
    return %c0_i32, %c0_i32_0 : i32, i32
  }
  func.func @transform_15(%arg0: i32) -> (i32, i32) {
    %c0_i32 = arith.constant 0 : i32
    %c0_i32_0 = arith.constant 0 : i32
    %c0_i32_1 = arith.constant 0 : i32
    return %c0_i32, %c0_i32_0 : i32, i32
  }
  func.func @transform_16(%arg0: i32) -> (i32, i32) {
    %c0_i32 = arith.constant 0 : i32
    %c0_i32_0 = arith.constant 0 : i32
    %c0_i32_1 = arith.constant 0 : i32
    return %c0_i32, %c0_i32_0 : i32, i32
  }
  func.func @transform_17(%arg0: i32) -> (i32, i32) {
    %c0_i32 = arith.constant 0 : i32
    %c0_i32_0 = arith.constant 0 : i32
    %c0_i32_1 = arith.constant 0 : i32
    return %c0_i32, %c0_i32_0 : i32, i32
  }
  func.func @transform_18(%arg0: i32) -> (i32, i32, i32) {
    %c0_i32 = arith.constant 0 : i32
    %c0_i32_0 = arith.constant 0 : i32
    %c0_i32_1 = arith.constant 0 : i32
    %c0_i32_2 = arith.constant 0 : i32
    return %c0_i32, %c0_i32_0, %c0_i32_1 : i32, i32, i32
  }
}

</mosaic_0001>

<llo_original>
// kernel: bigram_lm_forward.1
$region0: #{bigram_lm_forward.1}
  #allocation0 [shape = 'u32[]', space=smem, size = 0x4, offset = 0x4, fixed_abs, tag = 'smem constant byte address 0x4 - core index']
  #allocation1 [shape = 'u32[144,128]{1,0:T(1,128)}', space=vmem, size = 0x12000, scoped, tag = 'internal scratch']
  %s0 = inlined_call_operand.vmem [shape: s32[32,1], index: 0, kind: input, shape index: {}]
  %s1 = inlined_call_operand.hbm [shape: f32[128,128], index: 1, kind: input, shape index: {}]
  %s2 = inlined_call_operand.vmem [shape: f32[32,128], index: 2, kind: input, shape index: {}]
  %s3 = inlined_call_operand.vmem [shape: f32[2,1,128], index: 3, kind: input, shape index: {}]
  %s4 = inlined_call_operand.vmem [shape: f32[2,1,128], index: 4, kind: input, shape index: {}]
  %s5 = inlined_call_operand.hbm [shape: bf16[2,128,384], index: 5, kind: input, shape index: {}]
  %s6 = inlined_call_operand.hbm [shape: bf16[2,128,128], index: 6, kind: input, shape index: {}]
  %s7 = inlined_call_operand.vmem [shape: f32[2,1,128], index: 7, kind: input, shape index: {}]
  %s8 = inlined_call_operand.vmem [shape: f32[2,1,128], index: 8, kind: input, shape index: {}]
  %s9 = inlined_call_operand.vmem [shape: f32[2,1,128], index: 9, kind: input, shape index: {}]
  %s10 = inlined_call_operand.hbm [shape: bf16[2,128,512], index: 10, kind: input, shape index: {}]
  %s11 = inlined_call_operand.vmem [shape: f32[2,1,512], index: 11, kind: input, shape index: {}]
  %s12 = inlined_call_operand.hbm [shape: bf16[2,512,128], index: 12, kind: input, shape index: {}]
  %s13 = inlined_call_operand.vmem [shape: f32[2,1,128], index: 13, kind: input, shape index: {}]
  %s14 = inlined_call_operand.vmem [shape: f32[1,128], index: 14, kind: input, shape index: {}]
  %s15 = inlined_call_operand.vmem [shape: f32[1,128], index: 15, kind: input, shape index: {}]
  %s16 = inlined_call_operand.hbm [shape: bf16[128,128], index: 16, kind: input, shape index: {}]
  %s17 = inlined_call_operand.vmem [shape: f32[1,128], index: 17, kind: input, shape index: {}]
  %s18 = inlined_call_operand.hbm [shape: f32[2,16,128], index: 18, kind: output, shape index: {}]
  %s19 = sld [smem:[#allocation0]]
  $region106: #{bigram_lm_forward.1} parent=0
    _
  %s21 = ssub.s32 1, %s19
  %s22 = scalar_select 0, %s21, %s19
  $region1: #{bigram_lm_forward.1} parent=0
    #allocation2 [shape = 'u8[65536]{0}', space=vmem, size = 0x10000, scoped, tag = 'input window, operand 1, single buffered']
    #allocation3 [shape = 's32[1]{0}', space=sflag, size = 0x4, scoped, tag = 'scoped memory for bigram_lm_forward.1']
    #allocation4 [shape = 's32[1]{0}', space=sflag, size = 0x4, scoped, tag = 'scoped memory for bigram_lm_forward.1']
    #allocation5 [shape = 'u8[196608]{0}', space=vmem, size = 0x30000, scoped, tag = 'input window, operand 5, single buffered']
    #allocation6 [shape = 's32[1]{0}', space=sflag, size = 0x4, scoped, tag = 'scoped memory for bigram_lm_forward.1']
    #allocation7 [shape = 'u8[65536]{0}', space=vmem, size = 0x10000, scoped, tag = 'input window, operand 6, single buffered']
    #allocation8 [shape = 'u8[262144]{0}', space=vmem, size = 0x40000, scoped, tag = 'input window, operand 10, single buffered']
    #allocation9 [shape = 's32[1]{0}', space=sflag, size = 0x4, scoped, tag = 'scoped memory for bigram_lm_forward.1']
    #allocation10 [shape = 'u8[262144]{0}', space=vmem, size = 0x40000, scoped, tag = 'input window, operand 12, single buffered']
    #allocation11 [shape = 'u8[32768]{0}', space=vmem, size = 0x8000, scoped, tag = 'input window, operand 16, single buffered']
    #allocation12 [shape = 's32[1]{0}', space=sflag, size = 0x4, scoped, tag = 'scoped memory for bigram_lm_forward.1']
    #allocation13 [shape = 'u8[16384]{0}', space=vmem, size = 0x4000, scoped, tag = 'output window, operand 0, single buffered']
    %23 = vsyncpa [#allocation3], 0
    %24 = vsyncpa [#allocation6], 0
    %25 = vsyncpa [#allocation9], 0
    %26 = vsyncpa [#allocation12], 0
    %27 = vsyncpa [#allocation4], 0
    // Predicated region
    $region2: #{bigram_lm_forward.1} parent=1 // pred_check
      _
    $region3: #{bigram_lm_forward.1} parent=1 // pred_check_branch
      %29 = sbr.rel (0) target = $region5
    $region4: #{bigram_lm_forward.1} parent=1 // pred_region
      _
    $region5: #{bigram_lm_forward.1} parent=1 // pred_fallthru
      _
    // Predicated region
    $region6: #{bigram_lm_forward.1} parent=1 // pred_check
      _
    $region7: #{bigram_lm_forward.1} parent=1 // pred_check_branch
      %31 = sbr.rel (0) target = $region9
    $region8: #{bigram_lm_forward.1} parent=1 // pred_region
      %s33 = ssub.s32 2048, 2048
      %34 = vsyncadd [#allocation3], %s33
      %s35 = sshll.u32 [#allocation2], 4
      %s36 = int_to_ptr.vmem [resolvable:$true] %s35
      %41 = dma.hbm_to_vmem [thread:$0]  %s1, 2048, %s36, [#allocation3], 128, 128, 8
    $region9: #{bigram_lm_forward.1} parent=1 // pred_fallthru
      _
    // Predicated region
    $region10: #{bigram_lm_forward.1} parent=1 // pred_check
      _
    $region11: #{bigram_lm_forward.1} parent=1 // pred_check_branch
      %43 = sbr.rel (0) target = $region13
    $region12: #{bigram_lm_forward.1} parent=1 // pred_region
      _
    $region13: #{bigram_lm_forward.1} parent=1 // pred_fallthru
      _
    // Predicated region
    $region14: #{bigram_lm_forward.1} parent=1 // pred_check
      _
    $region15: #{bigram_lm_forward.1} parent=1 // pred_check_branch
      %45 = sbr.rel (0) target = $region17
    $region16: #{bigram_lm_forward.1} parent=1 // pred_region
      _
    $region17: #{bigram_lm_forward.1} parent=1 // pred_fallthru
      _
    // Predicated region
    $region18: #{bigram_lm_forward.1} parent=1 // pred_check
      _
    $region19: #{bigram_lm_forward.1} parent=1 // pred_check_branch
      %47 = sbr.rel (0) target = $region21
    $region20: #{bigram_lm_forward.1} parent=1 // pred_region
      _
    $region21: #{bigram_lm_forward.1} parent=1 // pred_fallthru
      _
    // Predicated region
    $region22: #{bigram_lm_forward.1} parent=1 // pred_check
      _
    $region23: #{bigram_lm_forward.1} parent=1 // pred_check_branch
      %49 = sbr.rel (0) target = $region25
    $region24: #{bigram_lm_forward.1} parent=1 // pred_region
      %s51 = ssub.s32 6144, 6144
      %52 = vsyncadd [#allocation6], %s51
      %s53 = sshll.u32 [#allocation5], 4
      %s54 = int_to_ptr.vmem [resolvable:$true] %s53
      %59 = dma.hbm_to_vmem [thread:$0]  %s5, 6144, %s54, [#allocation6], 192, 192, 12
    $region25: #{bigram_lm_forward.1} parent=1 // pred_fallthru
      _
    // Predicated region
    $region26: #{bigram_lm_forward.1} parent=1 // pred_check
      _
    $region27: #{bigram_lm_forward.1} parent=1 // pred_check_branch
      %61 = sbr.rel (0) target = $region29
    $region28: #{bigram_lm_forward.1} parent=1 // pred_region
      %s63 = ssub.s32 2048, 2048
      %64 = vsyncadd [#allocation6], %s63
      %s65 = sshll.u32 [#allocation7], 4
      %s66 = int_to_ptr.vmem [resolvable:$true] %s65
      %71 = dma.hbm_to_vmem [thread:$0]  %s6, 2048, %s66, [#allocation6], 64, 64, 4
    $region29: #{bigram_lm_forward.1} parent=1 // pred_fallthru
      _
    // Predicated region
    $region30: #{bigram_lm_forward.1} parent=1 // pred_check
      _
    $region31: #{bigram_lm_forward.1} parent=1 // pred_check_branch
      %73 = sbr.rel (0) target = $region33
    $region32: #{bigram_lm_forward.1} parent=1 // pred_region
      _
    $region33: #{bigram_lm_forward.1} parent=1 // pred_fallthru
      _
    // Predicated region
    $region34: #{bigram_lm_forward.1} parent=1 // pred_check
      _
    $region35: #{bigram_lm_forward.1} parent=1 // pred_check_branch
      %75 = sbr.rel (0) target = $region37
    $region36: #{bigram_lm_forward.1} parent=1 // pred_region
      _
    $region37: #{bigram_lm_forward.1} parent=1 // pred_fallthru
      _
    // Predicated region
    $region38: #{bigram_lm_forward.1} parent=1 // pred_check
      _
    $region39: #{bigram_lm_forward.1} parent=1 // pred_check_branch
      %77 = sbr.rel (0) target = $region41
    $region40: #{bigram_lm_forward.1} parent=1 // pred_region
      _
    $region41: #{bigram_lm_forward.1} parent=1 // pred_fallthru
      _
    // Predicated region
    $region42: #{bigram_lm_forward.1} parent=1 // pred_check
      _
    $region43: #{bigram_lm_forward.1} parent=1 // pred_check_branch
      %79 = sbr.rel (0) target = $region45
    $region44: #{bigram_lm_forward.1} parent=1 // pred_region
      %s81 = ssub.s32 8192, 8192
      %82 = vsyncadd [#allocation9], %s81
      %s83 = sshll.u32 [#allocation8], 4
      %s84 = int_to_ptr.vmem [resolvable:$true] %s83
      %89 = dma.hbm_to_vmem [thread:$0]  %s10, 8192, %s84, [#allocation9], 256, 256, 16
    $region45: #{bigram_lm_forward.1} parent=1 // pred_fallthru
      _
    // Predicated region
    $region46: #{bigram_lm_forward.1} parent=1 // pred_check
      _
    $region47: #{bigram_lm_forward.1} parent=1 // pred_check_branch
      %91 = sbr.rel (0) target = $region49
    $region48: #{bigram_lm_forward.1} parent=1 // pred_region
      _
    $region49: #{bigram_lm_forward.1} parent=1 // pred_fallthru
      _
    // Predicated region
    $region50: #{bigram_lm_forward.1} parent=1 // pred_check
      _
    $region51: #{bigram_lm_forward.1} parent=1 // pred_check_branch
      %93 = sbr.rel (0) target = $region53
    $region52: #{bigram_lm_forward.1} parent=1 // pred_region
      %s95 = ssub.s32 8192, 8192
      %96 = vsyncadd [#allocation9], %s95
      %s97 = sshll.u32 [#allocation10], 4
      %s98 = int_to_ptr.vmem [resolvable:$true] %s97
      %103 = dma.hbm_to_vmem [thread:$0]  %s12, 8192, %s98, [#allocation9], 64, 64, 4
    $region53: #{bigram_lm_forward.1} parent=1 // pred_fallthru
      _
    // Predicated region
    $region54: #{bigram_lm_forward.1} parent=1 // pred_check
      _
    $region55: #{bigram_lm_forward.1} parent=1 // pred_check_branch
      %105 = sbr.rel (0) target = $region57
    $region56: #{bigram_lm_forward.1} parent=1 // pred_region
      _
    $region57: #{bigram_lm_forward.1} parent=1 // pred_fallthru
      _
    // Predicated region
    $region58: #{bigram_lm_forward.1} parent=1 // pred_check
      _
    $region59: #{bigram_lm_forward.1} parent=1 // pred_check_branch
      %107 = sbr.rel (0) target = $region61
    $region60: #{bigram_lm_forward.1} parent=1 // pred_region
      _
    $region61: #{bigram_lm_forward.1} parent=1 // pred_fallthru
      _
    // Predicated region
    $region62: #{bigram_lm_forward.1} parent=1 // pred_check
      _
    $region63: #{bigram_lm_forward.1} parent=1 // pred_check_branch
      %109 = sbr.rel (0) target = $region65
    $region64: #{bigram_lm_forward.1} parent=1 // pred_region
      _
    $region65: #{bigram_lm_forward.1} parent=1 // pred_fallthru
      _
    // Predicated region
    $region66: #{bigram_lm_forward.1} parent=1 // pred_check
      _
    $region67: #{bigram_lm_forward.1} parent=1 // pred_check_branch
      %111 = sbr.rel (0) target = $region69
    $region68: #{bigram_lm_forward.1} parent=1 // pred_region
      %s113 = ssub.s32 1024, 1024
      %114 = vsyncadd [#allocation12], %s113
      %s115 = sshll.u32 [#allocation11], 4
      %s116 = int_to_ptr.vmem [resolvable:$true] %s115
      %121 = dma.hbm_to_vmem [thread:$0]  %s16, 1024, %s116, [#allocation12], 64, 64, 4
    $region69: #{bigram_lm_forward.1} parent=1 // pred_fallthru
      _
    // Predicated region
    $region70: #{bigram_lm_forward.1} parent=1 // pred_check
      _
    $region71: #{bigram_lm_forward.1} parent=1 // pred_check_branch
      %123 = sbr.rel (0) target = $region73
    $region72: #{bigram_lm_forward.1} parent=1 // pred_region
      _
    $region73: #{bigram_lm_forward.1} parent=1 // pred_fallthru
      _
    // Predicated region
    $region74: #{bigram_lm_forward.1} parent=1 // pred_check
      _
    $region75: #{bigram_lm_forward.1} parent=1 // pred_check_branch
      %125 = sbr.rel (0) target = $region77
    $region76: #{bigram_lm_forward.1} parent=1 // pred_region
      %126 = dma.done [#allocation3], 2048
    $region77: #{bigram_lm_forward.1} parent=1 // pred_fallthru
      _
    // Predicated region
    $region78: #{bigram_lm_forward.1} parent=1 // pred_check
      _
    $region79: #{bigram_lm_forward.1} parent=1 // pred_check_branch
      %128 = sbr.rel (0) target = $region81
    $region80: #{bigram_lm_forward.1} parent=1 // pred_region
      %129 = dma.done [#allocation6], 6144
    $region81: #{bigram_lm_forward.1} parent=1 // pred_fallthru
      _
    // Predicated region
    $region82: #{bigram_lm_forward.1} parent=1 // pred_check
      _
    $region83: #{bigram_lm_forward.1} parent=1 // pred_check_branch
      %131 = sbr.rel (0) target = $region85
    $region84: #{bigram_lm_forward.1} parent=1 // pred_region
      %132 = dma.done [#allocation6], 2048
    $region85: #{bigram_lm_forward.1} parent=1 // pred_fallthru
      _
    // Predicated region
    $region86: #{bigram_lm_forward.1} parent=1 // pred_check
      _
    $region87: #{bigram_lm_forward.1} parent=1 // pred_check_branch
      %134 = sbr.rel (0) target = $region89
    $region88: #{bigram_lm_forward.1} parent=1 // pred_region
      %135 = dma.done [#allocation9], 8192
    $region89: #{bigram_lm_forward.1} parent=1 // pred_fallthru
      _
    // Predicated region
    $region90: #{bigram_lm_forward.1} parent=1 // pred_check
      _
    $region91: #{bigram_lm_forward.1} parent=1 // pred_check_branch
      %137 = sbr.rel (0) target = $region93
    $region92: #{bigram_lm_forward.1} parent=1 // pred_region
      %138 = dma.done [#allocation9], 8192
    $region93: #{bigram_lm_forward.1} parent=1 // pred_fallthru
      _
    // Predicated region
    $region94: #{bigram_lm_forward.1} parent=1 // pred_check
      _
    $region95: #{bigram_lm_forward.1} parent=1 // pred_check_branch
      %140 = sbr.rel (0) target = $region97
    $region96: #{bigram_lm_forward.1} parent=1 // pred_region
      %141 = dma.done [#allocation12], 1024
    $region97: #{bigram_lm_forward.1} parent=1 // pred_fallthru
      _
    %v143 = vld [vmem:[%s0] sm:$0xff]
    %v144 = vld [vmem:[%s0 + $0x8] sm:$0xff]
    %v145 = vld [vmem:[%s0 + $0x10] sm:$0xff]
    %v146 = vld [vmem:[%s0 + $0x18] sm:$0xff]
    %v147 = vlaneseq
    %v148 = vand.u32 %v147, 127
    %149 = vset.pattern.permute.xlu0 0
    %150 = vperm.xlu0 %149, %v143
    %v151 = vpop.permute.xlu0 %150
    %152 = vset.pattern.permute.xlu0 0
    %153 = vperm.xlu0 %152, %v144
    %v154 = vpop.permute.xlu0 %153
    %155 = vset.pattern.permute.xlu0 0
    %156 = vperm.xlu0 %155, %v145
    %v157 = vpop.permute.xlu0 %156
    %158 = vset.pattern.permute.xlu0 0
    %159 = vperm.xlu0 %158, %v146
    %v160 = vpop.permute.xlu0 %159
    %vm161 = vcmp.eq.s32.totalorder %v151, %v148
    %vm162 = vcmp.eq.s32.totalorder %v154, %v148
    %vm163 = vcmp.eq.s32.totalorder %v157, %v148
    %vm164 = vcmp.eq.s32.totalorder %v160, %v148
    %v165 = vsel %vm161, 1, 0
    %v166 = vsel %vm162, 1, 0
    %v167 = vsel %vm163, 1, 0
    %v168 = vsel %vm164, 1, 0
    %v169 = vcvt.s32.f32 %v165
    %v170 = vcvt.s32.f32 %v166
    %v171 = vcvt.s32.f32 %v167
    %v172 = vcvt.s32.f32 %v168
    %v173 = vld [vmem:[#allocation2] sm:$0xff]
    %v174 = vld [vmem:[#allocation2 + $0x8] sm:$0xff]
    %v175 = vld [vmem:[#allocation2 + $0x10] sm:$0xff]
    %v176 = vld [vmem:[#allocation2 + $0x18] sm:$0xff]
    %v177 = vld [vmem:[#allocation2 + $0x20] sm:$0xff]
    %v178 = vld [vmem:[#allocation2 + $0x28] sm:$0xff]
    %v179 = vld [vmem:[#allocation2 + $0x30] sm:$0xff]
    %v180 = vld [vmem:[#allocation2 + $0x38] sm:$0xff]
    %v181 = vld [vmem:[#allocation2 + $0x40] sm:$0xff]
    %v182 = vld [vmem:[#allocation2 + $0x48] sm:$0xff]
    %v183 = vld [vmem:[#allocation2 + $0x50] sm:$0xff]
    %v184 = vld [vmem:[#allocation2 + $0x58] sm:$0xff]
    %v185 = vld [vmem:[#allocation2 + $0x60] sm:$0xff]
    %v186 = vld [vmem:[#allocation2 + $0x68] sm:$0xff]
    %v187 = vld [vmem:[#allocation2 + $0x70] sm:$0xff]
    %v188 = vld [vmem:[#allocation2 + $0x78] sm:$0xff]
    %v189 = vld [vmem:[%s2] sm:$0xff]
    %v190 = vld [vmem:[%s2 + $0x8] sm:$0xff]
    %191 = vmatprep.subr.mxu0 0.0
    %192 = vmatpush1.msra.mxu0 %v188
    %193 = vmatprep.subr.mxu0 0.0
    %194 = vmatpush1.msra.mxu0 %v187
    %195 = vmatprep.subr.mxu0 0.0
    %196 = vmatpush1.msra.mxu0 %v186
    %197 = vmatprep.subr.mxu0 0.0
    %198 = vmatpush1.msra.mxu0 %v185
    %199 = vmatprep.subr.mxu0 0.0
    %200 = vmatpush1.msra.mxu0 %v184
    %201 = vmatprep.subr.mxu0 0.0
    %202 = vmatpush1.msra.mxu0 %v183
    %203 = vmatprep.subr.mxu0 0.0
    %204 = vmatpush1.msra.mxu0 %v182
    %205 = vmatprep.subr.mxu0 0.0
    %206 = vmatpush1.msra.mxu0 %v181
    %207 = vmatprep.subr.mxu0 0.0
    %208 = vmatpush1.msra.mxu0 %v180
    %209 = vmatprep.subr.mxu0 0.0
    %210 = vmatpush1.msra.mxu0 %v179
    %211 = vmatprep.subr.mxu0 0.0
    %212 = vmatpush1.msra.mxu0 %v178
    %213 = vmatprep.subr.mxu0 0.0
    %214 = vmatpush1.msra.mxu0 %v177
    %215 = vmatprep.subr.mxu0 0.0
    %216 = vmatpush1.msra.mxu0 %v176
    %217 = vmatprep.subr.mxu0 0.0
    %218 = vmatpush1.msra.mxu0 %v175
    %219 = vmatprep.subr.mxu0 0.0
    %220 = vmatpush1.msra.mxu0 %v174
    %221 = vmatprep.subr.mxu0 0.0
    %222 = vmatpush1.msra.mxu0 %v173
    %223 = vmatprep.subr.mxu0 0.0
    %224 = vmatpush2.msra.mxu0 0.0
    %225 = vmatprep.subr.mxu0 0.0
    %226 = vmatpush2.msra.mxu0 0.0
    %227 = vmatprep.subr.mxu0 0.0
    %228 = vmatpush2.msra.mxu0 0.0
    %229 = vmatprep.subr.mxu0 0.0
    %230 = vmatpush2.msra.mxu0 0.0
    %231 = vmatprep.subr.mxu0 0.0
    %232 = vmatpush2.msra.mxu0 0.0
    %233 = vmatprep.subr.mxu0 0.0
    %234 = vmatpush2.msra.mxu0 0.0
    %235 = vmatprep.subr.mxu0 0.0
    %236 = vmatpush2.msra.mxu0 0.0
    %237 = vmatprep.subr.mxu0 0.0
    %238 = vmatpush2.msra.mxu0 0.0
    %239 = vmatprep.subr.mxu0 0.0
    %240 = vmatpush2.msra.mxu0 0.0
    %241 = vmatprep.subr.mxu0 0.0
    %242 = vmatpush2.msra.mxu0 0.0
    %243 = vmatprep.subr.mxu0 0.0
    %244 = vmatpush2.msra.mxu0 0.0
    %245 = vmatprep.subr.mxu0 0.0
    %246 = vmatpush2.msra.mxu0 0.0
    %247 = vmatprep.subr.mxu0 0.0
    %248 = vmatpush2.msra.mxu0 0.0
    %249 = vmatprep.subr.mxu0 0.0
    %250 = vmatpush2.msra.mxu0 0.0
    %251 = vmatprep.subr.mxu0 0.0
    %252 = vmatpush2.msra.mxu0 0.0
    %253 = vmatprep.subr.mxu0 0.0
    %254 = vmatpush2.msra.mxu0 0.0
    %255 = vmatprep.mubr.f32.mxu0 0.0
    %256 = vmatmul.mubr.f32.gmra.mxu0 %v169
    %v257 = vpop.f32.mrf.mxu0
    %v258 = vadd.f32 %v189, %v257
    %v259 = vpop.f32.mrf.mxu0
    %260 = vmatprep.mubr.f32.mxu0 0.0
    %261 = vmatmul.mubr.f32.gmra.mxu0 %v170
    %v262 = vpop.f32.mrf.mxu0
    %v263 = vadd.f32 %v190, %v262
    %v264 = vpop.f32.mrf.mxu0
    %265 = vmatprep.mubr.f32.mxu0 0.0
    %266 = vmatmul.mubr.f32.gmra.mxu0 %v171
    %v267 = vpop.f32.mrf.mxu0
    %v268 = vadd.f32 %v189, %v267
    %v269 = vpop.f32.mrf.mxu0
    %270 = vmatprep.mubr.f32.mxu0 0.0
    %271 = vmatmul.mubr.f32.gmra.mxu0 %v172
    %v272 = vpop.f32.mrf.mxu0
    %v273 = vadd.f32 %v190, %v272
    %v274 = vpop.f32.mrf.mxu0
    %275 = vdwg.mxu0
    %v276 = vlaneseq
    %v277 = vshrl.u32 %v276, 7
    %v278 = vadd.s32 %v277, 8
    %vm279 = vcmp.le.s32.totalorder %v148, %v277
    %vm280 = vcmp.le.s32.totalorder %v148, %v278
    %v281 = vsel %vm279, 0.0, -1e+30
    %v282 = vsel %vm280, 0.0, -1e+30
    %vm283 = vcmp.ge.s32.totalorder %v148, 0
    %vm284 = vcmp.lt.s32.totalorder %v148, 32
    %vm285 = vmand %vm283, %vm284
    %v286 = vsel %vm285, 1, 0
    %v287 = vcvt.s32.f32 %v286
    %vm288 = vcmp.ge.s32.totalorder %v148, 32
    %vm289 = vcmp.lt.s32.totalorder %v148, 64
    %vm290 = vmand %vm288, %vm289
    %v291 = vsel %vm290, 1, 0
    %v292 = vcvt.s32.f32 %v291
    %vm293 = vcmp.ge.s32.totalorder %v148, 64
    %vm294 = vcmp.lt.s32.totalorder %v148, 96
    %vm295 = vmand %vm293, %vm294
    %v296 = vsel %vm295, 1, 0
    %v297 = vcvt.s32.f32 %v296
    %vm298 = vcmp.ge.s32.totalorder %v148, 96
    %vm299 = vcmp.lt.s32.totalorder %v148, 128
    %vm300 = vmand %vm298, %vm299
    %v301 = vsel %vm300, 1, 0
    %v302 = vcvt.s32.f32 %v301
    %v303 = vld [vmem:[%s3] sm:$0x1]
    %v304 = vld [vmem:[%s4] sm:$0x1]
    %305 = vadd.xlane.f32.xlu0 %v258
    %v306 = vpop.xlane.xlu0 %305
    %307 = vadd.xlane.f32.xlu0 %v263
    %v308 = vpop.xlane.xlu0 %307
    %309 = vadd.xlane.f32.xlu0 %v268
    %v310 = vpop.xlane.xlu0 %309
    %311 = vadd.xlane.f32.xlu0 %v273
    %v312 = vpop.xlane.xlu0 %311
    %v313 = vrcp.pop 128.0
    %v314 = vmul.f32 %v306, %v313
    %v315 = vmul.f32 %v308, %v313
    %v316 = vmul.f32 %v310, %v313
    %v317 = vmul.f32 %v312, %v313
    %v318 = vsub.f32 %v258, %v314
    %v319 = vsub.f32 %v263, %v315
    %v320 = vsub.f32 %v268, %v316
    %v321 = vsub.f32 %v273, %v317
    %v322 = vmul.f32 %v318, %v318
    %v323 = vmul.f32 %v319, %v319
    %v324 = vmul.f32 %v320, %v320
    %v325 = vmul.f32 %v321, %v321
    %326 = vadd.xlane.f32.xlu0 %v322
    %v327 = vpop.xlane.xlu0 %326
    %328 = vadd.xlane.f32.xlu0 %v323
    %v329 = vpop.xlane.xlu0 %328
    %330 = vadd.xlane.f32.xlu0 %v324
    %v331 = vpop.xlane.xlu0 %330
    %332 = vadd.xlane.f32.xlu0 %v325
    %v333 = vpop.xlane.xlu0 %332
    %v334 = vmul.f32 %v327, %v313
    %v335 = vmul.f32 %v329, %v313
    %v336 = vmul.f32 %v331, %v313
    %v337 = vmul.f32 %v333, %v313
    %v338 = vadd.f32 %v334, 1e-05
    %v339 = vadd.f32 %v335, 1e-05
    %v340 = vadd.f32 %v336, 1e-05
    %v341 = vadd.f32 %v337, 1e-05
    %v342 = vrsqrt.pop %v338
    %v343 = vrsqrt.pop %v339
    %v344 = vrsqrt.pop %v340
    %v345 = vrsqrt.pop %v341
    %v346 = vmul.f32 %v318, %v342
    %v347 = vmul.f32 %v319, %v343
    %v348 = vmul.f32 %v320, %v344
    %v349 = vmul.f32 %v321, %v345
    %v351 = vlaneseq
    %v352 = vshrl.u32 %v351, 7
    %v353 = vsub.s32 0, %v352
    %v354 = vrot.slane %v303, %v353
    %v356 = vmul.f32 %v346, %v354
    %v357 = vmul.f32 %v347, %v354
    %v358 = vmul.f32 %v348, %v354
    %v359 = vmul.f32 %v349, %v354
    %v361 = vlaneseq
    %v362 = vshrl.u32 %v361, 7
    %v363 = vsub.s32 0, %v362
    %v364 = vrot.slane %v304, %v363
    %v366 = vadd.f32 %v356, %v364
    %v367 = vadd.f32 %v357, %v364
    %v368 = vadd.f32 %v358, %v364
    %v369 = vadd.f32 %v359, %v364
    %v370 = vpack.c.bf16 %v367, %v366
    %v371 = vpack.c.bf16 %v369, %v368
    %v372 = vld [vmem:[#allocation5] sm:$0xff]
    %v373 = vld [vmem:[#allocation5 + $0x8] sm:$0xf]
    %v374 = vld [vmem:[#allocation5 + $0xc] sm:$0xff]
    %v375 = vld [vmem:[#allocation5 + $0x14] sm:$0xf]
    %v376 = vld [vmem:[#allocation5 + $0x18] sm:$0xff]
    %v377 = vld [vmem:[#allocation5 + $0x20] sm:$0xf]
    %v378 = vld [vmem:[#allocation5 + $0x24] sm:$0xff]
    %v379 = vld [vmem:[#allocation5 + $0x2c] sm:$0xf]
    %v380 = vld [vmem:[#allocation5 + $0x30] sm:$0xff]
    %v381 = vld [vmem:[#allocation5 + $0x38] sm:$0xf]
    %v382 = vld [vmem:[#allocation5 + $0x3c] sm:$0xff]
    %v383 = vld [vmem:[#allocation5 + $0x44] sm:$0xf]
    %v384 = vld [vmem:[#allocation5 + $0x48] sm:$0xff]
    %v385 = vld [vmem:[#allocation5 + $0x50] sm:$0xf]
    %v386 = vld [vmem:[#allocation5 + $0x54] sm:$0xff]
    %v387 = vld [vmem:[#allocation5 + $0x5c] sm:$0xf]
    %v388 = vld [vmem:[#allocation5 + $0x60] sm:$0xff]
    %v389 = vld [vmem:[#allocation5 + $0x68] sm:$0xf]
    %v390 = vld [vmem:[#allocation5 + $0x6c] sm:$0xff]
    %v391 = vld [vmem:[#allocation5 + $0x74] sm:$0xf]
    %v392 = vld [vmem:[#allocation5 + $0x78] sm:$0xff]
    %v393 = vld [vmem:[#allocation5 + $0x80] sm:$0xf]
    %v394 = vld [vmem:[#allocation5 + $0x84] sm:$0xff]
    %v395 = vld [vmem:[#allocation5 + $0x8c] sm:$0xf]
    %v396 = vld [vmem:[#allocation5 + $0x90] sm:$0xff]
    %v397 = vld [vmem:[#allocation5 + $0x98] sm:$0xf]
    %v398 = vld [vmem:[#allocation5 + $0x9c] sm:$0xff]
    %v399 = vld [vmem:[#allocation5 + $0xa4] sm:$0xf]
    %v400 = vld [vmem:[#allocation5 + $0xa8] sm:$0xff]
    %v401 = vld [vmem:[#allocation5 + $0xb0] sm:$0xf]
    %v402 = vld [vmem:[#allocation5 + $0xb4] sm:$0xff]
    %v403 = vld [vmem:[#allocation5 + $0xbc] sm:$0xf]
    %v436 = vunpack.c.l.b16 %v372
    %v437 = vunpack.c.h.b16 %v372
    %v438 = vunpack.c.l.b16 %v373
    %v439 = vunpack.c.l.b16 %v374
    %v440 = vunpack.c.h.b16 %v374
    %v441 = vunpack.c.l.b16 %v375
    %v442 = vunpack.c.l.b16 %v376
    %v443 = vunpack.c.h.b16 %v376
    %v444 = vunpack.c.l.b16 %v377
    %v445 = vunpack.c.l.b16 %v378
    %v446 = vunpack.c.h.b16 %v378
    %v447 = vunpack.c.l.b16 %v379
    %v448 = vunpack.c.l.b16 %v380
    %v449 = vunpack.c.h.b16 %v380
    %v450 = vunpack.c.l.b16 %v381
    %v451 = vunpack.c.l.b16 %v382
    %v452 = vunpack.c.h.b16 %v382
    %v453 = vunpack.c.l.b16 %v383
    %v454 = vunpack.c.l.b16 %v384
    %v455 = vunpack.c.h.b16 %v384
    %v456 = vunpack.c.l.b16 %v385
    %v457 = vunpack.c.l.b16 %v386
    %v458 = vunpack.c.h.b16 %v386
    %v459 = vunpack.c.l.b16 %v387
    %v460 = vunpack.c.l.b16 %v388
    %v461 = vunpack.c.h.b16 %v388
    %v462 = vunpack.c.l.b16 %v389
    %v463 = vunpack.c.l.b16 %v390
    %v464 = vunpack.c.h.b16 %v390
    %v465 = vunpack.c.l.b16 %v391
    %v466 = vunpack.c.l.b16 %v392
    %v467 = vunpack.c.h.b16 %v392
    %v468 = vunpack.c.l.b16 %v393
    %v469 = vunpack.c.l.b16 %v394
    %v470 = vunpack.c.h.b16 %v394
    %v471 = vunpack.c.l.b16 %v395
    %v472 = vunpack.c.l.b16 %v396
    %v473 = vunpack.c.h.b16 %v396
    %v474 = vunpack.c.l.b16 %v397
    %v475 = vunpack.c.l.b16 %v398
    %v476 = vunpack.c.h.b16 %v398
    %v477 = vunpack.c.l.b16 %v399
    %v478 = vunpack.c.l.b16 %v400
    %v479 = vunpack.c.h.b16 %v400
    %v480 = vunpack.c.l.b16 %v401
    %v481 = vunpack.c.l.b16 %v402
    %v482 = vunpack.c.h.b16 %v402
    %v483 = vunpack.c.l.b16 %v403
    %v484 = vpack.c.b16 %v439, %v436
    %v485 = vpack.c.b16 %v440, %v437
    %v486 = vpack.c.b16 %v441, %v438
    %v487 = vpack.c.b16 %v445, %v442
    %v488 = vpack.c.b16 %v446, %v443
    %v489 = vpack.c.b16 %v447, %v444
    %v490 = vpack.c.b16 %v451, %v448
    %v491 = vpack.c.b16 %v452, %v449
    %v492 = vpack.c.b16 %v453, %v450
    %v493 = vpack.c.b16 %v457, %v454
    %v494 = vpack.c.b16 %v458, %v455
    %v495 = vpack.c.b16 %v459, %v456
    %v496 = vpack.c.b16 %v463, %v460
    %v497 = vpack.c.b16 %v464, %v461
    %v498 = vpack.c.b16 %v465, %v462
    %v499 = vpack.c.b16 %v469, %v466
    %v500 = vpack.c.b16 %v470, %v467
    %v501 = vpack.c.b16 %v471, %v468
    %v502 = vpack.c.b16 %v475, %v472
    %v503 = vpack.c.b16 %v476, %v473
    %v504 = vpack.c.b16 %v477, %v474
    %v505 = vpack.c.b16 %v481, %v478
    %v506 = vpack.c.b16 %v482, %v479
    %v507 = vpack.c.b16 %v483, %v480
    %532 = vmatprep.subr.bf16.mxu0 %v506
    %533 = vmatpush1.bf16.msra.mxu0 %v505
    %534 = vmatprep.subr.bf16.mxu0 %v503
    %535 = vmatpush1.bf16.msra.mxu0 %v502
    %536 = vmatprep.subr.bf16.mxu0 %v500
    %537 = vmatpush1.bf16.msra.mxu0 %v499
    %538 = vmatprep.subr.bf16.mxu0 %v497
    %539 = vmatpush1.bf16.msra.mxu0 %v496
    %540 = vmatprep.subr.bf16.mxu0 %v494
    %541 = vmatpush1.bf16.msra.mxu0 %v493
    %542 = vmatprep.subr.bf16.mxu0 %v491
    %543 = vmatpush1.bf16.msra.mxu0 %v490
    %544 = vmatprep.subr.bf16.mxu0 %v488
    %545 = vmatpush1.bf16.msra.mxu0 %v487
    %546 = vmatprep.subr.bf16.mxu0 %v485
    %547 = vmatpush1.bf16.msra.mxu0 %v484
    %548 = vmatprep.subr.bf16.mxu0 0
    %549 = vmatpush2.bf16.msra.mxu0 0
    %550 = vmatprep.subr.bf16.mxu0 0
    %551 = vmatpush2.bf16.msra.mxu0 0
    %552 = vmatprep.subr.bf16.mxu0 0
    %553 = vmatpush2.bf16.msra.mxu0 0
    %554 = vmatprep.subr.bf16.mxu0 0
    %555 = vmatpush2.bf16.msra.mxu0 0
    %556 = vmatprep.subr.bf16.mxu0 0
    %557 = vmatpush2.bf16.msra.mxu0 0
    %558 = vmatprep.subr.bf16.mxu0 0
    %559 = vmatpush2.bf16.msra.mxu0 0
    %560 = vmatprep.subr.bf16.mxu0 0
    %561 = vmatpush2.bf16.msra.mxu0 0
    %562 = vmatprep.subr.bf16.mxu0 0
    %563 = vmatpush2.bf16.msra.mxu0 0
    %564 = vmatprep.mubr.bf16.mxu0 0
    %565 = vmatmul.mubr.bf16.gmra.mxu0 %v370
    %v566 = vpop.f32.mrf.mxu0
    %v567 = vadd.f32 0.0, %v566
    %v568 = vpop.f32.mrf.mxu0
    %v569 = vadd.f32 0.0, %v568
    %v570 = vpop.f32.mrf.mxu0
    %v571 = vadd.f32 0.0, %v570
    %v572 = vpop.f32.mrf.mxu0
    %v573 = vadd.f32 0.0, %v572
    %574 = vmatprep.mubr.bf16.mxu0 0
    %575 = vmatmul.mubr.bf16.gmra.mxu0 %v371
    %v576 = vpop.f32.mrf.mxu0
    %v577 = vadd.f32 0.0, %v576
    %v578 = vpop.f32.mrf.mxu0
    %v579 = vadd.f32 0.0, %v578
    %v580 = vpop.f32.mrf.mxu0
    %v581 = vadd.f32 0.0, %v580
    %v582 = vpop.f32.mrf.mxu0
    %v583 = vadd.f32 0.0, %v582
    %584 = vdwg.mxu0
    %585 = vmatprep.subr.bf16.mxu0 0
    %586 = vmatpush1.bf16.msra.mxu0 %v507
    %587 = vmatprep.subr.bf16.mxu0 0
    %588 = vmatpush1.bf16.msra.mxu0 %v504
    %589 = vmatprep.subr.bf16.mxu0 0
    %590 = vmatpush1.bf16.msra.mxu0 %v501
    %591 = vmatprep.subr.bf16.mxu0 0
    %592 = vmatpush1.bf16.msra.mxu0 %v498
    %593 = vmatprep.subr.bf16.mxu0 0
    %594 = vmatpush1.bf16.msra.mxu0 %v495
    %595 = vmatprep.subr.bf16.mxu0 0
    %596 = vmatpush1.bf16.msra.mxu0 %v492
    %597 = vmatprep.subr.bf16.mxu0 0
    %598 = vmatpush1.bf16.msra.mxu0 %v489
    %599 = vmatprep.subr.bf16.mxu0 0
    %600 = vmatpush1.bf16.msra.mxu0 %v486
    %601 = vmatprep.subr.bf16.mxu0 0
    %602 = vmatpush2.bf16.msra.mxu0 0
    %603 = vmatprep.subr.bf16.mxu0 0
    %604 = vmatpush2.bf16.msra.mxu0 0
    %605 = vmatprep.subr.bf16.mxu0 0
    %606 = vmatpush2.bf16.msra.mxu0 0
    %607 = vmatprep.subr.bf16.mxu0 0
    %608 = vmatpush2.bf16.msra.mxu0 0
    %609 = vmatprep.subr.bf16.mxu0 0
    %610 = vmatpush2.bf16.msra.mxu0 0
    %611 = vmatprep.subr.bf16.mxu0 0
    %612 = vmatpush2.bf16.msra.mxu0 0
    %613 = vmatprep.subr.bf16.mxu0 0
    %614 = vmatpush2.bf16.msra.mxu0 0
    %615 = vmatprep.subr.bf16.mxu0 0
    %616 = vmatpush2.bf16.msra.mxu0 0
    %617 = vmatprep.mubr.bf16.mxu0 0
    %618 = vmatmul.mubr.bf16.gmra.mxu0 %v370
    %v619 = vpop.f32.mrf.mxu0
    %v620 = vadd.f32 0.0, %v619
    %v621 = vpop.f32.mrf.mxu0
    %v622 = vpop.f32.mrf.mxu0
    %v623 = vadd.f32 0.0, %v622
    %v624 = vpop.f32.mrf.mxu0
    %625 = vmatprep.mubr.bf16.mxu0 0
    %626 = vmatmul.mubr.bf16.gmra.mxu0 %v371
    %v627 = vpop.f32.mrf.mxu0
    %v628 = vadd.f32 0.0, %v627
    %v629 = vpop.f32.mrf.mxu0
    %v630 = vpop.f32.mrf.mxu0
    %v631 = vadd.f32 0.0, %v630
    %v632 = vpop.f32.mrf.mxu0
    %633 = vdwg.mxu0
    %v634 = vpack.c.bf16 %v573, %v569
    %v635 = vmul.f32 %v567, %v287
    %v636 = vmul.f32 %v571, %v287
    %v637 = vpack.c.bf16 %v636, %v635
    %638 = vmatprep.subr.bf16.mxu0 0
    %639 = vmatpush1.bf16.xpose.msra.mxu0 0
    %640 = vmatprep.subr.bf16.mxu0 0
    %641 = vmatpush1.bf16.xpose.msra.mxu0 0
    %642 = vmatprep.subr.bf16.mxu0 0
    %643 = vmatpush1.bf16.xpose.msra.mxu0 0
    %644 = vmatprep.subr.bf16.mxu0 0
    %645 = vmatpush1.bf16.xpose.msra.mxu0 0
    %646 = vmatprep.subr.bf16.mxu0 0
    %647 = vmatpush1.bf16.xpose.msra.mxu0 0
    %648 = vmatprep.subr.bf16.mxu0 0
    %649 = vmatpush1.bf16.xpose.msra.mxu0 0
    %650 = vmatprep.subr.bf16.mxu0 0
    %651 = vmatpush1.bf16.xpose.msra.mxu0 0
    %652 = vmatprep.subr.bf16.mxu0 0
    %653 = vmatpush1.bf16.xpose.msra.mxu0 %v634
    %654 = vmatprep.subr.bf16.mxu0 0
    %655 = vmatpush2.bf16.xpose.msra.mxu0 0
    %656 = vmatprep.subr.bf16.mxu0 0
    %657 = vmatpush2.bf16.xpose.msra.mxu0 0
    %658 = vmatprep.subr.bf16.mxu0 0
    %659 = vmatpush2.bf16.xpose.msra.mxu0 0
    %660 = vmatprep.subr.bf16.mxu0 0
    %661 = vmatpush2.bf16.xpose.msra.mxu0 0
    %662 = vmatprep.subr.bf16.mxu0 0
    %663 = vmatpush2.bf16.xpose.msra.mxu0 0
    %664 = vmatprep.subr.bf16.mxu0 0
    %665 = vmatpush2.bf16.xpose.msra.mxu0 0
    %666 = vmatprep.subr.bf16.mxu0 0
    %667 = vmatpush2.bf16.xpose.msra.mxu0 0
    %668 = vmatprep.subr.bf16.mxu0 0
    %669 = vmatpush2.bf16.xpose.msra.mxu0 0
    %670 = vmatprep.mubr.bf16.mxu0 0
    %671 = vmatmul.mubr.bf16.gmra.mxu0 %v637
    %v672 = vpop.f32.mrf.mxu0
    %v673 = vadd.f32 %v281, %v672
    %v674 = vpop.f32.mrf.mxu0
    %v675 = vpop.f32.mrf.mxu0
    %v676 = vadd.f32 %v282, %v675
    %v677 = vpop.f32.mrf.mxu0
    %678 = vdwg.mxu0
    %vm679 = vcmask 130048
    %v680 = vsel %vm679, %v673, -inf
    %681 = vmax.xlane.f32.xlu0 %v680
    %v682 = vpop.xlane.xlu0 %681
    %v683 = vsel %vm679, %v676, -inf
    %684 = vmax.xlane.f32.xlu0 %v683
    %v685 = vpop.xlane.xlu0 %684
    %v686 = vsub.f32 %v673, %v682
    %v687 = vsub.f32 %v676, %v685
    %v688 = vmul.f32 %v686, 1.442695
    %v689 = vpow.pop %v688
    %v690 = vmul.f32 %v687, 1.442695
    %v691 = vpow.pop %v690
    %v692 = vsel %vm679, %v689, 0.0
    %693 = vadd.xlane.f32.xlu0 %v692
    %v694 = vpop.xlane.xlu0 %693
    %v695 = vsel %vm679, %v691, 0.0
    %696 = vadd.xlane.f32.xlu0 %v695
    %v697 = vpop.xlane.xlu0 %696
    %v698 = vrcp.pop %v694
    %v699 = vrcp.pop %v697
    %v700 = vmul.f32 %v689, %v698
    %v701 = vmul.f32 %v691, %v699
    %v702 = vmul.f32 %v620, %v287
    %v703 = vmul.f32 %v623, %v287
    %v704 = vpack.c.bf16 %v703, %v702
    %v705 = vpack.c.bf16 %v701, %v700
    %v706 = vmul.f32 %v567, %v292
    %v707 = vmul.f32 %v571, %v292
    %v708 = vpack.c.bf16 %v707, %v706
    %709 = vmatprep.subr.bf16.mxu0 0
    %710 = vmatpush1.bf16.xpose.msra.mxu0 0
    %711 = vmatprep.subr.bf16.mxu0 0
    %712 = vmatpush1.bf16.xpose.msra.mxu0 0
    %713 = vmatprep.subr.bf16.mxu0 0
    %714 = vmatpush1.bf16.xpose.msra.mxu0 0
    %715 = vmatprep.subr.bf16.mxu0 0
    %716 = vmatpush1.bf16.xpose.msra.mxu0 0
    %717 = vmatprep.subr.bf16.mxu0 0
    %718 = vmatpush1.bf16.xpose.msra.mxu0 0
    %719 = vmatprep.subr.bf16.mxu0 0
    %720 = vmatpush1.bf16.xpose.msra.mxu0 0
    %721 = vmatprep.subr.bf16.mxu0 0
    %722 = vmatpush1.bf16.xpose.msra.mxu0 0
    %723 = vmatprep.subr.bf16.mxu0 0
    %724 = vmatpush1.bf16.xpose.msra.mxu0 %v634
    %725 = vmatprep.subr.bf16.mxu0 0
    %726 = vmatpush2.bf16.xpose.msra.mxu0 0
    %727 = vmatprep.subr.bf16.mxu0 0
    %728 = vmatpush2.bf16.xpose.msra.mxu0 0
    %729 = vmatprep.subr.bf16.mxu0 0
    %730 = vmatpush2.bf16.xpose.msra.mxu0 0
    %731 = vmatprep.subr.bf16.mxu0 0
    %732 = vmatpush2.bf16.xpose.msra.mxu0 0
    %733 = vmatprep.subr.bf16.mxu0 0
    %734 = vmatpush2.bf16.xpose.msra.mxu0 0
    %735 = vmatprep.subr.bf16.mxu0 0
    %736 = vmatpush2.bf16.xpose.msra.mxu0 0
    %737 = vmatprep.subr.bf16.mxu0 0
    %738 = vmatpush2.bf16.xpose.msra.mxu0 0
    %739 = vmatprep.subr.bf16.mxu0 0
    %740 = vmatpush2.bf16.xpose.msra.mxu0 0
    %741 = vmatprep.mubr.bf16.mxu0 0
    %742 = vmatmul.mubr.bf16.gmra.mxu0 %v708
    %v743 = vpop.f32.mrf.mxu0
    %v744 = vadd.f32 %v281, %v743
    %v745 = vpop.f32.mrf.mxu0
    %v746 = vpop.f32.mrf.mxu0
    %v747 = vadd.f32 %v282, %v746
    %v748 = vpop.f32.mrf.mxu0
    %749 = vdwg.mxu0
    %v750 = vsel %vm679, %v744, -inf
    %751 = vmax.xlane.f32.xlu0 %v750
    %v752 = vpop.xlane.xlu0 %751
    %v753 = vsel %vm679, %v747, -inf
    %754 = vmax.xlane.f32.xlu0 %v753
    %v755 = vpop.xlane.xlu0 %754
    %v756 = vsub.f32 %v744, %v752
    %v757 = vsub.f32 %v747, %v755
    %v758 = vmul.f32 %v756, 1.442695
    %v759 = vpow.pop %v758
    %v760 = vmul.f32 %v757, 1.442695
    %v761 = vpow.pop %v760
    %v762 = vsel %vm679, %v759, 0.0
    %763 = vadd.xlane.f32.xlu0 %v762
    %v764 = vpop.xlane.xlu0 %763
    %v765 = vsel %vm679, %v761, 0.0
    %766 = vadd.xlane.f32.xlu0 %v765
    %v767 = vpop.xlane.xlu0 %766
    %v768 = vrcp.pop %v764
    %v769 = vrcp.pop %v767
    %v770 = vmul.f32 %v759, %v768
    %v771 = vmul.f32 %v761, %v769
    %v772 = vmul.f32 %v620, %v292
    %v773 = vmul.f32 %v623, %v292
    %v774 = vpack.c.bf16 %v773, %v772
    %v775 = vpack.c.bf16 %v771, %v770
    %v777 = vsel %vm679, %v775, 0
    %779 = vmatprep.subr.bf16.mxu0 0
    %780 = vmatpush1.bf16.msra.mxu0 0
    %781 = vmatprep.subr.bf16.mxu0 0
    %782 = vmatpush1.bf16.msra.mxu0 0
    %783 = vmatprep.subr.bf16.mxu0 0
    %784 = vmatpush1.bf16.msra.mxu0 0
    %785 = vmatprep.subr.bf16.mxu0 0
    %786 = vmatpush1.bf16.msra.mxu0 0
    %787 = vmatprep.subr.bf16.mxu0 0
    %788 = vmatpush1.bf16.msra.mxu0 0
    %789 = vmatprep.subr.bf16.mxu0 0
    %790 = vmatpush1.bf16.msra.mxu0 0
    %791 = vmatprep.subr.bf16.mxu0 0
    %792 = vmatpush1.bf16.msra.mxu0 0
    %793 = vmatprep.subr.bf16.mxu0 0
    %794 = vmatpush1.bf16.msra.mxu0 %v774
    %795 = vmatprep.subr.bf16.mxu0 0
    %796 = vmatpush2.bf16.msra.mxu0 0
    %797 = vmatprep.subr.bf16.mxu0 0
    %798 = vmatpush2.bf16.msra.mxu0 0
    %799 = vmatprep.subr.bf16.mxu0 0
    %800 = vmatpush2.bf16.msra.mxu0 0
    %801 = vmatprep.subr.bf16.mxu0 0
    %802 = vmatpush2.bf16.msra.mxu0 0
    %803 = vmatprep.subr.bf16.mxu0 0
    %804 = vmatpush2.bf16.msra.mxu0 0
    %805 = vmatprep.subr.bf16.mxu0 0
    %806 = vmatpush2.bf16.msra.mxu0 0
    %807 = vmatprep.subr.bf16.mxu0 0
    %808 = vmatpush2.bf16.msra.mxu0 0
    %809 = vmatprep.subr.bf16.mxu0 0
    %810 = vmatpush2.bf16.msra.mxu0 0
    %811 = vmatprep.mubr.bf16.mxu0 0
    %812 = vmatmul.mubr.bf16.gmra.mxu0 %v777
    %v813 = vpop.f32.mrf.mxu0
    %v814 = vadd.f32 0.0, %v813
    %v815 = vpop.f32.mrf.mxu0
    %v816 = vpop.f32.mrf.mxu0
    %v817 = vadd.f32 0.0, %v816
    %v818 = vpop.f32.mrf.mxu0
    %819 = vdwg.mxu0
    %v821 = vsel %vm679, %v705, 0
    %823 = vmatprep.subr.bf16.mxu0 0
    %824 = vmatpush1.bf16.msra.mxu0 0
    %825 = vmatprep.subr.bf16.mxu0 0
    %826 = vmatpush1.bf16.msra.mxu0 0
    %827 = vmatprep.subr.bf16.mxu0 0
    %828 = vmatpush1.bf16.msra.mxu0 0
    %829 = vmatprep.subr.bf16.mxu0 0
    %830 = vmatpush1.bf16.msra.mxu0 0
    %831 = vmatprep.subr.bf16.mxu0 0
    %832 = vmatpush1.bf16.msra.mxu0 0
    %833 = vmatprep.subr.bf16.mxu0 0
    %834 = vmatpush1.bf16.msra.mxu0 0
    %835 = vmatprep.subr.bf16.mxu0 0
    %836 = vmatpush1.bf16.msra.mxu0 0
    %837 = vmatprep.subr.bf16.mxu0 0
    %838 = vmatpush1.bf16.msra.mxu0 %v704
    %839 = vmatprep.subr.bf16.mxu0 0
    %840 = vmatpush2.bf16.msra.mxu0 0
    %841 = vmatprep.subr.bf16.mxu0 0
    %842 = vmatpush2.bf16.msra.mxu0 0
    %843 = vmatprep.subr.bf16.mxu0 0
    %844 = vmatpush2.bf16.msra.mxu0 0
    %845 = vmatprep.subr.bf16.mxu0 0
    %846 = vmatpush2.bf16.msra.mxu0 0
    %847 = vmatprep.subr.bf16.mxu0 0
    %848 = vmatpush2.bf16.msra.mxu0 0
    %849 = vmatprep.subr.bf16.mxu0 0
    %850 = vmatpush2.bf16.msra.mxu0 0
    %851 = vmatprep.subr.bf16.mxu0 0
    %852 = vmatpush2.bf16.msra.mxu0 0
    %853 = vmatprep.subr.bf16.mxu0 0
    %854 = vmatpush2.bf16.msra.mxu0 0
    %855 = vmatprep.mubr.bf16.mxu0 0
    %856 = vmatmul.mubr.bf16.gmra.mxu0 %v821
    %v857 = vpop.f32.mrf.mxu0
    %v858 = vadd.f32 %v814, %v857
    %v859 = vpop.f32.mrf.mxu0
    %v860 = vpop.f32.mrf.mxu0
    %v861 = vadd.f32 %v817, %v860
    %v862 = vpop.f32.mrf.mxu0
    %863 = vdwg.mxu0
    %v864 = vmul.f32 %v567, %v297
    %v865 = vmul.f32 %v571, %v297
    %v866 = vpack.c.bf16 %v865, %v864
    %867 = vmatprep.subr.bf16.mxu0 0
    %868 = vmatpush1.bf16.xpose.msra.mxu0 0
    %869 = vmatprep.subr.bf16.mxu0 0
    %870 = vmatpush1.bf16.xpose.msra.mxu0 0
    %871 = vmatprep.subr.bf16.mxu0 0
    %872 = vmatpush1.bf16.xpose.msra.mxu0 0
    %873 = vmatprep.subr.bf16.mxu0 0
    %874 = vmatpush1.bf16.xpose.msra.mxu0 0
    %875 = vmatprep.subr.bf16.mxu0 0
    %876 = vmatpush1.bf16.xpose.msra.mxu0 0
    %877 = vmatprep.subr.bf16.mxu0 0
    %878 = vmatpush1.bf16.xpose.msra.mxu0 0
    %879 = vmatprep.subr.bf16.mxu0 0
    %880 = vmatpush1.bf16.xpose.msra.mxu0 0
    %881 = vmatprep.subr.bf16.mxu0 0
    %882 = vmatpush1.bf16.xpose.msra.mxu0 %v634
    %883 = vmatprep.subr.bf16.mxu0 0
    %884 = vmatpush2.bf16.xpose.msra.mxu0 0
    %885 = vmatprep.subr.bf16.mxu0 0
    %886 = vmatpush2.bf16.xpose.msra.mxu0 0
    %887 = vmatprep.subr.bf16.mxu0 0
    %888 = vmatpush2.bf16.xpose.msra.mxu0 0
    %889 = vmatprep.subr.bf16.mxu0 0
    %890 = vmatpush2.bf16.xpose.msra.mxu0 0
    %891 = vmatprep.subr.bf16.mxu0 0
    %892 = vmatpush2.bf16.xpose.msra.mxu0 0
    %893 = vmatprep.subr.bf16.mxu0 0
    %894 = vmatpush2.bf16.xpose.msra.mxu0 0
    %895 = vmatprep.subr.bf16.mxu0 0
    %896 = vmatpush2.bf16.xpose.msra.mxu0 0
    %897 = vmatprep.subr.bf16.mxu0 0
    %898 = vmatpush2.bf16.xpose.msra.mxu0 0
    %899 = vmatprep.mubr.bf16.mxu0 0
    %900 = vmatmul.mubr.bf16.gmra.mxu0 %v866
    %v901 = vpop.f32.mrf.mxu0
    %v902 = vadd.f32 %v281, %v901
    %v903 = vpop.f32.mrf.mxu0
    %v904 = vpop.f32.mrf.mxu0
    %v905 = vadd.f32 %v282, %v904
    %v906 = vpop.f32.mrf.mxu0
    %907 = vdwg.mxu0
    %v908 = vsel %vm679, %v902, -inf
    %909 = vmax.xlane.f32.xlu0 %v908
    %v910 = vpop.xlane.xlu0 %909
    %v911 = vsel %vm679, %v905, -inf
    %912 = vmax.xlane.f32.xlu0 %v911
    %v913 = vpop.xlane.xlu0 %912
    %v914 = vsub.f32 %v902, %v910
    %v915 = vsub.f32 %v905, %v913
    %v916 = vmul.f32 %v914, 1.442695
    %v917 = vpow.pop %v916
    %v918 = vmul.f32 %v915, 1.442695
    %v919 = vpow.pop %v918
    %v920 = vsel %vm679, %v917, 0.0
    %921 = vadd.xlane.f32.xlu0 %v920
    %v922 = vpop.xlane.xlu0 %921
    %v923 = vsel %vm679, %v919, 0.0
    %924 = vadd.xlane.f32.xlu0 %v923
    %v925 = vpop.xlane.xlu0 %924
    %v926 = vrcp.pop %v922
    %v927 = vrcp.pop %v925
    %v928 = vmul.f32 %v917, %v926
    %v929 = vmul.f32 %v919, %v927
    %v930 = vmul.f32 %v620, %v297
    %v931 = vmul.f32 %v623, %v297
    %v932 = vpack.c.bf16 %v931, %v930
    %v933 = vpack.c.bf16 %v929, %v928
    %v935 = vsel %vm679, %v933, 0
    %937 = vmatprep.subr.bf16.mxu0 0
    %938 = vmatpush1.bf16.msra.mxu0 0
    %939 = vmatprep.subr.bf16.mxu0 0
    %940 = vmatpush1.bf16.msra.mxu0 0
    %941 = vmatprep.subr.bf16.mxu0 0
    %942 = vmatpush1.bf16.msra.mxu0 0
    %943 = vmatprep.subr.bf16.mxu0 0
    %944 = vmatpush1.bf16.msra.mxu0 0
    %945 = vmatprep.subr.bf16.mxu0 0
    %946 = vmatpush1.bf16.msra.mxu0 0
    %947 = vmatprep.subr.bf16.mxu0 0
    %948 = vmatpush1.bf16.msra.mxu0 0
    %949 = vmatprep.subr.bf16.mxu0 0
    %950 = vmatpush1.bf16.msra.mxu0 0
    %951 = vmatprep.subr.bf16.mxu0 0
    %952 = vmatpush1.bf16.msra.mxu0 %v932
    %953 = vmatprep.subr.bf16.mxu0 0
    %954 = vmatpush2.bf16.msra.mxu0 0
    %955 = vmatprep.subr.bf16.mxu0 0
    %956 = vmatpush2.bf16.msra.mxu0 0
    %957 = vmatprep.subr.bf16.mxu0 0
    %958 = vmatpush2.bf16.msra.mxu0 0
    %959 = vmatprep.subr.bf16.mxu0 0
    %960 = vmatpush2.bf16.msra.mxu0 0
    %961 = vmatprep.subr.bf16.mxu0 0
    %962 = vmatpush2.bf16.msra.mxu0 0
    %963 = vmatprep.subr.bf16.mxu0 0
    %964 = vmatpush2.bf16.msra.mxu0 0
    %965 = vmatprep.subr.bf16.mxu0 0
    %966 = vmatpush2.bf16.msra.mxu0 0
    %967 = vmatprep.subr.bf16.mxu0 0
    %968 = vmatpush2.bf16.msra.mxu0 0
    %969 = vmatprep.mubr.bf16.mxu0 0
    %970 = vmatmul.mubr.bf16.gmra.mxu0 %v935
    %v971 = vpop.f32.mrf.mxu0
    %v972 = vadd.f32 0.0, %v971
    %v973 = vpop.f32.mrf.mxu0
    %v974 = vpop.f32.mrf.mxu0
    %v975 = vadd.f32 0.0, %v974
    %v976 = vpop.f32.mrf.mxu0
    %977 = vdwg.mxu0
    %v978 = vadd.f32 %v858, %v972
    %v979 = vadd.f32 %v861, %v975
    %v980 = vmul.f32 %v567, %v302
    %v981 = vmul.f32 %v571, %v302
    %v982 = vpack.c.bf16 %v981, %v980
    %983 = vmatprep.subr.bf16.mxu0 0
    %984 = vmatpush1.bf16.xpose.msra.mxu0 0
    %985 = vmatprep.subr.bf16.mxu0 0
    %986 = vmatpush1.bf16.xpose.msra.mxu0 0
    %987 = vmatprep.subr.bf16.mxu0 0
    %988 = vmatpush1.bf16.xpose.msra.mxu0 0
    %989 = vmatprep.subr.bf16.mxu0 0
    %990 = vmatpush1.bf16.xpose.msra.mxu0 0
    %991 = vmatprep.subr.bf16.mxu0 0
    %992 = vmatpush1.bf16.xpose.msra.mxu0 0
    %993 = vmatprep.subr.bf16.mxu0 0
    %994 = vmatpush1.bf16.xpose.msra.mxu0 0
    %995 = vmatprep.subr.bf16.mxu0 0
    %996 = vmatpush1.bf16.xpose.msra.mxu0 0
    %997 = vmatprep.subr.bf16.mxu0 0
    %998 = vmatpush1.bf16.xpose.msra.mxu0 %v634
    %999 = vmatprep.subr.bf16.mxu0 0
    %1000 = vmatpush2.bf16.xpose.msra.mxu0 0
    %1001 = vmatprep.subr.bf16.mxu0 0
    %1002 = vmatpush2.bf16.xpose.msra.mxu0 0
    %1003 = vmatprep.subr.bf16.mxu0 0
    %1004 = vmatpush2.bf16.xpose.msra.mxu0 0
    %1005 = vmatprep.subr.bf16.mxu0 0
    %1006 = vmatpush2.bf16.xpose.msra.mxu0 0
    %1007 = vmatprep.subr.bf16.mxu0 0
    %1008 = vmatpush2.bf16.xpose.msra.mxu0 0
    %1009 = vmatprep.subr.bf16.mxu0 0
    %1010 = vmatpush2.bf16.xpose.msra.mxu0 0
    %1011 = vmatprep.subr.bf16.mxu0 0
    %1012 = vmatpush2.bf16.xpose.msra.mxu0 0
    %1013 = vmatprep.subr.bf16.mxu0 0
    %1014 = vmatpush2.bf16.xpose.msra.mxu0 0
    %1015 = vmatprep.mubr.bf16.mxu0 0
    %1016 = vmatmul.mubr.bf16.gmra.mxu0 %v982
    %v1017 = vpop.f32.mrf.mxu0
    %v1018 = vadd.f32 %v281, %v1017
    %v1019 = vpop.f32.mrf.mxu0
    %v1020 = vpop.f32.mrf.mxu0
    %v1021 = vadd.f32 %v282, %v1020
    %v1022 = vpop.f32.mrf.mxu0
    %1023 = vdwg.mxu0
    %v1024 = vsel %vm679, %v1018, -inf
    %1025 = vmax.xlane.f32.xlu0 %v1024
    %v1026 = vpop.xlane.xlu0 %1025
    %v1027 = vsel %vm679, %v1021, -inf
    %1028 = vmax.xlane.f32.xlu0 %v1027
    %v1029 = vpop.xlane.xlu0 %1028
    %v1030 = vsub.f32 %v1018, %v1026
    %v1031 = vsub.f32 %v1021, %v1029
    %v1032 = vmul.f32 %v1030, 1.442695
    %v1033 = vpow.pop %v1032
    %v1034 = vmul.f32 %v1031, 1.442695
    %v1035 = vpow.pop %v1034
    %v1036 = vsel %vm679, %v1033, 0.0
    %1037 = vadd.xlane.f32.xlu0 %v1036
    %v1038 = vpop.xlane.xlu0 %1037
    %v1039 = vsel %vm679, %v1035, 0.0
    %1040 = vadd.xlane.f32.xlu0 %v1039
    %v1041 = vpop.xlane.xlu0 %1040
    %v1042 = vrcp.pop %v1038
    %v1043 = vrcp.pop %v1041
    %v1044 = vmul.f32 %v1033, %v1042
    %v1045 = vmul.f32 %v1035, %v1043
    %v1046 = vmul.f32 %v620, %v302
    %v1047 = vmul.f32 %v623, %v302
    %v1048 = vpack.c.bf16 %v1047, %v1046
    %v1049 = vpack.c.bf16 %v1045, %v1044
    %v1051 = vsel %vm679, %v1049, 0
    %1053 = vmatprep.subr.bf16.mxu0 0
    %1054 = vmatpush1.bf16.msra.mxu0 0
    %1055 = vmatprep.subr.bf16.mxu0 0
    %1056 = vmatpush1.bf16.msra.mxu0 0
    %1057 = vmatprep.subr.bf16.mxu0 0
    %1058 = vmatpush1.bf16.msra.mxu0 0
    %1059 = vmatprep.subr.bf16.mxu0 0
    %1060 = vmatpush1.bf16.msra.mxu0 0
    %1061 = vmatprep.subr.bf16.mxu0 0
    %1062 = vmatpush1.bf16.msra.mxu0 0
    %1063 = vmatprep.subr.bf16.mxu0 0
    %1064 = vmatpush1.bf16.msra.mxu0 0
    %1065 = vmatprep.subr.bf16.mxu0 0
    %1066 = vmatpush1.bf16.msra.mxu0 0
    %1067 = vmatprep.subr.bf16.mxu0 0
    %1068 = vmatpush1.bf16.msra.mxu0 %v1048
    %1069 = vmatprep.subr.bf16.mxu0 0
    %1070 = vmatpush2.bf16.msra.mxu0 0
    %1071 = vmatprep.subr.bf16.mxu0 0
    %1072 = vmatpush2.bf16.msra.mxu0 0
    %1073 = vmatprep.subr.bf16.mxu0 0
    %1074 = vmatpush2.bf16.msra.mxu0 0
    %1075 = vmatprep.subr.bf16.mxu0 0
    %1076 = vmatpush2.bf16.msra.mxu0 0
    %1077 = vmatprep.subr.bf16.mxu0 0
    %1078 = vmatpush2.bf16.msra.mxu0 0
    %1079 = vmatprep.subr.bf16.mxu0 0
    %1080 = vmatpush2.bf16.msra.mxu0 0
    %1081 = vmatprep.subr.bf16.mxu0 0
    %1082 = vmatpush2.bf16.msra.mxu0 0
    %1083 = vmatprep.subr.bf16.mxu0 0
    %1084 = vmatpush2.bf16.msra.mxu0 0
    %1085 = vmatprep.mubr.bf16.mxu0 0
    %1086 = vmatmul.mubr.bf16.gmra.mxu0 %v1051
    %v1087 = vpop.f32.mrf.mxu0
    %v1088 = vadd.f32 0.0, %v1087
    %v1089 = vpop.f32.mrf.mxu0
    %v1090 = vpop.f32.mrf.mxu0
    %v1091 = vadd.f32 0.0, %v1090
    %v1092 = vpop.f32.mrf.mxu0
    %1093 = vdwg.mxu0
    %v1094 = vadd.f32 %v978, %v1088
    %v1095 = vadd.f32 %v979, %v1091
    %v1096 = vpack.c.bf16 %v583, %v579
    %v1097 = vmul.f32 %v577, %v287
    %v1098 = vmul.f32 %v581, %v287
    %v1099 = vpack.c.bf16 %v1098, %v1097
    %1100 = vmatprep.subr.bf16.mxu0 0
    %1101 = vmatpush1.bf16.xpose.msra.mxu0 0
    %1102 = vmatprep.subr.bf16.mxu0 0
    %1103 = vmatpush1.bf16.xpose.msra.mxu0 0
    %1104 = vmatprep.subr.bf16.mxu0 0
    %1105 = vmatpush1.bf16.xpose.msra.mxu0 0
    %1106 = vmatprep.subr.bf16.mxu0 0
    %1107 = vmatpush1.bf16.xpose.msra.mxu0 0
    %1108 = vmatprep.subr.bf16.mxu0 0
    %1109 = vmatpush1.bf16.xpose.msra.mxu0 0
    %1110 = vmatprep.subr.bf16.mxu0 0
    %1111 = vmatpush1.bf16.xpose.msra.mxu0 0
    %1112 = vmatprep.subr.bf16.mxu0 0
    %1113 = vmatpush1.bf16.xpose.msra.mxu0 0
    %1114 = vmatprep.subr.bf16.mxu0 0
    %1115 = vmatpush1.bf16.xpose.msra.mxu0 %v1096
    %1116 = vmatprep.subr.bf16.mxu0 0
    %1117 = vmatpush2.bf16.xpose.msra.mxu0 0
    %1118 = vmatprep.subr.bf16.mxu0 0
    %1119 = vmatpush2.bf16.xpose.msra.mxu0 0
    %1120 = vmatprep.subr.bf16.mxu0 0
    %1121 = vmatpush2.bf16.xpose.msra.mxu0 0
    %1122 = vmatprep.subr.bf16.mxu0 0
    %1123 = vmatpush2.bf16.xpose.msra.mxu0 0
    %1124 = vmatprep.subr.bf16.mxu0 0
    %1125 = vmatpush2.bf16.xpose.msra.mxu0 0
    %1126 = vmatprep.subr.bf16.mxu0 0
    %1127 = vmatpush2.bf16.xpose.msra.mxu0 0
    %1128 = vmatprep.subr.bf16.mxu0 0
    %1129 = vmatpush2.bf16.xpose.msra.mxu0 0
    %1130 = vmatprep.subr.bf16.mxu0 0
    %1131 = vmatpush2.bf16.xpose.msra.mxu0 0
    %1132 = vmatprep.mubr.bf16.mxu0 0
    %1133 = vmatmul.mubr.bf16.gmra.mxu0 %v1099
    %v1134 = vpop.f32.mrf.mxu0
    %v1135 = vadd.f32 %v281, %v1134
    %v1136 = vpop.f32.mrf.mxu0
    %v1137 = vpop.f32.mrf.mxu0
    %v1138 = vadd.f32 %v282, %v1137
    %v1139 = vpop.f32.mrf.mxu0
    %1140 = vdwg.mxu0
    %v1141 = vsel %vm679, %v1135, -inf
    %1142 = vmax.xlane.f32.xlu0 %v1141
    %v1143 = vpop.xlane.xlu0 %1142
    %v1144 = vsel %vm679, %v1138, -inf
    %1145 = vmax.xlane.f32.xlu0 %v1144
    %v1146 = vpop.xlane.xlu0 %1145
    %v1147 = vsub.f32 %v1135, %v1143
    %v1148 = vsub.f32 %v1138, %v1146
    %v1149 = vmul.f32 %v1147, 1.442695
    %v1150 = vpow.pop %v1149
    %v1151 = vmul.f32 %v1148, 1.442695
    %v1152 = vpow.pop %v1151
    %v1153 = vsel %vm679, %v1150, 0.0
    %1154 = vadd.xlane.f32.xlu0 %v1153
    %v1155 = vpop.xlane.xlu0 %1154
    %v1156 = vsel %vm679, %v1152, 0.0
    %1157 = vadd.xlane.f32.xlu0 %v1156
    %v1158 = vpop.xlane.xlu0 %1157
    %v1159 = vrcp.pop %v1155
    %v1160 = vrcp.pop %v1158
    %v1161 = vmul.f32 %v1150, %v1159
    %v1162 = vmul.f32 %v1152, %v1160
    %v1163 = vmul.f32 %v628, %v287
    %v1164 = vmul.f32 %v631, %v287
    %v1165 = vpack.c.bf16 %v1164, %v1163
    %v1166 = vpack.c.bf16 %v1162, %v1161
    %v1167 = vmul.f32 %v577, %v292
    %v1168 = vmul.f32 %v581, %v292
    %v1169 = vpack.c.bf16 %v1168, %v1167
    %1170 = vmatprep.subr.bf16.mxu0 0
    %1171 = vmatpush1.bf16.xpose.msra.mxu0 0
    %1172 = vmatprep.subr.bf16.mxu0 0
    %1173 = vmatpush1.bf16.xpose.msra.mxu0 0
    %1174 = vmatprep.subr.bf16.mxu0 0
    %1175 = vmatpush1.bf16.xpose.msra.mxu0 0
    %1176 = vmatprep.subr.bf16.mxu0 0
    %1177 = vmatpush1.bf16.xpose.msra.mxu0 0
    %1178 = vmatprep.subr.bf16.mxu0 0
    %1179 = vmatpush1.bf16.xpose.msra.mxu0 0
    %1180 = vmatprep.subr.bf16.mxu0 0
    %1181 = vmatpush1.bf16.xpose.msra.mxu0 0
    %1182 = vmatprep.subr.bf16.mxu0 0
    %1183 = vmatpush1.bf16.xpose.msra.mxu0 0
    %1184 = vmatprep.subr.bf16.mxu0 0
    %1185 = vmatpush1.bf16.xpose.msra.mxu0 %v1096
    %1186 = vmatprep.subr.bf16.mxu0 0
    %1187 = vmatpush2.bf16.xpose.msra.mxu0 0
    %1188 = vmatprep.subr.bf16.mxu0 0
    %1189 = vmatpush2.bf16.xpose.msra.mxu0 0
    %1190 = vmatprep.subr.bf16.mxu0 0
    %1191 = vmatpush2.bf16.xpose.msra.mxu0 0
    %1192 = vmatprep.subr.bf16.mxu0 0
    %1193 = vmatpush2.bf16.xpose.msra.mxu0 0
    %1194 = vmatprep.subr.bf16.mxu0 0
    %1195 = vmatpush2.bf16.xpose.msra.mxu0 0
    %1196 = vmatprep.subr.bf16.mxu0 0
    %1197 = vmatpush2.bf16.xpose.msra.mxu0 0
    %1198 = vmatprep.subr.bf16.mxu0 0
    %1199 = vmatpush2.bf16.xpose.msra.mxu0 0
    %1200 = vmatprep.subr.bf16.mxu0 0
    %1201 = vmatpush2.bf16.xpose.msra.mxu0 0
    %1202 = vmatprep.mubr.bf16.mxu0 0
    %1203 = vmatmul.mubr.bf16.gmra.mxu0 %v1169
    %v1204 = vpop.f32.mrf.mxu0
    %v1205 = vadd.f32 %v281, %v1204
    %v1206 = vpop.f32.mrf.mxu0
    %v1207 = vpop.f32.mrf.mxu0
    %v1208 = vadd.f32 %v282, %v1207
    %v1209 = vpop.f32.mrf.mxu0
    %1210 = vdwg.mxu0
    %v1211 = vsel %vm679, %v1205, -inf
    %1212 = vmax.xlane.f32.xlu0 %v1211
    %v1213 = vpop.xlane.xlu0 %1212
    %v1214 = vsel %vm679, %v1208, -inf
    %1215 = vmax.xlane.f32.xlu0 %v1214
    %v1216 = vpop.xlane.xlu0 %1215
    %v1217 = vsub.f32 %v1205, %v1213
    %v1218 = vsub.f32 %v1208, %v1216
    %v1219 = vmul.f32 %v1217, 1.442695
    %v1220 = vpow.pop %v1219
    %v1221 = vmul.f32 %v1218, 1.442695
    %v1222 = vpow.pop %v1221
    %v1223 = vsel %vm679, %v1220, 0.0
    %1224 = vadd.xlane.f32.xlu0 %v1223
    %v1225 = vpop.xlane.xlu0 %1224
    %v1226 = vsel %vm679, %v1222, 0.0
    %1227 = vadd.xlane.f32.xlu0 %v1226
    %v1228 = vpop.xlane.xlu0 %1227
    %v1229 = vrcp.pop %v1225
    %v1230 = vrcp.pop %v1228
    %v1231 = vmul.f32 %v1220, %v1229
    %v1232 = vmul.f32 %v1222, %v1230
    %v1233 = vmul.f32 %v628, %v292
    %v1234 = vmul.f32 %v631, %v292
    %v1235 = vpack.c.bf16 %v1234, %v1233
    %v1236 = vpack.c.bf16 %v1232, %v1231
    %v1238 = vsel %vm679, %v1236, 0
    %1240 = vmatprep.subr.bf16.mxu0 0
    %1241 = vmatpush1.bf16.msra.mxu0 0
    %1242 = vmatprep.subr.bf16.mxu0 0
    %1243 = vmatpush1.bf16.msra.mxu0 0
    %1244 = vmatprep.subr.bf16.mxu0 0
    %1245 = vmatpush1.bf16.msra.mxu0 0
    %1246 = vmatprep.subr.bf16.mxu0 0
    %1247 = vmatpush1.bf16.msra.mxu0 0
    %1248 = vmatprep.subr.bf16.mxu0 0
    %1249 = vmatpush1.bf16.msra.mxu0 0
    %1250 = vmatprep.subr.bf16.mxu0 0
    %1251 = vmatpush1.bf16.msra.mxu0 0
    %1252 = vmatprep.subr.bf16.mxu0 0
    %1253 = vmatpush1.bf16.msra.mxu0 0
    %1254 = vmatprep.subr.bf16.mxu0 0
    %1255 = vmatpush1.bf16.msra.mxu0 %v1235
    %1256 = vmatprep.subr.bf16.mxu0 0
    %1257 = vmatpush2.bf16.msra.mxu0 0
    %1258 = vmatprep.subr.bf16.mxu0 0
    %1259 = vmatpush2.bf16.msra.mxu0 0
    %1260 = vmatprep.subr.bf16.mxu0 0
    %1261 = vmatpush2.bf16.msra.mxu0 0
    %1262 = vmatprep.subr.bf16.mxu0 0
    %1263 = vmatpush2.bf16.msra.mxu0 0
    %1264 = vmatprep.subr.bf16.mxu0 0
    %1265 = vmatpush2.bf16.msra.mxu0 0
    %1266 = vmatprep.subr.bf16.mxu0 0
    %1267 = vmatpush2.bf16.msra.mxu0 0
    %1268 = vmatprep.subr.bf16.mxu0 0
    %1269 = vmatpush2.bf16.msra.mxu0 0
    %1270 = vmatprep.subr.bf16.mxu0 0
    %1271 = vmatpush2.bf16.msra.mxu0 0
    %1272 = vmatprep.mubr.bf16.mxu0 0
    %1273 = vmatmul.mubr.bf16.gmra.mxu0 %v1238
    %v1274 = vpop.f32.mrf.mxu0
    %v1275 = vadd.f32 0.0, %v1274
    %v1276 = vpop.f32.mrf.mxu0
    %v1277 = vpop.f32.mrf.mxu0
    %v1278 = vadd.f32 0.0, %v1277
    %v1279 = vpop.f32.mrf.mxu0
    %1280 = vdwg.mxu0
    %v1282 = vsel %vm679, %v1166, 0
    %1284 = vmatprep.subr.bf16.mxu0 0
    %1285 = vmatpush1.bf16.msra.mxu0 0
    %1286 = vmatprep.subr.bf16.mxu0 0
    %1287 = vmatpush1.bf16.msra.mxu0 0
    %1288 = vmatprep.subr.bf16.mxu0 0
    %1289 = vmatpush1.bf16.msra.mxu0 0
    %1290 = vmatprep.subr.bf16.mxu0 0
    %1291 = vmatpush1.bf16.msra.mxu0 0
    %1292 = vmatprep.subr.bf16.mxu0 0
    %1293 = vmatpush1.bf16.msra.mxu0 0
    %1294 = vmatprep.subr.bf16.mxu0 0
    %1295 = vmatpush1.bf16.msra.mxu0 0
    %1296 = vmatprep.subr.bf16.mxu0 0
    %1297 = vmatpush1.bf16.msra.mxu0 0
    %1298 = vmatprep.subr.bf16.mxu0 0
    %1299 = vmatpush1.bf16.msra.mxu0 %v1165
    %1300 = vmatprep.subr.bf16.mxu0 0
    %1301 = vmatpush2.bf16.msra.mxu0 0
    %1302 = vmatprep.subr.bf16.mxu0 0
    %1303 = vmatpush2.bf16.msra.mxu0 0
    %1304 = vmatprep.subr.bf16.mxu0 0
    %1305 = vmatpush2.bf16.msra.mxu0 0
    %1306 = vmatprep.subr.bf16.mxu0 0
    %1307 = vmatpush2.bf16.msra.mxu0 0
    %1308 = vmatprep.subr.bf16.mxu0 0
    %1309 = vmatpush2.bf16.msra.mxu0 0
    %1310 = vmatprep.subr.bf16.mxu0 0
    %1311 = vmatpush2.bf16.msra.mxu0 0
    %1312 = vmatprep.subr.bf16.mxu0 0
    %1313 = vmatpush2.bf16.msra.mxu0 0
    %1314 = vmatprep.subr.bf16.mxu0 0
    %1315 = vmatpush2.bf16.msra.mxu0 0
    %1316 = vmatprep.mubr.bf16.mxu0 0
    %1317 = vmatmul.mubr.bf16.gmra.mxu0 %v1282
    %v1318 = vpop.f32.mrf.mxu0
    %v1319 = vadd.f32 %v1275, %v1318
    %v1320 = vpop.f32.mrf.mxu0
    %v1321 = vpop.f32.mrf.mxu0
    %v1322 = vadd.f32 %v1278, %v1321
    %v1323 = vpop.f32.mrf.mxu0
    %1324 = vdwg.mxu0
    %v1325 = vmul.f32 %v577, %v297
    %v1326 = vmul.f32 %v581, %v297
    %v1327 = vpack.c.bf16 %v1326, %v1325
    %1328 = vmatprep.subr.bf16.mxu0 0
    %1329 = vmatpush1.bf16.xpose.msra.mxu0 0
    %1330 = vmatprep.subr.bf16.mxu0 0
    %1331 = vmatpush1.bf16.xpose.msra.mxu0 0
    %1332 = vmatprep.subr.bf16.mxu0 0
    %1333 = vmatpush1.bf16.xpose.msra.mxu0 0
    %1334 = vmatprep.subr.bf16.mxu0 0
    %1335 = vmatpush1.bf16.xpose.msra.mxu0 0
    %1336 = vmatprep.subr.bf16.mxu0 0
    %1337 = vmatpush1.bf16.xpose.msra.mxu0 0
    %1338 = vmatprep.subr.bf16.mxu0 0
    %1339 = vmatpush1.bf16.xpose.msra.mxu0 0
    %1340 = vmatprep.subr.bf16.mxu0 0
    %1341 = vmatpush1.bf16.xpose.msra.mxu0 0
    %1342 = vmatprep.subr.bf16.mxu0 0
    %1343 = vmatpush1.bf16.xpose.msra.mxu0 %v1096
    %1344 = vmatprep.subr.bf16.mxu0 0
    %1345 = vmatpush2.bf16.xpose.msra.mxu0 0
    %1346 = vmatprep.subr.bf16.mxu0 0
    %1347 = vmatpush2.bf16.xpose.msra.mxu0 0
    %1348 = vmatprep.subr.bf16.mxu0 0
    %1349 = vmatpush2.bf16.xpose.msra.mxu0 0
    %1350 = vmatprep.subr.bf16.mxu0 0
    %1351 = vmatpush2.bf16.xpose.msra.mxu0 0
    %1352 = vmatprep.subr.bf16.mxu0 0
    %1353 = vmatpush2.bf16.xpose.msra.mxu0 0
    %1354 = vmatprep.subr.bf16.mxu0 0
    %1355 = vmatpush2.bf16.xpose.msra.mxu0 0
    %1356 = vmatprep.subr.bf16.mxu0 0
    %1357 = vmatpush2.bf16.xpose.msra.mxu0 0
    %1358 = vmatprep.subr.bf16.mxu0 0
    %1359 = vmatpush2.bf16.xpose.msra.mxu0 0
    %1360 = vmatprep.mubr.bf16.mxu0 0
    %1361 = vmatmul.mubr.bf16.gmra.mxu0 %v1327
    %v1362 = vpop.f32.mrf.mxu0
    %v1363 = vadd.f32 %v281, %v1362
    %v1364 = vpop.f32.mrf.mxu0
    %v1365 = vpop.f32.mrf.mxu0
    %v1366 = vadd.f32 %v282, %v1365
    %v1367 = vpop.f32.mrf.mxu0
    %1368 = vdwg.mxu0
    %v1369 = vsel %vm679, %v1363, -inf
    %1370 = vmax.xlane.f32.xlu0 %v1369
    %v1371 = vpop.xlane.xlu0 %1370
    %v1372 = vsel %vm679, %v1366, -inf
    %1373 = vmax.xlane.f32.xlu0 %v1372
    %v1374 = vpop.xlane.xlu0 %1373
    %v1375 = vsub.f32 %v1363, %v1371
    %v1376 = vsub.f32 %v1366, %v1374
    %v1377 = vmul.f32 %v1375, 1.442695
    %v1378 = vpow.pop %v1377
    %v1379 = vmul.f32 %v1376, 1.442695
    %v1380 = vpow.pop %v1379
    %v1381 = vsel %vm679, %v1378, 0.0
    %1382 = vadd.xlane.f32.xlu0 %v1381
    %v1383 = vpop.xlane.xlu0 %1382
    %v1384 = vsel %vm679, %v1380, 0.0
    %1385 = vadd.xlane.f32.xlu0 %v1384
    %v1386 = vpop.xlane.xlu0 %1385
    %v1387 = vrcp.pop %v1383
    %v1388 = vrcp.pop %v1386
    %v1389 = vmul.f32 %v1378, %v1387
    %v1390 = vmul.f32 %v1380, %v1388
    %v1391 = vmul.f32 %v628, %v297
    %v1392 = vmul.f32 %v631, %v297
    %v1393 = vpack.c.bf16 %v1392, %v1391
    %v1394 = vpack.c.bf16 %v1390, %v1389
    %v1396 = vsel %vm679, %v1394, 0
    %1398 = vmatprep.subr.bf16.mxu0 0
    %1399 = vmatpush1.bf16.msra.mxu0 0
    %1400 = vmatprep.subr.bf16.mxu0 0
    %1401 = vmatpush1.bf16.msra.mxu0 0
    %1402 = vmatprep.subr.bf16.mxu0 0
    %1403 = vmatpush1.bf16.msra.mxu0 0
    %1404 = vmatprep.subr.bf16.mxu0 0
    %1405 = vmatpush1.bf16.msra.mxu0 0
    %1406 = vmatprep.subr.bf16.mxu0 0
    %1407 = vmatpush1.bf16.msra.mxu0 0
    %1408 = vmatprep.subr.bf16.mxu0 0
    %1409 = vmatpush1.bf16.msra.mxu0 0
    %1410 = vmatprep.subr.bf16.mxu0 0
    %1411 = vmatpush1.bf16.msra.mxu0 0
    %1412 = vmatprep.subr.bf16.mxu0 0
    %1413 = vmatpush1.bf16.msra.mxu0 %v1393
    %1414 = vmatprep.subr.bf16.mxu0 0
    %1415 = vmatpush2.bf16.msra.mxu0 0
    %1416 = vmatprep.subr.bf16.mxu0 0
    %1417 = vmatpush2.bf16.msra.mxu0 0
    %1418 = vmatprep.subr.bf16.mxu0 0
    %1419 = vmatpush2.bf16.msra.mxu0 0
    %1420 = vmatprep.subr.bf16.mxu0 0
    %1421 = vmatpush2.bf16.msra.mxu0 0
    %1422 = vmatprep.subr.bf16.mxu0 0
    %1423 = vmatpush2.bf16.msra.mxu0 0
    %1424 = vmatprep.subr.bf16.mxu0 0
    %1425 = vmatpush2.bf16.msra.mxu0 0
    %1426 = vmatprep.subr.bf16.mxu0 0
    %1427 = vmatpush2.bf16.msra.mxu0 0
    %1428 = vmatprep.subr.bf16.mxu0 0
    %1429 = vmatpush2.bf16.msra.mxu0 0
    %1430 = vmatprep.mubr.bf16.mxu0 0
    %1431 = vmatmul.mubr.bf16.gmra.mxu0 %v1396
    %v1432 = vpop.f32.mrf.mxu0
    %v1433 = vadd.f32 0.0, %v1432
    %v1434 = vpop.f32.mrf.mxu0
    %v1435 = vpop.f32.mrf.mxu0
    %v1436 = vadd.f32 0.0, %v1435
    %v1437 = vpop.f32.mrf.mxu0
    %1438 = vdwg.mxu0
    %v1439 = vadd.f32 %v1319, %v1433
    %v1440 = vadd.f32 %v1322, %v1436
    %v1441 = vmul.f32 %v577, %v302
    %v1442 = vmul.f32 %v581, %v302
    %v1443 = vpack.c.bf16 %v1442, %v1441
    %1444 = vmatprep.subr.bf16.mxu0 0
    %1445 = vmatpush1.bf16.xpose.msra.mxu0 0
    %1446 = vmatprep.subr.bf16.mxu0 0
    %1447 = vmatpush1.bf16.xpose.msra.mxu0 0
    %1448 = vmatprep.subr.bf16.mxu0 0
    %1449 = vmatpush1.bf16.xpose.msra.mxu0 0
    %1450 = vmatprep.subr.bf16.mxu0 0
    %1451 = vmatpush1.bf16.xpose.msra.mxu0 0
    %1452 = vmatprep.subr.bf16.mxu0 0
    %1453 = vmatpush1.bf16.xpose.msra.mxu0 0
    %1454 = vmatprep.subr.bf16.mxu0 0
    %1455 = vmatpush1.bf16.xpose.msra.mxu0 0
    %1456 = vmatprep.subr.bf16.mxu0 0
    %1457 = vmatpush1.bf16.xpose.msra.mxu0 0
    %1458 = vmatprep.subr.bf16.mxu0 0
    %1459 = vmatpush1.bf16.xpose.msra.mxu0 %v1096
    %1460 = vmatprep.subr.bf16.mxu0 0
    %1461 = vmatpush2.bf16.xpose.msra.mxu0 0
    %1462 = vmatprep.subr.bf16.mxu0 0
    %1463 = vmatpush2.bf16.xpose.msra.mxu0 0
    %1464 = vmatprep.subr.bf16.mxu0 0
    %1465 = vmatpush2.bf16.xpose.msra.mxu0 0
    %1466 = vmatprep.subr.bf16.mxu0 0
    %1467 = vmatpush2.bf16.xpose.msra.mxu0 0
    %1468 = vmatprep.subr.bf16.mxu0 0
    %1469 = vmatpush2.bf16.xpose.msra.mxu0 0
    %1470 = vmatprep.subr.bf16.mxu0 0
    %1471 = vmatpush2.bf16.xpose.msra.mxu0 0
    %1472 = vmatprep.subr.bf16.mxu0 0
    %1473 = vmatpush2.bf16.xpose.msra.mxu0 0
    %1474 = vmatprep.subr.bf16.mxu0 0
    %1475 = vmatpush2.bf16.xpose.msra.mxu0 0
    %1476 = vmatprep.mubr.bf16.mxu0 0
    %1477 = vmatmul.mubr.bf16.gmra.mxu0 %v1443
    %v1478 = vpop.f32.mrf.mxu0
    %v1479 = vadd.f32 %v281, %v1478
    %v1480 = vpop.f32.mrf.mxu0
    %v1481 = vpop.f32.mrf.mxu0
    %v1482 = vadd.f32 %v282, %v1481
    %v1483 = vpop.f32.mrf.mxu0
    %1484 = vdwg.mxu0
    %v1485 = vsel %vm679, %v1479, -inf
    %1486 = vmax.xlane.f32.xlu0 %v1485
    %v1487 = vpop.xlane.xlu0 %1486
    %v1488 = vsel %vm679, %v1482, -inf
    %1489 = vmax.xlane.f32.xlu0 %v1488
    %v1490 = vpop.xlane.xlu0 %1489
    %v1491 = vsub.f32 %v1479, %v1487
    %v1492 = vsub.f32 %v1482, %v1490
    %v1493 = vmul.f32 %v1491, 1.442695
    %v1494 = vpow.pop %v1493
    %v1495 = vmul.f32 %v1492, 1.442695
    %v1496 = vpow.pop %v1495
    %v1497 = vsel %vm679, %v1494, 0.0
    %1498 = vadd.xlane.f32.xlu0 %v1497
    %v1499 = vpop.xlane.xlu0 %1498
    %v1500 = vsel %vm679, %v1496, 0.0
    %1501 = vadd.xlane.f32.xlu0 %v1500
    %v1502 = vpop.xlane.xlu0 %1501
    %v1503 = vrcp.pop %v1499
    %v1504 = vrcp.pop %v1502
    %v1505 = vmul.f32 %v1494, %v1503
    %v1506 = vmul.f32 %v1496, %v1504
    %v1507 = vmul.f32 %v628, %v302
    %v1508 = vmul.f32 %v631, %v302
    %v1509 = vpack.c.bf16 %v1508, %v1507
    %v1510 = vpack.c.bf16 %v1506, %v1505
    %v1512 = vsel %vm679, %v1510, 0
    %1514 = vmatprep.subr.bf16.mxu0 0
    %1515 = vmatpush1.bf16.msra.mxu0 0
    %1516 = vmatprep.subr.bf16.mxu0 0
    %1517 = vmatpush1.bf16.msra.mxu0 0
    %1518 = vmatprep.subr.bf16.mxu0 0
    %1519 = vmatpush1.bf16.msra.mxu0 0
    %1520 = vmatprep.subr.bf16.mxu0 0
    %1521 = vmatpush1.bf16.msra.mxu0 0
    %1522 = vmatprep.subr.bf16.mxu0 0
    %1523 = vmatpush1.bf16.msra.mxu0 0
    %1524 = vmatprep.subr.bf16.mxu0 0
    %1525 = vmatpush1.bf16.msra.mxu0 0
    %1526 = vmatprep.subr.bf16.mxu0 0
    %1527 = vmatpush1.bf16.msra.mxu0 0
    %1528 = vmatprep.subr.bf16.mxu0 0
    %1529 = vmatpush1.bf16.msra.mxu0 %v1509
    %1530 = vmatprep.subr.bf16.mxu0 0
    %1531 = vmatpush2.bf16.msra.mxu0 0
    %1532 = vmatprep.subr.bf16.mxu0 0
    %1533 = vmatpush2.bf16.msra.mxu0 0
    %1534 = vmatprep.subr.bf16.mxu0 0
    %1535 = vmatpush2.bf16.msra.mxu0 0
    %1536 = vmatprep.subr.bf16.mxu0 0
    %1537 = vmatpush2.bf16.msra.mxu0 0
    %1538 = vmatprep.subr.bf16.mxu0 0
    %1539 = vmatpush2.bf16.msra.mxu0 0
    %1540 = vmatprep.subr.bf16.mxu0 0
    %1541 = vmatpush2.bf16.msra.mxu0 0
    %1542 = vmatprep.subr.bf16.mxu0 0
    %1543 = vmatpush2.bf16.msra.mxu0 0
    %1544 = vmatprep.subr.bf16.mxu0 0
    %1545 = vmatpush2.bf16.msra.mxu0 0
    %1546 = vmatprep.mubr.bf16.mxu0 0
    %1547 = vmatmul.mubr.bf16.gmra.mxu0 %v1512
    %v1548 = vpop.f32.mrf.mxu0
    %v1549 = vadd.f32 0.0, %v1548
    %v1550 = vpop.f32.mrf.mxu0
    %v1551 = vpop.f32.mrf.mxu0
    %v1552 = vadd.f32 0.0, %v1551
    %v1553 = vpop.f32.mrf.mxu0
    %1554 = vdwg.mxu0
    %v1555 = vadd.f32 %v1439, %v1549
    %v1556 = vadd.f32 %v1440, %v1552
    %v1557 = vpack.c.bf16 %v1095, %v1094
    %v1558 = vpack.c.bf16 %v1556, %v1555
    %v1559 = vld [vmem:[#allocation7] sm:$0xf]
    %v1560 = vld [vmem:[#allocation7 + $0x4] sm:$0xf]
    %v1561 = vld [vmem:[#allocation7 + $0x8] sm:$0xf]
    %v1562 = vld [vmem:[#allocation7 + $0xc] sm:$0xf]
    %v1563 = vld [vmem:[#allocation7 + $0x10] sm:$0xf]
    %v1564 = vld [vmem:[#allocation7 + $0x14] sm:$0xf]
    %v1565 = vld [vmem:[#allocation7 + $0x18] sm:$0xf]
    %v1566 = vld [vmem:[#allocation7 + $0x1c] sm:$0xf]
    %v1567 = vld [vmem:[#allocation7 + $0x20] sm:$0xf]
    %v1568 = vld [vmem:[#allocation7 + $0x24] sm:$0xf]
    %v1569 = vld [vmem:[#allocation7 + $0x28] sm:$0xf]
    %v1570 = vld [vmem:[#allocation7 + $0x2c] sm:$0xf]
    %v1571 = vld [vmem:[#allocation7 + $0x30] sm:$0xf]
    %v1572 = vld [vmem:[#allocation7 + $0x34] sm:$0xf]
    %v1573 = vld [vmem:[#allocation7 + $0x38] sm:$0xf]
    %v1574 = vld [vmem:[#allocation7 + $0x3c] sm:$0xf]
    %v1575 = vld [vmem:[%s7] sm:$0x1]
    %v1577 = vlaneseq
    %v1578 = vshrl.u32 %v1577, 7
    %v1579 = vsub.s32 0, %v1578
    %v1580 = vrot.slane %v1575, %v1579
    %v1598 = vunpack.c.l.b16 %v1559
    %v1599 = vunpack.c.l.b16 %v1560
    %v1600 = vunpack.c.l.b16 %v1561
    %v1601 = vunpack.c.l.b16 %v1562
    %v1602 = vunpack.c.l.b16 %v1563
    %v1603 = vunpack.c.l.b16 %v1564
    %v1604 = vunpack.c.l.b16 %v1565
    %v1605 = vunpack.c.l.b16 %v1566
    %v1606 = vunpack.c.l.b16 %v1567
    %v1607 = vunpack.c.l.b16 %v1568
    %v1608 = vunpack.c.l.b16 %v1569
    %v1609 = vunpack.c.l.b16 %v1570
    %v1610 = vunpack.c.l.b16 %v1571
    %v1611 = vunpack.c.l.b16 %v1572
    %v1612 = vunpack.c.l.b16 %v1573
    %v1613 = vunpack.c.l.b16 %v1574
    %v1614 = vpack.c.b16 %v1599, %v1598
    %v1615 = vpack.c.b16 %v1601, %v1600
    %v1616 = vpack.c.b16 %v1603, %v1602
    %v1617 = vpack.c.b16 %v1605, %v1604
    %v1618 = vpack.c.b16 %v1607, %v1606
    %v1619 = vpack.c.b16 %v1609, %v1608
    %v1620 = vpack.c.b16 %v1611, %v1610
    %v1621 = vpack.c.b16 %v1613, %v1612
    %1630 = vmatprep.subr.bf16.mxu0 0
    %1631 = vmatpush1.bf16.msra.mxu0 %v1621
    %1632 = vmatprep.subr.bf16.mxu0 0
    %1633 = vmatpush1.bf16.msra.mxu0 %v1620
    %1634 = vmatprep.subr.bf16.mxu0 0
    %1635 = vmatpush1.bf16.msra.mxu0 %v1619
    %1636 = vmatprep.subr.bf16.mxu0 0
    %1637 = vmatpush1.bf16.msra.mxu0 %v1618
    %1638 = vmatprep.subr.bf16.mxu0 0
    %1639 = vmatpush1.bf16.msra.mxu0 %v1617
    %1640 = vmatprep.subr.bf16.mxu0 0
    %1641 = vmatpush1.bf16.msra.mxu0 %v1616
    %1642 = vmatprep.subr.bf16.mxu0 0
    %1643 = vmatpush1.bf16.msra.mxu0 %v1615
    %1644 = vmatprep.subr.bf16.mxu0 0
    %1645 = vmatpush1.bf16.msra.mxu0 %v1614
    %1646 = vmatprep.subr.bf16.mxu0 0
    %1647 = vmatpush2.bf16.msra.mxu0 0
    %1648 = vmatprep.subr.bf16.mxu0 0
    %1649 = vmatpush2.bf16.msra.mxu0 0
    %1650 = vmatprep.subr.bf16.mxu0 0
    %1651 = vmatpush2.bf16.msra.mxu0 0
    %1652 = vmatprep.subr.bf16.mxu0 0
    %1653 = vmatpush2.bf16.msra.mxu0 0
    %1654 = vmatprep.subr.bf16.mxu0 0
    %1655 = vmatpush2.bf16.msra.mxu0 0
    %1656 = vmatprep.subr.bf16.mxu0 0
    %1657 = vmatpush2.bf16.msra.mxu0 0
    %1658 = vmatprep.subr.bf16.mxu0 0
    %1659 = vmatpush2.bf16.msra.mxu0 0
    %1660 = vmatprep.subr.bf16.mxu0 0
    %1661 = vmatpush2.bf16.msra.mxu0 0
    %1662 = vmatprep.mubr.bf16.mxu0 0
    %1663 = vmatmul.mubr.bf16.gmra.mxu0 %v1557
    %v1664 = vpop.f32.mrf.mxu0
    %v1665 = vadd.f32 %v1580, %v1664
    %v1666 = vpop.f32.mrf.mxu0
    %v1667 = vpop.f32.mrf.mxu0
    %v1668 = vadd.f32 %v1580, %v1667
    %v1669 = vpop.f32.mrf.mxu0
    %1670 = vmatprep.mubr.bf16.mxu0 0
    %1671 = vmatmul.mubr.bf16.gmra.mxu0 %v1558
    %v1672 = vpop.f32.mrf.mxu0
    %v1673 = vadd.f32 %v1580, %v1672
    %v1674 = vpop.f32.mrf.mxu0
    %v1675 = vpop.f32.mrf.mxu0
    %v1676 = vadd.f32 %v1580, %v1675
    %v1677 = vpop.f32.mrf.mxu0
    %1678 = vdwg.mxu0
    %v1679 = vadd.f32 %v258, %v1665
    %v1680 = vadd.f32 %v263, %v1668
    %v1681 = vadd.f32 %v268, %v1673
    %v1682 = vadd.f32 %v273, %v1676
    %v1683 = vld [vmem:[%s8] sm:$0x1]
    %v1684 = vld [vmem:[%s9] sm:$0x1]
    %1685 = vadd.xlane.f32.xlu0 %v1679
    %v1686 = vpop.xlane.xlu0 %1685
    %1687 = vadd.xlane.f32.xlu0 %v1680
    %v1688 = vpop.xlane.xlu0 %1687
    %1689 = vadd.xlane.f32.xlu0 %v1681
    %v1690 = vpop.xlane.xlu0 %1689
    %1691 = vadd.xlane.f32.xlu0 %v1682
    %v1692 = vpop.xlane.xlu0 %1691
    %v1693 = vmul.f32 %v1686, %v313
    %v1694 = vmul.f32 %v1688, %v313
    %v1695 = vmul.f32 %v1690, %v313
    %v1696 = vmul.f32 %v1692, %v313
    %v1697 = vsub.f32 %v1679, %v1693
    %v1698 = vsub.f32 %v1680, %v1694
    %v1699 = vsub.f32 %v1681, %v1695
    %v1700 = vsub.f32 %v1682, %v1696
    %v1701 = vmul.f32 %v1697, %v1697
    %v1702 = vmul.f32 %v1698, %v1698
    %v1703 = vmul.f32 %v1699, %v1699
    %v1704 = vmul.f32 %v1700, %v1700
    %1705 = vadd.xlane.f32.xlu0 %v1701
    %v1706 = vpop.xlane.xlu0 %1705
    %1707 = vadd.xlane.f32.xlu0 %v1702
    %v1708 = vpop.xlane.xlu0 %1707
    %1709 = vadd.xlane.f32.xlu0 %v1703
    %v1710 = vpop.xlane.xlu0 %1709
    %1711 = vadd.xlane.f32.xlu0 %v1704
    %v1712 = vpop.xlane.xlu0 %1711
    %v1713 = vmul.f32 %v1706, %v313
    %v1714 = vmul.f32 %v1708, %v313
    %v1715 = vmul.f32 %v1710, %v313
    %v1716 = vmul.f32 %v1712, %v313
    %v1717 = vadd.f32 %v1713, 1e-05
    %v1718 = vadd.f32 %v1714, 1e-05
    %v1719 = vadd.f32 %v1715, 1e-05
    %v1720 = vadd.f32 %v1716, 1e-05
    %v1721 = vrsqrt.pop %v1717
    %v1722 = vrsqrt.pop %v1718
    %v1723 = vrsqrt.pop %v1719
    %v1724 = vrsqrt.pop %v1720
    %v1725 = vmul.f32 %v1697, %v1721
    %v1726 = vmul.f32 %v1698, %v1722
    %v1727 = vmul.f32 %v1699, %v1723
    %v1728 = vmul.f32 %v1700, %v1724
    %v1730 = vlaneseq
    %v1731 = vshrl.u32 %v1730, 7
    %v1732 = vsub.s32 0, %v1731
    %v1733 = vrot.slane %v1683, %v1732
    %v1735 = vmul.f32 %v1725, %v1733
    %v1736 = vmul.f32 %v1726, %v1733
    %v1737 = vmul.f32 %v1727, %v1733
    %v1738 = vmul.f32 %v1728, %v1733
    %v1740 = vlaneseq
    %v1741 = vshrl.u32 %v1740, 7
    %v1742 = vsub.s32 0, %v1741
    %v1743 = vrot.slane %v1684, %v1742
    %v1745 = vadd.f32 %v1735, %v1743
    %v1746 = vadd.f32 %v1736, %v1743
    %v1747 = vadd.f32 %v1737, %v1743
    %v1748 = vadd.f32 %v1738, %v1743
    %v1749 = vpack.c.bf16 %v1746, %v1745
    %v1750 = vpack.c.bf16 %v1748, %v1747
    %v1751 = vld [vmem:[#allocation8] sm:$0xff]
    %v1752 = vld [vmem:[#allocation8 + $0x8] sm:$0xff]
    %v1753 = vld [vmem:[#allocation8 + $0x10] sm:$0xff]
    %v1754 = vld [vmem:[#allocation8 + $0x18] sm:$0xff]
    %v1755 = vld [vmem:[#allocation8 + $0x20] sm:$0xff]
    %v1756 = vld [vmem:[#allocation8 + $0x28] sm:$0xff]
    %v1757 = vld [vmem:[#allocation8 + $0x30] sm:$0xff]
    %v1758 = vld [vmem:[#allocation8 + $0x38] sm:$0xff]
    %v1759 = vld [vmem:[#allocation8 + $0x40] sm:$0xff]
    %v1760 = vld [vmem:[#allocation8 + $0x48] sm:$0xff]
    %v1761 = vld [vmem:[#allocation8 + $0x50] sm:$0xff]
    %v1762 = vld [vmem:[#allocation8 + $0x58] sm:$0xff]
    %v1763 = vld [vmem:[#allocation8 + $0x60] sm:$0xff]
    %v1764 = vld [vmem:[#allocation8 + $0x68] sm:$0xff]
    %v1765 = vld [vmem:[#allocation8 + $0x70] sm:$0xff]
    %v1766 = vld [vmem:[#allocation8 + $0x78] sm:$0xff]
    %v1767 = vld [vmem:[#allocation8 + $0x80] sm:$0xff]
    %v1768 = vld [vmem:[#allocation8 + $0x88] sm:$0xff]
    %v1769 = vld [vmem:[#allocation8 + $0x90] sm:$0xff]
    %v1770 = vld [vmem:[#allocation8 + $0x98] sm:$0xff]
    %v1771 = vld [vmem:[#allocation8 + $0xa0] sm:$0xff]
    %v1772 = vld [vmem:[#allocation8 + $0xa8] sm:$0xff]
    %v1773 = vld [vmem:[#allocation8 + $0xb0] sm:$0xff]
    %v1774 = vld [vmem:[#allocation8 + $0xb8] sm:$0xff]
    %v1775 = vld [vmem:[#allocation8 + $0xc0] sm:$0xff]
    %v1776 = vld [vmem:[#allocation8 + $0xc8] sm:$0xff]
    %v1777 = vld [vmem:[#allocation8 + $0xd0] sm:$0xff]
    %v1778 = vld [vmem:[#allocation8 + $0xd8] sm:$0xff]
    %v1779 = vld [vmem:[#allocation8 + $0xe0] sm:$0xff]
    %v1780 = vld [vmem:[#allocation8 + $0xe8] sm:$0xff]
    %v1781 = vld [vmem:[#allocation8 + $0xf0] sm:$0xff]
    %v1782 = vld [vmem:[#allocation8 + $0xf8] sm:$0xff]
    %v1783 = vld [vmem:[%s11] sm:$0xf]
    %v1785 = vlaneseq
    %v1786 = vshrl.u32 %v1785, 7
    %v1787 = vsub.s32 0, %v1786
    %v1788 = vrot.slane %v1783, %v1787
    %v1789 = vlaneseq
    %v1790 = vshrl.u32 %v1789, 7
    %v1791 = vsub.s32 1, %v1790
    %v1792 = vrot.slane %v1783, %v1791
    %v1793 = vlaneseq
    %v1794 = vshrl.u32 %v1793, 7
    %v1795 = vsub.s32 2, %v1794
    %v1796 = vrot.slane %v1783, %v1795
    %v1797 = vlaneseq
    %v1798 = vshrl.u32 %v1797, 7
    %v1799 = vsub.s32 3, %v1798
    %v1800 = vrot.slane %v1783, %v1799
    %v1837 = vunpack.c.l.b16 %v1751
    %v1838 = vunpack.c.h.b16 %v1751
    %v1839 = vunpack.c.l.b16 %v1752
    %v1840 = vunpack.c.h.b16 %v1752
    %v1841 = vunpack.c.l.b16 %v1753
    %v1842 = vunpack.c.h.b16 %v1753
    %v1843 = vunpack.c.l.b16 %v1754
    %v1844 = vunpack.c.h.b16 %v1754
    %v1845 = vunpack.c.l.b16 %v1755
    %v1846 = vunpack.c.h.b16 %v1755
    %v1847 = vunpack.c.l.b16 %v1756
    %v1848 = vunpack.c.h.b16 %v1756
    %v1849 = vunpack.c.l.b16 %v1757
    %v1850 = vunpack.c.h.b16 %v1757
    %v1851 = vunpack.c.l.b16 %v1758
    %v1852 = vunpack.c.h.b16 %v1758
    %v1853 = vunpack.c.l.b16 %v1759
    %v1854 = vunpack.c.h.b16 %v1759
    %v1855 = vunpack.c.l.b16 %v1760
    %v1856 = vunpack.c.h.b16 %v1760
    %v1857 = vunpack.c.l.b16 %v1761
    %v1858 = vunpack.c.h.b16 %v1761
    %v1859 = vunpack.c.l.b16 %v1762
    %v1860 = vunpack.c.h.b16 %v1762
    %v1861 = vunpack.c.l.b16 %v1763
    %v1862 = vunpack.c.h.b16 %v1763
    %v1863 = vunpack.c.l.b16 %v1764
    %v1864 = vunpack.c.h.b16 %v1764
    %v1865 = vunpack.c.l.b16 %v1765
    %v1866 = vunpack.c.h.b16 %v1765
    %v1867 = vunpack.c.l.b16 %v1766
    %v1868 = vunpack.c.h.b16 %v1766
    %v1869 = vunpack.c.l.b16 %v1767
    %v1870 = vunpack.c.h.b16 %v1767
    %v1871 = vunpack.c.l.b16 %v1768
    %v1872 = vunpack.c.h.b16 %v1768
    %v1873 = vunpack.c.l.b16 %v1769
    %v1874 = vunpack.c.h.b16 %v1769
    %v1875 = vunpack.c.l.b16 %v1770
    %v1876 = vunpack.c.h.b16 %v1770
    %v1877 = vunpack.c.l.b16 %v1771
    %v1878 = vunpack.c.h.b16 %v1771
    %v1879 = vunpack.c.l.b16 %v1772
    %v1880 = vunpack.c.h.b16 %v1772
    %v1881 = vunpack.c.l.b16 %v1773
    %v1882 = vunpack.c.h.b16 %v1773
    %v1883 = vunpack.c.l.b16 %v1774
    %v1884 = vunpack.c.h.b16 %v1774
    %v1885 = vunpack.c.l.b16 %v1775
    %v1886 = vunpack.c.h.b16 %v1775
    %v1887 = vunpack.c.l.b16 %v1776
    %v1888 = vunpack.c.h.b16 %v1776
    %v1889 = vunpack.c.l.b16 %v1777
    %v1890 = vunpack.c.h.b16 %v1777
    %v1891 = vunpack.c.l.b16 %v1778
    %v1892 = vunpack.c.h.b16 %v1778
    %v1893 = vunpack.c.l.b16 %v1779
    %v1894 = vunpack.c.h.b16 %v1779
    %v1895 = vunpack.c.l.b16 %v1780
    %v1896 = vunpack.c.h.b16 %v1780
    %v1897 = vunpack.c.l.b16 %v1781
    %v1898 = vunpack.c.h.b16 %v1781
    %v1899 = vunpack.c.l.b16 %v1782
    %v1900 = vunpack.c.h.b16 %v1782
    %v1901 = vpack.c.b16 %v1841, %v1837
    %v1902 = vpack.c.b16 %v1842, %v1838
    %v1903 = vpack.c.b16 %v1843, %v1839
    %v1904 = vpack.c.b16 %v1844, %v1840
    %v1905 = vpack.c.b16 %v1849, %v1845
    %v1906 = vpack.c.b16 %v1850, %v1846
    %v1907 = vpack.c.b16 %v1851, %v1847
    %v1908 = vpack.c.b16 %v1852, %v1848
    %v1909 = vpack.c.b16 %v1857, %v1853
    %v1910 = vpack.c.b16 %v1858, %v1854
    %v1911 = vpack.c.b16 %v1859, %v1855
    %v1912 = vpack.c.b16 %v1860, %v1856
    %v1913 = vpack.c.b16 %v1865, %v1861
    %v1914 = vpack.c.b16 %v1866, %v1862
    %v1915 = vpack.c.b16 %v1867, %v1863
    %v1916 = vpack.c.b16 %v1868, %v1864
    %v1917 = vpack.c.b16 %v1873, %v1869
    %v1918 = vpack.c.b16 %v1874, %v1870
    %v1919 = vpack.c.b16 %v1875, %v1871
    %v1920 = vpack.c.b16 %v1876, %v1872
    %v1921 = vpack.c.b16 %v1881, %v1877
    %v1922 = vpack.c.b16 %v1882, %v1878
    %v1923 = vpack.c.b16 %v1883, %v1879
    %v1924 = vpack.c.b16 %v1884, %v1880
    %v1925 = vpack.c.b16 %v1889, %v1885
    %v1926 = vpack.c.b16 %v1890, %v1886
    %v1927 = vpack.c.b16 %v1891, %v1887
    %v1928 = vpack.c.b16 %v1892, %v1888
    %v1929 = vpack.c.b16 %v1897, %v1893
    %v1930 = vpack.c.b16 %v1898, %v1894
    %v1931 = vpack.c.b16 %v1899, %v1895
    %v1932 = vpack.c.b16 %v1900, %v1896
    %1965 = vmatprep.subr.bf16.mxu0 %v1930
    %1966 = vmatpush1.bf16.msra.mxu0 %v1929
    %1967 = vmatprep.subr.bf16.mxu0 %v1926
    %1968 = vmatpush1.bf16.msra.mxu0 %v1925
    %1969 = vmatprep.subr.bf16.mxu0 %v1922
    %1970 = vmatpush1.bf16.msra.mxu0 %v1921
    %1971 = vmatprep.subr.bf16.mxu0 %v1918
    %1972 = vmatpush1.bf16.msra.mxu0 %v1917
    %1973 = vmatprep.subr.bf16.mxu0 %v1914
    %1974 = vmatpush1.bf16.msra.mxu0 %v1913
    %1975 = vmatprep.subr.bf16.mxu0 %v1910
    %1976 = vmatpush1.bf16.msra.mxu0 %v1909
    %1977 = vmatprep.subr.bf16.mxu0 %v1906
    %1978 = vmatpush1.bf16.msra.mxu0 %v1905
    %1979 = vmatprep.subr.bf16.mxu0 %v1902
    %1980 = vmatpush1.bf16.msra.mxu0 %v1901
    %1981 = vmatprep.subr.bf16.mxu0 0
    %1982 = vmatpush2.bf16.msra.mxu0 0
    %1983 = vmatprep.subr.bf16.mxu0 0
    %1984 = vmatpush2.bf16.msra.mxu0 0
    %1985 = vmatprep.subr.bf16.mxu0 0
    %1986 = vmatpush2.bf16.msra.mxu0 0
    %1987 = vmatprep.subr.bf16.mxu0 0
    %1988 = vmatpush2.bf16.msra.mxu0 0
    %1989 = vmatprep.subr.bf16.mxu0 0
    %1990 = vmatpush2.bf16.msra.mxu0 0
    %1991 = vmatprep.subr.bf16.mxu0 0
    %1992 = vmatpush2.bf16.msra.mxu0 0
    %1993 = vmatprep.subr.bf16.mxu0 0
    %1994 = vmatpush2.bf16.msra.mxu0 0
    %1995 = vmatprep.subr.bf16.mxu0 0
    %1996 = vmatpush2.bf16.msra.mxu0 0
    %1997 = vmatprep.mubr.bf16.mxu0 0
    %1998 = vmatmul.mubr.bf16.gmra.mxu0 %v1749
    %v1999 = vpop.f32.mrf.mxu0
    %v2000 = vadd.f32 %v1788, %v1999
    %v2001 = vpop.f32.mrf.mxu0
    %v2002 = vadd.f32 %v1792, %v2001
    %v2003 = vpop.f32.mrf.mxu0
    %v2004 = vadd.f32 %v1788, %v2003
    %v2005 = vpop.f32.mrf.mxu0
    %v2006 = vadd.f32 %v1792, %v2005
    %2007 = vmatprep.mubr.bf16.mxu0 0
    %2008 = vmatmul.mubr.bf16.gmra.mxu0 %v1750
    %v2009 = vpop.f32.mrf.mxu0
    %v2010 = vadd.f32 %v1788, %v2009
    %v2011 = vpop.f32.mrf.mxu0
    %v2012 = vadd.f32 %v1792, %v2011
    %v2013 = vpop.f32.mrf.mxu0
    %v2014 = vadd.f32 %v1788, %v2013
    %v2015 = vpop.f32.mrf.mxu0
    %v2016 = vadd.f32 %v1792, %v2015
    %2017 = vdwg.mxu0
    %2018 = vmatprep.subr.bf16.mxu0 %v1932
    %2019 = vmatpush1.bf16.msra.mxu0 %v1931
    %2020 = vmatprep.subr.bf16.mxu0 %v1928
    %2021 = vmatpush1.bf16.msra.mxu0 %v1927
    %2022 = vmatprep.subr.bf16.mxu0 %v1924
    %2023 = vmatpush1.bf16.msra.mxu0 %v1923
    %2024 = vmatprep.subr.bf16.mxu0 %v1920
    %2025 = vmatpush1.bf16.msra.mxu0 %v1919
    %2026 = vmatprep.subr.bf16.mxu0 %v1916
    %2027 = vmatpush1.bf16.msra.mxu0 %v1915
    %2028 = vmatprep.subr.bf16.mxu0 %v1912
    %2029 = vmatpush1.bf16.msra.mxu0 %v1911
    %2030 = vmatprep.subr.bf16.mxu0 %v1908
    %2031 = vmatpush1.bf16.msra.mxu0 %v1907
    %2032 = vmatprep.subr.bf16.mxu0 %v1904
    %2033 = vmatpush1.bf16.msra.mxu0 %v1903
    %2034 = vmatprep.subr.bf16.mxu0 0
    %2035 = vmatpush2.bf16.msra.mxu0 0
    %2036 = vmatprep.subr.bf16.mxu0 0
    %2037 = vmatpush2.bf16.msra.mxu0 0
    %2038 = vmatprep.subr.bf16.mxu0 0
    %2039 = vmatpush2.bf16.msra.mxu0 0
    %2040 = vmatprep.subr.bf16.mxu0 0
    %2041 = vmatpush2.bf16.msra.mxu0 0
    %2042 = vmatprep.subr.bf16.mxu0 0
    %2043 = vmatpush2.bf16.msra.mxu0 0
    %2044 = vmatprep.subr.bf16.mxu0 0
    %2045 = vmatpush2.bf16.msra.mxu0 0
    %2046 = vmatprep.subr.bf16.mxu0 0
    %2047 = vmatpush2.bf16.msra.mxu0 0
    %2048 = vmatprep.subr.bf16.mxu0 0
    %2049 = vmatpush2.bf16.msra.mxu0 0
    %2050 = vmatprep.mubr.bf16.mxu0 0
    %2051 = vmatmul.mubr.bf16.gmra.mxu0 %v1749
    %v2052 = vpop.f32.mrf.mxu0
    %v2053 = vadd.f32 %v1796, %v2052
    %v2054 = vpop.f32.mrf.mxu0
    %v2055 = vadd.f32 %v1800, %v2054
    %v2056 = vpop.f32.mrf.mxu0
    %v2057 = vadd.f32 %v1796, %v2056
    %v2058 = vpop.f32.mrf.mxu0
    %v2059 = vadd.f32 %v1800, %v2058
    %2060 = vmatprep.mubr.bf16.mxu0 0
    %2061 = vmatmul.mubr.bf16.gmra.mxu0 %v1750
    %v2062 = vpop.f32.mrf.mxu0
    %v2063 = vadd.f32 %v1796, %v2062
    %v2064 = vpop.f32.mrf.mxu0
    %v2065 = vadd.f32 %v1800, %v2064
    %v2066 = vpop.f32.mrf.mxu0
    %v2067 = vadd.f32 %v1796, %v2066
    %v2068 = vpop.f32.mrf.mxu0
    %v2069 = vadd.f32 %v1800, %v2068
    %2070 = vdwg.mxu0
    %v2071 = vmax.f32 %v2000, 0.0
    %v2072 = vmax.f32 %v2002, 0.0
    %v2073 = vmax.f32 %v2053, 0.0
    %v2074 = vmax.f32 %v2055, 0.0
    %v2075 = vmax.f32 %v2004, 0.0
    %v2076 = vmax.f32 %v2006, 0.0
    %v2077 = vmax.f32 %v2057, 0.0
    %v2078 = vmax.f32 %v2059, 0.0
    %v2079 = vmax.f32 %v2010, 0.0
    %v2080 = vmax.f32 %v2012, 0.0
    %v2081 = vmax.f32 %v2063, 0.0
    %v2082 = vmax.f32 %v2065, 0.0
    %v2083 = vmax.f32 %v2014, 0.0
    %v2084 = vmax.f32 %v2016, 0.0
    %v2085 = vmax.f32 %v2067, 0.0
    %v2086 = vmax.f32 %v2069, 0.0
    %v2087 = vpack.c.bf16 %v2075, %v2071
    %v2088 = vpack.c.bf16 %v2076, %v2072
    %v2089 = vpack.c.bf16 %v2077, %v2073
    %v2090 = vpack.c.bf16 %v2078, %v2074
    %v2091 = vpack.c.bf16 %v2083, %v2079
    %v2092 = vpack.c.bf16 %v2084, %v2080
    %v2093 = vpack.c.bf16 %v2085, %v2081
    %v2094 = vpack.c.bf16 %v2086, %v2082
    %v2095 = vld [vmem:[#allocation10] sm:$0xf]
    %v2096 = vld [vmem:[#allocation10 + $0x4] sm:$0xf]
    %v2097 = vld [vmem:[#allocation10 + $0x8] sm:$0xf]
    %v2098 = vld [vmem:[#allocation10 + $0xc] sm:$0xf]
    %v2099 = vld [vmem:[#allocation10 + $0x10] sm:$0xf]
    %v2100 = vld [vmem:[#allocation10 + $0x14] sm:$0xf]
    %v2101 = vld [vmem:[#allocation10 + $0x18] sm:$0xf]
    %v2102 = vld [vmem:[#allocation10 + $0x1c] sm:$0xf]
    %v2103 = vld [vmem:[#allocation10 + $0x20] sm:$0xf]
    %v2104 = vld [vmem:[#allocation10 + $0x24] sm:$0xf]
    %v2105 = vld [vmem:[#allocation10 + $0x28] sm:$0xf]
    %v2106 = vld [vmem:[#allocation10 + $0x2c] sm:$0xf]
    %v2107 = vld [vmem:[#allocation10 + $0x30] sm:$0xf]
    %v2108 = vld [vmem:[#allocation10 + $0x34] sm:$0xf]
    %v2109 = vld [vmem:[#allocation10 + $0x38] sm:$0xf]
    %v2110 = vld [vmem:[#allocation10 + $0x3c] sm:$0xf]
    %v2111 = vld [vmem:[#allocation10 + $0x40] sm:$0xf]
    %v2112 = vld [vmem:[#allocation10 + $0x44] sm:$0xf]
    %v2113 = vld [vmem:[#allocation10 + $0x48] sm:$0xf]
    %v2114 = vld [vmem:[#allocation10 + $0x4c] sm:$0xf]
    %v2115 = vld [vmem:[#allocation10 + $0x50] sm:$0xf]
    %v2116 = vld [vmem:[#allocation10 + $0x54] sm:$0xf]
    %v2117 = vld [vmem:[#allocation10 + $0x58] sm:$0xf]
    %v2118 = vld [vmem:[#allocation10 + $0x5c] sm:$0xf]
    %v2119 = vld [vmem:[#allocation10 + $0x60] sm:$0xf]
    %v2120 = vld [vmem:[#allocation10 + $0x64] sm:$0xf]
    %v2121 = vld [vmem:[#allocation10 + $0x68] sm:$0xf]
    %v2122 = vld [vmem:[#allocation10 + $0x6c] sm:$0xf]
    %v2123 = vld [vmem:[#allocation10 + $0x70] sm:$0xf]
    %v2124 = vld [vmem:[#allocation10 + $0x74] sm:$0xf]
    %v2125 = vld [vmem:[#allocation10 + $0x78] sm:$0xf]
    %v2126 = vld [vmem:[#allocation10 + $0x7c] sm:$0xf]
    %v2127 = vld [vmem:[#allocation10 + $0x80] sm:$0xf]
    %v2128 = vld [vmem:[#allocation10 + $0x84] sm:$0xf]
    %v2129 = vld [vmem:[#allocation10 + $0x88] sm:$0xf]
    %v2130 = vld [vmem:[#allocation10 + $0x8c] sm:$0xf]
    %v2131 = vld [vmem:[#allocation10 + $0x90] sm:$0xf]
    %v2132 = vld [vmem:[#allocation10 + $0x94] sm:$0xf]
    %v2133 = vld [vmem:[#allocation10 + $0x98] sm:$0xf]
    %v2134 = vld [vmem:[#allocation10 + $0x9c] sm:$0xf]
    %v2135 = vld [vmem:[#allocation10 + $0xa0] sm:$0xf]
    %v2136 = vld [vmem:[#allocation10 + $0xa4] sm:$0xf]
    %v2137 = vld [vmem:[#allocation10 + $0xa8] sm:$0xf]
    %v2138 = vld [vmem:[#allocation10 + $0xac] sm:$0xf]
    %v2139 = vld [vmem:[#allocation10 + $0xb0] sm:$0xf]
    %v2140 = vld [vmem:[#allocation10 + $0xb4] sm:$0xf]
    %v2141 = vld [vmem:[#allocation10 + $0xb8] sm:$0xf]
    %v2142 = vld [vmem:[#allocation10 + $0xbc] sm:$0xf]
    %v2143 = vld [vmem:[#allocation10 + $0xc0] sm:$0xf]
    %v2144 = vld [vmem:[#allocation10 + $0xc4] sm:$0xf]
    %v2145 = vld [vmem:[#allocation10 + $0xc8] sm:$0xf]
    %v2146 = vld [vmem:[#allocation10 + $0xcc] sm:$0xf]
    %v2147 = vld [vmem:[#allocation10 + $0xd0] sm:$0xf]
    %v2148 = vld [vmem:[#allocation10 + $0xd4] sm:$0xf]
    %v2149 = vld [vmem:[#allocation10 + $0xd8] sm:$0xf]
    %v2150 = vld [vmem:[#allocation10 + $0xdc] sm:$0xf]
    %v2151 = vld [vmem:[#allocation10 + $0xe0] sm:$0xf]
    %v2152 = vld [vmem:[#allocation10 + $0xe4] sm:$0xf]
    %v2153 = vld [vmem:[#allocation10 + $0xe8] sm:$0xf]
    %v2154 = vld [vmem:[#allocation10 + $0xec] sm:$0xf]
    %v2155 = vld [vmem:[#allocation10 + $0xf0] sm:$0xf]
    %v2156 = vld [vmem:[#allocation10 + $0xf4] sm:$0xf]
    %v2157 = vld [vmem:[#allocation10 + $0xf8] sm:$0xf]
    %v2158 = vld [vmem:[#allocation10 + $0xfc] sm:$0xf]
    %v2159 = vld [vmem:[%s13] sm:$0x1]
    %v2161 = vlaneseq
    %v2162 = vshrl.u32 %v2161, 7
    %v2163 = vsub.s32 0, %v2162
    %v2164 = vrot.slane %v2159, %v2163
    %v2230 = vunpack.c.l.b16 %v2095
    %v2231 = vunpack.c.l.b16 %v2096
    %v2232 = vunpack.c.l.b16 %v2097
    %v2233 = vunpack.c.l.b16 %v2098
    %v2234 = vunpack.c.l.b16 %v2099
    %v2235 = vunpack.c.l.b16 %v2100
    %v2236 = vunpack.c.l.b16 %v2101
    %v2237 = vunpack.c.l.b16 %v2102
    %v2238 = vunpack.c.l.b16 %v2103
    %v2239 = vunpack.c.l.b16 %v2104
    %v2240 = vunpack.c.l.b16 %v2105
    %v2241 = vunpack.c.l.b16 %v2106
    %v2242 = vunpack.c.l.b16 %v2107
    %v2243 = vunpack.c.l.b16 %v2108
    %v2244 = vunpack.c.l.b16 %v2109
    %v2245 = vunpack.c.l.b16 %v2110
    %v2246 = vunpack.c.l.b16 %v2111
    %v2247 = vunpack.c.l.b16 %v2112
    %v2248 = vunpack.c.l.b16 %v2113
    %v2249 = vunpack.c.l.b16 %v2114
    %v2250 = vunpack.c.l.b16 %v2115
    %v2251 = vunpack.c.l.b16 %v2116
    %v2252 = vunpack.c.l.b16 %v2117
    %v2253 = vunpack.c.l.b16 %v2118
    %v2254 = vunpack.c.l.b16 %v2119
    %v2255 = vunpack.c.l.b16 %v2120
    %v2256 = vunpack.c.l.b16 %v2121
    %v2257 = vunpack.c.l.b16 %v2122
    %v2258 = vunpack.c.l.b16 %v2123
    %v2259 = vunpack.c.l.b16 %v2124
    %v2260 = vunpack.c.l.b16 %v2125
    %v2261 = vunpack.c.l.b16 %v2126
    %v2262 = vunpack.c.l.b16 %v2127
    %v2263 = vunpack.c.l.b16 %v2128
    %v2264 = vunpack.c.l.b16 %v2129
    %v2265 = vunpack.c.l.b16 %v2130
    %v2266 = vunpack.c.l.b16 %v2131
    %v2267 = vunpack.c.l.b16 %v2132
    %v2268 = vunpack.c.l.b16 %v2133
    %v2269 = vunpack.c.l.b16 %v2134
    %v2270 = vunpack.c.l.b16 %v2135
    %v2271 = vunpack.c.l.b16 %v2136
    %v2272 = vunpack.c.l.b16 %v2137
    %v2273 = vunpack.c.l.b16 %v2138
    %v2274 = vunpack.c.l.b16 %v2139
    %v2275 = vunpack.c.l.b16 %v2140
    %v2276 = vunpack.c.l.b16 %v2141
    %v2277 = vunpack.c.l.b16 %v2142
    %v2278 = vunpack.c.l.b16 %v2143
    %v2279 = vunpack.c.l.b16 %v2144
    %v2280 = vunpack.c.l.b16 %v2145
    %v2281 = vunpack.c.l.b16 %v2146
    %v2282 = vunpack.c.l.b16 %v2147
    %v2283 = vunpack.c.l.b16 %v2148
    %v2284 = vunpack.c.l.b16 %v2149
    %v2285 = vunpack.c.l.b16 %v2150
    %v2286 = vunpack.c.l.b16 %v2151
    %v2287 = vunpack.c.l.b16 %v2152
    %v2288 = vunpack.c.l.b16 %v2153
    %v2289 = vunpack.c.l.b16 %v2154
    %v2290 = vunpack.c.l.b16 %v2155
    %v2291 = vunpack.c.l.b16 %v2156
    %v2292 = vunpack.c.l.b16 %v2157
    %v2293 = vunpack.c.l.b16 %v2158
    %v2294 = vpack.c.b16 %v2231, %v2230
    %v2295 = vpack.c.b16 %v2233, %v2232
    %v2296 = vpack.c.b16 %v2235, %v2234
    %v2297 = vpack.c.b16 %v2237, %v2236
    %v2298 = vpack.c.b16 %v2239, %v2238
    %v2299 = vpack.c.b16 %v2241, %v2240
    %v2300 = vpack.c.b16 %v2243, %v2242
    %v2301 = vpack.c.b16 %v2245, %v2244
    %v2302 = vpack.c.b16 %v2247, %v2246
    %v2303 = vpack.c.b16 %v2249, %v2248
    %v2304 = vpack.c.b16 %v2251, %v2250
    %v2305 = vpack.c.b16 %v2253, %v2252
    %v2306 = vpack.c.b16 %v2255, %v2254
    %v2307 = vpack.c.b16 %v2257, %v2256
    %v2308 = vpack.c.b16 %v2259, %v2258
    %v2309 = vpack.c.b16 %v2261, %v2260
    %v2310 = vpack.c.b16 %v2263, %v2262
    %v2311 = vpack.c.b16 %v2265, %v2264
    %v2312 = vpack.c.b16 %v2267, %v2266
    %v2313 = vpack.c.b16 %v2269, %v2268
    %v2314 = vpack.c.b16 %v2271, %v2270
    %v2315 = vpack.c.b16 %v2273, %v2272
    %v2316 = vpack.c.b16 %v2275, %v2274
    %v2317 = vpack.c.b16 %v2277, %v2276
    %v2318 = vpack.c.b16 %v2279, %v2278
    %v2319 = vpack.c.b16 %v2281, %v2280
    %v2320 = vpack.c.b16 %v2283, %v2282
    %v2321 = vpack.c.b16 %v2285, %v2284
    %v2322 = vpack.c.b16 %v2287, %v2286
    %v2323 = vpack.c.b16 %v2289, %v2288
    %v2324 = vpack.c.b16 %v2291, %v2290
    %v2325 = vpack.c.b16 %v2293, %v2292
    %2358 = vmatprep.subr.bf16.mxu0 0
    %2359 = vmatpush1.bf16.msra.mxu0 %v2301
    %2360 = vmatprep.subr.bf16.mxu0 0
    %2361 = vmatpush1.bf16.msra.mxu0 %v2300
    %2362 = vmatprep.subr.bf16.mxu0 0
    %2363 = vmatpush1.bf16.msra.mxu0 %v2299
    %2364 = vmatprep.subr.bf16.mxu0 0
    %2365 = vmatpush1.bf16.msra.mxu0 %v2298
    %2366 = vmatprep.subr.bf16.mxu0 0
    %2367 = vmatpush1.bf16.msra.mxu0 %v2297
    %2368 = vmatprep.subr.bf16.mxu0 0
    %2369 = vmatpush1.bf16.msra.mxu0 %v2296
    %2370 = vmatprep.subr.bf16.mxu0 0
    %2371 = vmatpush1.bf16.msra.mxu0 %v2295
    %2372 = vmatprep.subr.bf16.mxu0 0
    %2373 = vmatpush1.bf16.msra.mxu0 %v2294
    %2374 = vmatprep.subr.bf16.mxu0 0
    %2375 = vmatpush2.bf16.msra.mxu0 %v2309
    %2376 = vmatprep.subr.bf16.mxu0 0
    %2377 = vmatpush2.bf16.msra.mxu0 %v2308
    %2378 = vmatprep.subr.bf16.mxu0 0
    %2379 = vmatpush2.bf16.msra.mxu0 %v2307
    %2380 = vmatprep.subr.bf16.mxu0 0
    %2381 = vmatpush2.bf16.msra.mxu0 %v2306
    %2382 = vmatprep.subr.bf16.mxu0 0
    %2383 = vmatpush2.bf16.msra.mxu0 %v2305
    %2384 = vmatprep.subr.bf16.mxu0 0
    %2385 = vmatpush2.bf16.msra.mxu0 %v2304
    %2386 = vmatprep.subr.bf16.mxu0 0
    %2387 = vmatpush2.bf16.msra.mxu0 %v2303
    %2388 = vmatprep.subr.bf16.mxu0 0
    %2389 = vmatpush2.bf16.msra.mxu0 %v2302
    %2390 = vmatprep.mubr.bf16.mxu0 %v2088
    %2391 = vmatmul.mubr.bf16.gmra.mxu0 %v2087
    %v2392 = vpop.f32.mrf.mxu0
    %v2393 = vadd.f32 %v2164, %v2392
    %v2394 = vpop.f32.mrf.mxu0
    %v2395 = vpop.f32.mrf.mxu0
    %v2396 = vadd.f32 %v2164, %v2395
    %v2397 = vpop.f32.mrf.mxu0
    %2398 = vmatprep.mubr.bf16.mxu0 %v2092
    %2399 = vmatmul.mubr.bf16.gmra.mxu0 %v2091
    %v2400 = vpop.f32.mrf.mxu0
    %v2401 = vadd.f32 %v2164, %v2400
    %v2402 = vpop.f32.mrf.mxu0
    %v2403 = vpop.f32.mrf.mxu0
    %v2404 = vadd.f32 %v2164, %v2403
    %v2405 = vpop.f32.mrf.mxu0
    %2406 = vdwg.mxu0
    %2407 = vmatprep.subr.bf16.mxu0 0
    %2408 = vmatpush1.bf16.msra.mxu0 %v2317
    %2409 = vmatprep.subr.bf16.mxu0 0
    %2410 = vmatpush1.bf16.msra.mxu0 %v2316
    %2411 = vmatprep.subr.bf16.mxu0 0
    %2412 = vmatpush1.bf16.msra.mxu0 %v2315
    %2413 = vmatprep.subr.bf16.mxu0 0
    %2414 = vmatpush1.bf16.msra.mxu0 %v2314
    %2415 = vmatprep.subr.bf16.mxu0 0
    %2416 = vmatpush1.bf16.msra.mxu0 %v2313
    %2417 = vmatprep.subr.bf16.mxu0 0
    %2418 = vmatpush1.bf16.msra.mxu0 %v2312
    %2419 = vmatprep.subr.bf16.mxu0 0
    %2420 = vmatpush1.bf16.msra.mxu0 %v2311
    %2421 = vmatprep.subr.bf16.mxu0 0
    %2422 = vmatpush1.bf16.msra.mxu0 %v2310
    %2423 = vmatprep.subr.bf16.mxu0 0
    %2424 = vmatpush2.bf16.msra.mxu0 %v2325
    %2425 = vmatprep.subr.bf16.mxu0 0
    %2426 = vmatpush2.bf16.msra.mxu0 %v2324
    %2427 = vmatprep.subr.bf16.mxu0 0
    %2428 = vmatpush2.bf16.msra.mxu0 %v2323
    %2429 = vmatprep.subr.bf16.mxu0 0
    %2430 = vmatpush2.bf16.msra.mxu0 %v2322
    %2431 = vmatprep.subr.bf16.mxu0 0
    %2432 = vmatpush2.bf16.msra.mxu0 %v2321
    %2433 = vmatprep.subr.bf16.mxu0 0
    %2434 = vmatpush2.bf16.msra.mxu0 %v2320
    %2435 = vmatprep.subr.bf16.mxu0 0
    %2436 = vmatpush2.bf16.msra.mxu0 %v2319
    %2437 = vmatprep.subr.bf16.mxu0 0
    %2438 = vmatpush2.bf16.msra.mxu0 %v2318
    %2439 = vmatprep.mubr.bf16.mxu0 %v2090
    %2440 = vmatmul.mubr.bf16.gmra.mxu0 %v2089
    %v2441 = vpop.f32.mrf.mxu0
    %v2442 = vadd.f32 %v2393, %v2441
    %v2443 = vpop.f32.mrf.mxu0
    %v2444 = vpop.f32.mrf.mxu0
    %v2445 = vadd.f32 %v2396, %v2444
    %v2446 = vpop.f32.mrf.mxu0
    %2447 = vmatprep.mubr.bf16.mxu0 %v2094
    %2448 = vmatmul.mubr.bf16.gmra.mxu0 %v2093
    %v2449 = vpop.f32.mrf.mxu0
    %v2450 = vadd.f32 %v2401, %v2449
    %v2451 = vpop.f32.mrf.mxu0
    %v2452 = vpop.f32.mrf.mxu0
    %v2453 = vadd.f32 %v2404, %v2452
    %v2454 = vpop.f32.mrf.mxu0
    %2455 = vdwg.mxu0
    %v2456 = vadd.f32 %v1679, %v2442
    %v2457 = vadd.f32 %v1680, %v2445
    %v2458 = vadd.f32 %v1681, %v2450
    %v2459 = vadd.f32 %v1682, %v2453
    %s2460 = scalar_lea.vmem %s3, 1
    %v2461 = vld [vmem:[%s2460] sm:$0x1]
    %s2462 = scalar_lea.vmem %s4, 1
    %v2463 = vld [vmem:[%s2462] sm:$0x1]
    %2464 = vadd.xlane.f32.xlu0 %v2456
    %v2465 = vpop.xlane.xlu0 %2464
    %2466 = vadd.xlane.f32.xlu0 %v2457
    %v2467 = vpop.xlane.xlu0 %2466
    %2468 = vadd.xlane.f32.xlu0 %v2458
    %v2469 = vpop.xlane.xlu0 %2468
    %2470 = vadd.xlane.f32.xlu0 %v2459
    %v2471 = vpop.xlane.xlu0 %2470
    %v2472 = vmul.f32 %v2465, %v313
    %v2473 = vmul.f32 %v2467, %v313
    %v2474 = vmul.f32 %v2469, %v313
    %v2475 = vmul.f32 %v2471, %v313
    %v2476 = vsub.f32 %v2456, %v2472
    %v2477 = vsub.f32 %v2457, %v2473
    %v2478 = vsub.f32 %v2458, %v2474
    %v2479 = vsub.f32 %v2459, %v2475
    %v2480 = vmul.f32 %v2476, %v2476
    %v2481 = vmul.f32 %v2477, %v2477
    %v2482 = vmul.f32 %v2478, %v2478
    %v2483 = vmul.f32 %v2479, %v2479
    %2484 = vadd.xlane.f32.xlu0 %v2480
    %v2485 = vpop.xlane.xlu0 %2484
    %2486 = vadd.xlane.f32.xlu0 %v2481
    %v2487 = vpop.xlane.xlu0 %2486
    %2488 = vadd.xlane.f32.xlu0 %v2482
    %v2489 = vpop.xlane.xlu0 %2488
    %2490 = vadd.xlane.f32.xlu0 %v2483
    %v2491 = vpop.xlane.xlu0 %2490
    %v2492 = vmul.f32 %v2485, %v313
    %v2493 = vmul.f32 %v2487, %v313
    %v2494 = vmul.f32 %v2489, %v313
    %v2495 = vmul.f32 %v2491, %v313
    %v2496 = vadd.f32 %v2492, 1e-05
    %v2497 = vadd.f32 %v2493, 1e-05
    %v2498 = vadd.f32 %v2494, 1e-05
    %v2499 = vadd.f32 %v2495, 1e-05
    %v2500 = vrsqrt.pop %v2496
    %v2501 = vrsqrt.pop %v2497
    %v2502 = vrsqrt.pop %v2498
    %v2503 = vrsqrt.pop %v2499
    %v2504 = vmul.f32 %v2476, %v2500
    %v2505 = vmul.f32 %v2477, %v2501
    %v2506 = vmul.f32 %v2478, %v2502
    %v2507 = vmul.f32 %v2479, %v2503
    %v2509 = vlaneseq
    %v2510 = vshrl.u32 %v2509, 7
    %v2511 = vsub.s32 0, %v2510
    %v2512 = vrot.slane %v2461, %v2511
    %v2514 = vmul.f32 %v2504, %v2512
    %v2515 = vmul.f32 %v2505, %v2512
    %v2516 = vmul.f32 %v2506, %v2512
    %v2517 = vmul.f32 %v2507, %v2512
    %v2519 = vlaneseq
    %v2520 = vshrl.u32 %v2519, 7
    %v2521 = vsub.s32 0, %v2520
    %v2522 = vrot.slane %v2463, %v2521
    %v2524 = vadd.f32 %v2514, %v2522
    %v2525 = vadd.f32 %v2515, %v2522
    %v2526 = vadd.f32 %v2516, %v2522
    %v2527 = vadd.f32 %v2517, %v2522
    %v2528 = vpack.c.bf16 %v2525, %v2524
    %v2529 = vpack.c.bf16 %v2527, %v2526
    %s2530 = scalar_lea.vmem [#allocation5], 192
    %v2531 = vld [vmem:[%s2530] sm:$0xff]
    %v2532 = vld [vmem:[%s2530 + $0x8] sm:$0xf]
    %v2533 = vld [vmem:[%s2530 + $0xc] sm:$0xff]
    %v2534 = vld [vmem:[%s2530 + $0x14] sm:$0xf]
    %v2535 = vld [vmem:[%s2530 + $0x18] sm:$0xff]
    %v2536 = vld [vmem:[%s2530 + $0x20] sm:$0xf]
    %v2537 = vld [vmem:[%s2530 + $0x24] sm:$0xff]
    %v2538 = vld [vmem:[%s2530 + $0x2c] sm:$0xf]
    %v2539 = vld [vmem:[%s2530 + $0x30] sm:$0xff]
    %v2540 = vld [vmem:[%s2530 + $0x38] sm:$0xf]
    %v2541 = vld [vmem:[%s2530 + $0x3c] sm:$0xff]
    %v2542 = vld [vmem:[%s2530 + $0x44] sm:$0xf]
    %v2543 = vld [vmem:[%s2530 + $0x48] sm:$0xff]
    %v2544 = vld [vmem:[%s2530 + $0x50] sm:$0xf]
    %v2545 = vld [vmem:[%s2530 + $0x54] sm:$0xff]
    %v2546 = vld [vmem:[%s2530 + $0x5c] sm:$0xf]
    %v2547 = vld [vmem:[%s2530 + $0x60] sm:$0xff]
    %v2548 = vld [vmem:[%s2530 + $0x68] sm:$0xf]
    %v2549 = vld [vmem:[%s2530 + $0x6c] sm:$0xff]
    %v2550 = vld [vmem:[%s2530 + $0x74] sm:$0xf]
    %v2551 = vld [vmem:[%s2530 + $0x78] sm:$0xff]
    %v2552 = vld [vmem:[%s2530 + $0x80] sm:$0xf]
    %v2553 = vld [vmem:[%s2530 + $0x84] sm:$0xff]
    %v2554 = vld [vmem:[%s2530 + $0x8c] sm:$0xf]
    %v2555 = vld [vmem:[%s2530 + $0x90] sm:$0xff]
    %v2556 = vld [vmem:[%s2530 + $0x98] sm:$0xf]
    %v2557 = vld [vmem:[%s2530 + $0x9c] sm:$0xff]
    %v2558 = vld [vmem:[%s2530 + $0xa4] sm:$0xf]
    %v2559 = vld [vmem:[%s2530 + $0xa8] sm:$0xff]
    %v2560 = vld [vmem:[%s2530 + $0xb0] sm:$0xf]
    %v2561 = vld [vmem:[%s2530 + $0xb4] sm:$0xff]
    %v2562 = vld [vmem:[%s2530 + $0xbc] sm:$0xf]
    %v2595 = vunpack.c.l.b16 %v2531
    %v2596 = vunpack.c.h.b16 %v2531
    %v2597 = vunpack.c.l.b16 %v2532
    %v2598 = vunpack.c.l.b16 %v2533
    %v2599 = vunpack.c.h.b16 %v2533
    %v2600 = vunpack.c.l.b16 %v2534
    %v2601 = vunpack.c.l.b16 %v2535
    %v2602 = vunpack.c.h.b16 %v2535
    %v2603 = vunpack.c.l.b16 %v2536
    %v2604 = vunpack.c.l.b16 %v2537
    %v2605 = vunpack.c.h.b16 %v2537
    %v2606 = vunpack.c.l.b16 %v2538
    %v2607 = vunpack.c.l.b16 %v2539
    %v2608 = vunpack.c.h.b16 %v2539
    %v2609 = vunpack.c.l.b16 %v2540
    %v2610 = vunpack.c.l.b16 %v2541
    %v2611 = vunpack.c.h.b16 %v2541
    %v2612 = vunpack.c.l.b16 %v2542
    %v2613 = vunpack.c.l.b16 %v2543
    %v2614 = vunpack.c.h.b16 %v2543
    %v2615 = vunpack.c.l.b16 %v2544
    %v2616 = vunpack.c.l.b16 %v2545
    %v2617 = vunpack.c.h.b16 %v2545
    %v2618 = vunpack.c.l.b16 %v2546
    %v2619 = vunpack.c.l.b16 %v2547
    %v2620 = vunpack.c.h.b16 %v2547
    %v2621 = vunpack.c.l.b16 %v2548
    %v2622 = vunpack.c.l.b16 %v2549
    %v2623 = vunpack.c.h.b16 %v2549
    %v2624 = vunpack.c.l.b16 %v2550
    %v2625 = vunpack.c.l.b16 %v2551
    %v2626 = vunpack.c.h.b16 %v2551
    %v2627 = vunpack.c.l.b16 %v2552
    %v2628 = vunpack.c.l.b16 %v2553
    %v2629 = vunpack.c.h.b16 %v2553
    %v2630 = vunpack.c.l.b16 %v2554
    %v2631 = vunpack.c.l.b16 %v2555
    %v2632 = vunpack.c.h.b16 %v2555
    %v2633 = vunpack.c.l.b16 %v2556
    %v2634 = vunpack.c.l.b16 %v2557
    %v2635 = vunpack.c.h.b16 %v2557
    %v2636 = vunpack.c.l.b16 %v2558
    %v2637 = vunpack.c.l.b16 %v2559
    %v2638 = vunpack.c.h.b16 %v2559
    %v2639 = vunpack.c.l.b16 %v2560
    %v2640 = vunpack.c.l.b16 %v2561
    %v2641 = vunpack.c.h.b16 %v2561
    %v2642 = vunpack.c.l.b16 %v2562
    %v2643 = vpack.c.b16 %v2598, %v2595
    %v2644 = vpack.c.b16 %v2599, %v2596
    %v2645 = vpack.c.b16 %v2600, %v2597
    %v2646 = vpack.c.b16 %v2604, %v2601
    %v2647 = vpack.c.b16 %v2605, %v2602
    %v2648 = vpack.c.b16 %v2606, %v2603
    %v2649 = vpack.c.b16 %v2610, %v2607
    %v2650 = vpack.c.b16 %v2611, %v2608
    %v2651 = vpack.c.b16 %v2612, %v2609
    %v2652 = vpack.c.b16 %v2616, %v2613
    %v2653 = vpack.c.b16 %v2617, %v2614
    %v2654 = vpack.c.b16 %v2618, %v2615
    %v2655 = vpack.c.b16 %v2622, %v2619
    %v2656 = vpack.c.b16 %v2623, %v2620
    %v2657 = vpack.c.b16 %v2624, %v2621
    %v2658 = vpack.c.b16 %v2628, %v2625
    %v2659 = vpack.c.b16 %v2629, %v2626
    %v2660 = vpack.c.b16 %v2630, %v2627
    %v2661 = vpack.c.b16 %v2634, %v2631
    %v2662 = vpack.c.b16 %v2635, %v2632
    %v2663 = vpack.c.b16 %v2636, %v2633
    %v2664 = vpack.c.b16 %v2640, %v2637
    %v2665 = vpack.c.b16 %v2641, %v2638
    %v2666 = vpack.c.b16 %v2642, %v2639
    %2691 = vmatprep.subr.bf16.mxu0 %v2665
    %2692 = vmatpush1.bf16.msra.mxu0 %v2664
    %2693 = vmatprep.subr.bf16.mxu0 %v2662
    %2694 = vmatpush1.bf16.msra.mxu0 %v2661
    %2695 = vmatprep.subr.bf16.mxu0 %v2659
    %2696 = vmatpush1.bf16.msra.mxu0 %v2658
    %2697 = vmatprep.subr.bf16.mxu0 %v2656
    %2698 = vmatpush1.bf16.msra.mxu0 %v2655
    %2699 = vmatprep.subr.bf16.mxu0 %v2653
    %2700 = vmatpush1.bf16.msra.mxu0 %v2652
    %2701 = vmatprep.subr.bf16.mxu0 %v2650
    %2702 = vmatpush1.bf16.msra.mxu0 %v2649
    %2703 = vmatprep.subr.bf16.mxu0 %v2647
    %2704 = vmatpush1.bf16.msra.mxu0 %v2646
    %2705 = vmatprep.subr.bf16.mxu0 %v2644
    %2706 = vmatpush1.bf16.msra.mxu0 %v2643
    %2707 = vmatprep.subr.bf16.mxu0 0
    %2708 = vmatpush2.bf16.msra.mxu0 0
    %2709 = vmatprep.subr.bf16.mxu0 0
    %2710 = vmatpush2.bf16.msra.mxu0 0
    %2711 = vmatprep.subr.bf16.mxu0 0
    %2712 = vmatpush2.bf16.msra.mxu0 0
    %2713 = vmatprep.subr.bf16.mxu0 0
    %2714 = vmatpush2.bf16.msra.mxu0 0
    %2715 = vmatprep.subr.bf16.mxu0 0
    %2716 = vmatpush2.bf16.msra.mxu0 0
    %2717 = vmatprep.subr.bf16.mxu0 0
    %2718 = vmatpush2.bf16.msra.mxu0 0
    %2719 = vmatprep.subr.bf16.mxu0 0
    %2720 = vmatpush2.bf16.msra.mxu0 0
    %2721 = vmatprep.subr.bf16.mxu0 0
    %2722 = vmatpush2.bf16.msra.mxu0 0
    %2723 = vmatprep.mubr.bf16.mxu0 0
    %2724 = vmatmul.mubr.bf16.gmra.mxu0 %v2528
    %v2725 = vpop.f32.mrf.mxu0
    %v2726 = vadd.f32 0.0, %v2725
    %v2727 = vpop.f32.mrf.mxu0
    %v2728 = vadd.f32 0.0, %v2727
    %v2729 = vpop.f32.mrf.mxu0
    %v2730 = vadd.f32 0.0, %v2729
    %v2731 = vpop.f32.mrf.mxu0
    %v2732 = vadd.f32 0.0, %v2731
    %2733 = vmatprep.mubr.bf16.mxu0 0
    %2734 = vmatmul.mubr.bf16.gmra.mxu0 %v2529
    %v2735 = vpop.f32.mrf.mxu0
    %v2736 = vadd.f32 0.0, %v2735
    %v2737 = vpop.f32.mrf.mxu0
    %v2738 = vadd.f32 0.0, %v2737
    %v2739 = vpop.f32.mrf.mxu0
    %v2740 = vadd.f32 0.0, %v2739
    %v2741 = vpop.f32.mrf.mxu0
    %v2742 = vadd.f32 0.0, %v2741
    %2743 = vdwg.mxu0
    %2744 = vmatprep.subr.bf16.mxu0 0
    %2745 = vmatpush1.bf16.msra.mxu0 %v2666
    %2746 = vmatprep.subr.bf16.mxu0 0
    %2747 = vmatpush1.bf16.msra.mxu0 %v2663
    %2748 = vmatprep.subr.bf16.mxu0 0
    %2749 = vmatpush1.bf16.msra.mxu0 %v2660
    %2750 = vmatprep.subr.bf16.mxu0 0
    %2751 = vmatpush1.bf16.msra.mxu0 %v2657
    %2752 = vmatprep.subr.bf16.mxu0 0
    %2753 = vmatpush1.bf16.msra.mxu0 %v2654
    %2754 = vmatprep.subr.bf16.mxu0 0
    %2755 = vmatpush1.bf16.msra.mxu0 %v2651
    %2756 = vmatprep.subr.bf16.mxu0 0
    %2757 = vmatpush1.bf16.msra.mxu0 %v2648
    %2758 = vmatprep.subr.bf16.mxu0 0
    %2759 = vmatpush1.bf16.msra.mxu0 %v2645
    %2760 = vmatprep.subr.bf16.mxu0 0
    %2761 = vmatpush2.bf16.msra.mxu0 0
    %2762 = vmatprep.subr.bf16.mxu0 0
    %2763 = vmatpush2.bf16.msra.mxu0 0
    %2764 = vmatprep.subr.bf16.mxu0 0
    %2765 = vmatpush2.bf16.msra.mxu0 0
    %2766 = vmatprep.subr.bf16.mxu0 0
    %2767 = vmatpush2.bf16.msra.mxu0 0
    %2768 = vmatprep.subr.bf16.mxu0 0
    %2769 = vmatpush2.bf16.msra.mxu0 0
    %2770 = vmatprep.subr.bf16.mxu0 0
    %2771 = vmatpush2.bf16.msra.mxu0 0
    %2772 = vmatprep.subr.bf16.mxu0 0
    %2773 = vmatpush2.bf16.msra.mxu0 0
    %2774 = vmatprep.subr.bf16.mxu0 0
    %2775 = vmatpush2.bf16.msra.mxu0 0
    %2776 = vmatprep.mubr.bf16.mxu0 0
    %2777 = vmatmul.mubr.bf16.gmra.mxu0 %v2528
    %v2778 = vpop.f32.mrf.mxu0
    %v2779 = vadd.f32 0.0, %v2778
    %v2780 = vpop.f32.mrf.mxu0
    %v2781 = vpop.f32.mrf.mxu0
    %v2782 = vadd.f32 0.0, %v2781
    %v2783 = vpop.f32.mrf.mxu0
    %2784 = vmatprep.mubr.bf16.mxu0 0
    %2785 = vmatmul.mubr.bf16.gmra.mxu0 %v2529
    %v2786 = vpop.f32.mrf.mxu0
    %v2787 = vadd.f32 0.0, %v2786
    %v2788 = vpop.f32.mrf.mxu0
    %v2789 = vpop.f32.mrf.mxu0
    %v2790 = vadd.f32 0.0, %v2789
    %v2791 = vpop.f32.mrf.mxu0
    %2792 = vdwg.mxu0
    %v2793 = vpack.c.bf16 %v2732, %v2728
    %v2794 = vmul.f32 %v2726, %v287
    %v2795 = vmul.f32 %v2730, %v287
    %v2796 = vpack.c.bf16 %v2795, %v2794
    %2797 = vmatprep.subr.bf16.mxu0 0
    %2798 = vmatpush1.bf16.xpose.msra.mxu0 0
    %2799 = vmatprep.subr.bf16.mxu0 0
    %2800 = vmatpush1.bf16.xpose.msra.mxu0 0
    %2801 = vmatprep.subr.bf16.mxu0 0
    %2802 = vmatpush1.bf16.xpose.msra.mxu0 0
    %2803 = vmatprep.subr.bf16.mxu0 0
    %2804 = vmatpush1.bf16.xpose.msra.mxu0 0
    %2805 = vmatprep.subr.bf16.mxu0 0
    %2806 = vmatpush1.bf16.xpose.msra.mxu0 0
    %2807 = vmatprep.subr.bf16.mxu0 0
    %2808 = vmatpush1.bf16.xpose.msra.mxu0 0
    %2809 = vmatprep.subr.bf16.mxu0 0
    %2810 = vmatpush1.bf16.xpose.msra.mxu0 0
    %2811 = vmatprep.subr.bf16.mxu0 0
    %2812 = vmatpush1.bf16.xpose.msra.mxu0 %v2793
    %2813 = vmatprep.subr.bf16.mxu0 0
    %2814 = vmatpush2.bf16.xpose.msra.mxu0 0
    %2815 = vmatprep.subr.bf16.mxu0 0
    %2816 = vmatpush2.bf16.xpose.msra.mxu0 0
    %2817 = vmatprep.subr.bf16.mxu0 0
    %2818 = vmatpush2.bf16.xpose.msra.mxu0 0
    %2819 = vmatprep.subr.bf16.mxu0 0
    %2820 = vmatpush2.bf16.xpose.msra.mxu0 0
    %2821 = vmatprep.subr.bf16.mxu0 0
    %2822 = vmatpush2.bf16.xpose.msra.mxu0 0
    %2823 = vmatprep.subr.bf16.mxu0 0
    %2824 = vmatpush2.bf16.xpose.msra.mxu0 0
    %2825 = vmatprep.subr.bf16.mxu0 0
    %2826 = vmatpush2.bf16.xpose.msra.mxu0 0
    %2827 = vmatprep.subr.bf16.mxu0 0
    %2828 = vmatpush2.bf16.xpose.msra.mxu0 0
    %2829 = vmatprep.mubr.bf16.mxu0 0
    %2830 = vmatmul.mubr.bf16.gmra.mxu0 %v2796
    %v2831 = vpop.f32.mrf.mxu0
    %v2832 = vadd.f32 %v281, %v2831
    %v2833 = vpop.f32.mrf.mxu0
    %v2834 = vpop.f32.mrf.mxu0
    %v2835 = vadd.f32 %v282, %v2834
    %v2836 = vpop.f32.mrf.mxu0
    %2837 = vdwg.mxu0
    %v2838 = vsel %vm679, %v2832, -inf
    %2839 = vmax.xlane.f32.xlu0 %v2838
    %v2840 = vpop.xlane.xlu0 %2839
    %v2841 = vsel %vm679, %v2835, -inf
    %2842 = vmax.xlane.f32.xlu0 %v2841
    %v2843 = vpop.xlane.xlu0 %2842
    %v2844 = vsub.f32 %v2832, %v2840
    %v2845 = vsub.f32 %v2835, %v2843
    %v2846 = vmul.f32 %v2844, 1.442695
    %v2847 = vpow.pop %v2846
    %v2848 = vmul.f32 %v2845, 1.442695
    %v2849 = vpow.pop %v2848
    %v2850 = vsel %vm679, %v2847, 0.0
    %2851 = vadd.xlane.f32.xlu0 %v2850
    %v2852 = vpop.xlane.xlu0 %2851
    %v2853 = vsel %vm679, %v2849, 0.0
    %2854 = vadd.xlane.f32.xlu0 %v2853
    %v2855 = vpop.xlane.xlu0 %2854
    %v2856 = vrcp.pop %v2852
    %v2857 = vrcp.pop %v2855
    %v2858 = vmul.f32 %v2847, %v2856
    %v2859 = vmul.f32 %v2849, %v2857
    %v2860 = vmul.f32 %v2779, %v287
    %v2861 = vmul.f32 %v2782, %v287
    %v2862 = vpack.c.bf16 %v2861, %v2860
    %v2863 = vpack.c.bf16 %v2859, %v2858
    %v2864 = vmul.f32 %v2726, %v292
    %v2865 = vmul.f32 %v2730, %v292
    %v2866 = vpack.c.bf16 %v2865, %v2864
    %2867 = vmatprep.subr.bf16.mxu0 0
    %2868 = vmatpush1.bf16.xpose.msra.mxu0 0
    %2869 = vmatprep.subr.bf16.mxu0 0
    %2870 = vmatpush1.bf16.xpose.msra.mxu0 0
    %2871 = vmatprep.subr.bf16.mxu0 0
    %2872 = vmatpush1.bf16.xpose.msra.mxu0 0
    %2873 = vmatprep.subr.bf16.mxu0 0
    %2874 = vmatpush1.bf16.xpose.msra.mxu0 0
    %2875 = vmatprep.subr.bf16.mxu0 0
    %2876 = vmatpush1.bf16.xpose.msra.mxu0 0
    %2877 = vmatprep.subr.bf16.mxu0 0
    %2878 = vmatpush1.bf16.xpose.msra.mxu0 0
    %2879 = vmatprep.subr.bf16.mxu0 0
    %2880 = vmatpush1.bf16.xpose.msra.mxu0 0
    %2881 = vmatprep.subr.bf16.mxu0 0
    %2882 = vmatpush1.bf16.xpose.msra.mxu0 %v2793
    %2883 = vmatprep.subr.bf16.mxu0 0
    %2884 = vmatpush2.bf16.xpose.msra.mxu0 0
    %2885 = vmatprep.subr.bf16.mxu0 0
    %2886 = vmatpush2.bf16.xpose.msra.mxu0 0
    %2887 = vmatprep.subr.bf16.mxu0 0
    %2888 = vmatpush2.bf16.xpose.msra.mxu0 0
    %2889 = vmatprep.subr.bf16.mxu0 0
    %2890 = vmatpush2.bf16.xpose.msra.mxu0 0
    %2891 = vmatprep.subr.bf16.mxu0 0
    %2892 = vmatpush2.bf16.xpose.msra.mxu0 0
    %2893 = vmatprep.subr.bf16.mxu0 0
    %2894 = vmatpush2.bf16.xpose.msra.mxu0 0
    %2895 = vmatprep.subr.bf16.mxu0 0
    %2896 = vmatpush2.bf16.xpose.msra.mxu0 0
    %2897 = vmatprep.subr.bf16.mxu0 0
    %2898 = vmatpush2.bf16.xpose.msra.mxu0 0
    %2899 = vmatprep.mubr.bf16.mxu0 0
    %2900 = vmatmul.mubr.bf16.gmra.mxu0 %v2866
    %v2901 = vpop.f32.mrf.mxu0
    %v2902 = vadd.f32 %v281, %v2901
    %v2903 = vpop.f32.mrf.mxu0
    %v2904 = vpop.f32.mrf.mxu0
    %v2905 = vadd.f32 %v282, %v2904
    %v2906 = vpop.f32.mrf.mxu0
    %2907 = vdwg.mxu0
    %v2908 = vsel %vm679, %v2902, -inf
    %2909 = vmax.xlane.f32.xlu0 %v2908
    %v2910 = vpop.xlane.xlu0 %2909
    %v2911 = vsel %vm679, %v2905, -inf
    %2912 = vmax.xlane.f32.xlu0 %v2911
    %v2913 = vpop.xlane.xlu0 %2912
    %v2914 = vsub.f32 %v2902, %v2910
    %v2915 = vsub.f32 %v2905, %v2913
    %v2916 = vmul.f32 %v2914, 1.442695
    %v2917 = vpow.pop %v2916
    %v2918 = vmul.f32 %v2915, 1.442695
    %v2919 = vpow.pop %v2918
    %v2920 = vsel %vm679, %v2917, 0.0
    %2921 = vadd.xlane.f32.xlu0 %v2920
    %v2922 = vpop.xlane.xlu0 %2921
    %v2923 = vsel %vm679, %v2919, 0.0
    %2924 = vadd.xlane.f32.xlu0 %v2923
    %v2925 = vpop.xlane.xlu0 %2924
    %v2926 = vrcp.pop %v2922
    %v2927 = vrcp.pop %v2925
    %v2928 = vmul.f32 %v2917, %v2926
    %v2929 = vmul.f32 %v2919, %v2927
    %v2930 = vmul.f32 %v2779, %v292
    %v2931 = vmul.f32 %v2782, %v292
    %v2932 = vpack.c.bf16 %v2931, %v2930
    %v2933 = vpack.c.bf16 %v2929, %v2928
    %v2935 = vsel %vm679, %v2933, 0
    %2937 = vmatprep.subr.bf16.mxu0 0
    %2938 = vmatpush1.bf16.msra.mxu0 0
    %2939 = vmatprep.subr.bf16.mxu0 0
    %2940 = vmatpush1.bf16.msra.mxu0 0
    %2941 = vmatprep.subr.bf16.mxu0 0
    %2942 = vmatpush1.bf16.msra.mxu0 0
    %2943 = vmatprep.subr.bf16.mxu0 0
    %2944 = vmatpush1.bf16.msra.mxu0 0
    %2945 = vmatprep.subr.bf16.mxu0 0
    %2946 = vmatpush1.bf16.msra.mxu0 0
    %2947 = vmatprep.subr.bf16.mxu0 0
    %2948 = vmatpush1.bf16.msra.mxu0 0
    %2949 = vmatprep.subr.bf16.mxu0 0
    %2950 = vmatpush1.bf16.msra.mxu0 0
    %2951 = vmatprep.subr.bf16.mxu0 0
    %2952 = vmatpush1.bf16.msra.mxu0 %v2932
    %2953 = vmatprep.subr.bf16.mxu0 0
    %2954 = vmatpush2.bf16.msra.mxu0 0
    %2955 = vmatprep.subr.bf16.mxu0 0
    %2956 = vmatpush2.bf16.msra.mxu0 0
    %2957 = vmatprep.subr.bf16.mxu0 0
    %2958 = vmatpush2.bf16.msra.mxu0 0
    %2959 = vmatprep.subr.bf16.mxu0 0
    %2960 = vmatpush2.bf16.msra.mxu0 0
    %2961 = vmatprep.subr.bf16.mxu0 0
    %2962 = vmatpush2.bf16.msra.mxu0 0
    %2963 = vmatprep.subr.bf16.mxu0 0
    %2964 = vmatpush2.bf16.msra.mxu0 0
    %2965 = vmatprep.subr.bf16.mxu0 0
    %2966 = vmatpush2.bf16.msra.mxu0 0
    %2967 = vmatprep.subr.bf16.mxu0 0
    %2968 = vmatpush2.bf16.msra.mxu0 0
    %2969 = vmatprep.mubr.bf16.mxu0 0
    %2970 = vmatmul.mubr.bf16.gmra.mxu0 %v2935
    %v2971 = vpop.f32.mrf.mxu0
    %v2972 = vadd.f32 0.0, %v2971
    %v2973 = vpop.f32.mrf.mxu0
    %v2974 = vpop.f32.mrf.mxu0
    %v2975 = vadd.f32 0.0, %v2974
    %v2976 = vpop.f32.mrf.mxu0
    %2977 = vdwg.mxu0
    %v2979 = vsel %vm679, %v2863, 0
    %2981 = vmatprep.subr.bf16.mxu0 0
    %2982 = vmatpush1.bf16.msra.mxu0 0
    %2983 = vmatprep.subr.bf16.mxu0 0
    %2984 = vmatpush1.bf16.msra.mxu0 0
    %2985 = vmatprep.subr.bf16.mxu0 0
    %2986 = vmatpush1.bf16.msra.mxu0 0
    %2987 = vmatprep.subr.bf16.mxu0 0
    %2988 = vmatpush1.bf16.msra.mxu0 0
    %2989 = vmatprep.subr.bf16.mxu0 0
    %2990 = vmatpush1.bf16.msra.mxu0 0
    %2991 = vmatprep.subr.bf16.mxu0 0
    %2992 = vmatpush1.bf16.msra.mxu0 0
    %2993 = vmatprep.subr.bf16.mxu0 0
    %2994 = vmatpush1.bf16.msra.mxu0 0
    %2995 = vmatprep.subr.bf16.mxu0 0
    %2996 = vmatpush1.bf16.msra.mxu0 %v2862
    %2997 = vmatprep.subr.bf16.mxu0 0
    %2998 = vmatpush2.bf16.msra.mxu0 0
    %2999 = vmatprep.subr.bf16.mxu0 0
    %3000 = vmatpush2.bf16.msra.mxu0 0
    %3001 = vmatprep.subr.bf16.mxu0 0
    %3002 = vmatpush2.bf16.msra.mxu0 0
    %3003 = vmatprep.subr.bf16.mxu0 0
    %3004 = vmatpush2.bf16.msra.mxu0 0
    %3005 = vmatprep.subr.bf16.mxu0 0
    %3006 = vmatpush2.bf16.msra.mxu0 0
    %3007 = vmatprep.subr.bf16.mxu0 0
    %3008 = vmatpush2.bf16.msra.mxu0 0
    %3009 = vmatprep.subr.bf16.mxu0 0
    %3010 = vmatpush2.bf16.msra.mxu0 0
    %3011 = vmatprep.subr.bf16.mxu0 0
    %3012 = vmatpush2.bf16.msra.mxu0 0
    %3013 = vmatprep.mubr.bf16.mxu0 0
    %3014 = vmatmul.mubr.bf16.gmra.mxu0 %v2979
    %v3015 = vpop.f32.mrf.mxu0
    %v3016 = vadd.f32 %v2972, %v3015
    %v3017 = vpop.f32.mrf.mxu0
    %v3018 = vpop.f32.mrf.mxu0
    %v3019 = vadd.f32 %v2975, %v3018
    %v3020 = vpop.f32.mrf.mxu0
    %3021 = vdwg.mxu0
    %v3022 = vmul.f32 %v2726, %v297
    %v3023 = vmul.f32 %v2730, %v297
    %v3024 = vpack.c.bf16 %v3023, %v3022
    %3025 = vmatprep.subr.bf16.mxu0 0
    %3026 = vmatpush1.bf16.xpose.msra.mxu0 0
    %3027 = vmatprep.subr.bf16.mxu0 0
    %3028 = vmatpush1.bf16.xpose.msra.mxu0 0
    %3029 = vmatprep.subr.bf16.mxu0 0
    %3030 = vmatpush1.bf16.xpose.msra.mxu0 0
    %3031 = vmatprep.subr.bf16.mxu0 0
    %3032 = vmatpush1.bf16.xpose.msra.mxu0 0
    %3033 = vmatprep.subr.bf16.mxu0 0
    %3034 = vmatpush1.bf16.xpose.msra.mxu0 0
    %3035 = vmatprep.subr.bf16.mxu0 0
    %3036 = vmatpush1.bf16.xpose.msra.mxu0 0
    %3037 = vmatprep.subr.bf16.mxu0 0
    %3038 = vmatpush1.bf16.xpose.msra.mxu0 0
    %3039 = vmatprep.subr.bf16.mxu0 0
    %3040 = vmatpush1.bf16.xpose.msra.mxu0 %v2793
    %3041 = vmatprep.subr.bf16.mxu0 0
    %3042 = vmatpush2.bf16.xpose.msra.mxu0 0
    %3043 = vmatprep.subr.bf16.mxu0 0
    %3044 = vmatpush2.bf16.xpose.msra.mxu0 0
    %3045 = vmatprep.subr.bf16.mxu0 0
    %3046 = vmatpush2.bf16.xpose.msra.mxu0 0
    %3047 = vmatprep.subr.bf16.mxu0 0
    %3048 = vmatpush2.bf16.xpose.msra.mxu0 0
    %3049 = vmatprep.subr.bf16.mxu0 0
    %3050 = vmatpush2.bf16.xpose.msra.mxu0 0
    %3051 = vmatprep.subr.bf16.mxu0 0
    %3052 = vmatpush2.bf16.xpose.msra.mxu0 0
    %3053 = vmatprep.subr.bf16.mxu0 0
    %3054 = vmatpush2.bf16.xpose.msra.mxu0 0
    %3055 = vmatprep.subr.bf16.mxu0 0
    %3056 = vmatpush2.bf16.xpose.msra.mxu0 0
    %3057 = vmatprep.mubr.bf16.mxu0 0
    %3058 = vmatmul.mubr.bf16.gmra.mxu0 %v3024
    %v3059 = vpop.f32.mrf.mxu0
    %v3060 = vadd.f32 %v281, %v3059
    %v3061 = vpop.f32.mrf.mxu0
    %v3062 = vpop.f32.mrf.mxu0
    %v3063 = vadd.f32 %v282, %v3062
    %v3064 = vpop.f32.mrf.mxu0
    %3065 = vdwg.mxu0
    %v3066 = vsel %vm679, %v3060, -inf
    %3067 = vmax.xlane.f32.xlu0 %v3066
    %v3068 = vpop.xlane.xlu0 %3067
    %v3069 = vsel %vm679, %v3063, -inf
    %3070 = vmax.xlane.f32.xlu0 %v3069
    %v3071 = vpop.xlane.xlu0 %3070
    %v3072 = vsub.f32 %v3060, %v3068
    %v3073 = vsub.f32 %v3063, %v3071
    %v3074 = vmul.f32 %v3072, 1.442695
    %v3075 = vpow.pop %v3074
    %v3076 = vmul.f32 %v3073, 1.442695
    %v3077 = vpow.pop %v3076
    %v3078 = vsel %vm679, %v3075, 0.0
    %3079 = vadd.xlane.f32.xlu0 %v3078
    %v3080 = vpop.xlane.xlu0 %3079
    %v3081 = vsel %vm679, %v3077, 0.0
    %3082 = vadd.xlane.f32.xlu0 %v3081
    %v3083 = vpop.xlane.xlu0 %3082
    %v3084 = vrcp.pop %v3080
    %v3085 = vrcp.pop %v3083
    %v3086 = vmul.f32 %v3075, %v3084
    %v3087 = vmul.f32 %v3077, %v3085
    %v3088 = vmul.f32 %v2779, %v297
    %v3089 = vmul.f32 %v2782, %v297
    %v3090 = vpack.c.bf16 %v3089, %v3088
    %v3091 = vpack.c.bf16 %v3087, %v3086
    %v3093 = vsel %vm679, %v3091, 0
    %3095 = vmatprep.subr.bf16.mxu0 0
    %3096 = vmatpush1.bf16.msra.mxu0 0
    %3097 = vmatprep.subr.bf16.mxu0 0
    %3098 = vmatpush1.bf16.msra.mxu0 0
    %3099 = vmatprep.subr.bf16.mxu0 0
    %3100 = vmatpush1.bf16.msra.mxu0 0
    %3101 = vmatprep.subr.bf16.mxu0 0
    %3102 = vmatpush1.bf16.msra.mxu0 0
    %3103 = vmatprep.subr.bf16.mxu0 0
    %3104 = vmatpush1.bf16.msra.mxu0 0
    %3105 = vmatprep.subr.bf16.mxu0 0
    %3106 = vmatpush1.bf16.msra.mxu0 0
    %3107 = vmatprep.subr.bf16.mxu0 0
    %3108 = vmatpush1.bf16.msra.mxu0 0
    %3109 = vmatprep.subr.bf16.mxu0 0
    %3110 = vmatpush1.bf16.msra.mxu0 %v3090
    %3111 = vmatprep.subr.bf16.mxu0 0
    %3112 = vmatpush2.bf16.msra.mxu0 0
    %3113 = vmatprep.subr.bf16.mxu0 0
    %3114 = vmatpush2.bf16.msra.mxu0 0
    %3115 = vmatprep.subr.bf16.mxu0 0
    %3116 = vmatpush2.bf16.msra.mxu0 0
    %3117 = vmatprep.subr.bf16.mxu0 0
    %3118 = vmatpush2.bf16.msra.mxu0 0
    %3119 = vmatprep.subr.bf16.mxu0 0
    %3120 = vmatpush2.bf16.msra.mxu0 0
    %3121 = vmatprep.subr.bf16.mxu0 0
    %3122 = vmatpush2.bf16.msra.mxu0 0
    %3123 = vmatprep.subr.bf16.mxu0 0
    %3124 = vmatpush2.bf16.msra.mxu0 0
    %3125 = vmatprep.subr.bf16.mxu0 0
    %3126 = vmatpush2.bf16.msra.mxu0 0
    %3127 = vmatprep.mubr.bf16.mxu0 0
    %3128 = vmatmul.mubr.bf16.gmra.mxu0 %v3093
    %v3129 = vpop.f32.mrf.mxu0
    %v3130 = vadd.f32 0.0, %v3129
    %v3131 = vpop.f32.mrf.mxu0
    %v3132 = vpop.f32.mrf.mxu0
    %v3133 = vadd.f32 0.0, %v3132
    %v3134 = vpop.f32.mrf.mxu0
    %3135 = vdwg.mxu0
    %v3136 = vadd.f32 %v3016, %v3130
    %v3137 = vadd.f32 %v3019, %v3133
    %v3138 = vmul.f32 %v2726, %v302
    %v3139 = vmul.f32 %v2730, %v302
    %v3140 = vpack.c.bf16 %v3139, %v3138
    %3141 = vmatprep.subr.bf16.mxu0 0
    %3142 = vmatpush1.bf16.xpose.msra.mxu0 0
    %3143 = vmatprep.subr.bf16.mxu0 0
    %3144 = vmatpush1.bf16.xpose.msra.mxu0 0
    %3145 = vmatprep.subr.bf16.mxu0 0
    %3146 = vmatpush1.bf16.xpose.msra.mxu0 0
    %3147 = vmatprep.subr.bf16.mxu0 0
    %3148 = vmatpush1.bf16.xpose.msra.mxu0 0
    %3149 = vmatprep.subr.bf16.mxu0 0
    %3150 = vmatpush1.bf16.xpose.msra.mxu0 0
    %3151 = vmatprep.subr.bf16.mxu0 0
    %3152 = vmatpush1.bf16.xpose.msra.mxu0 0
    %3153 = vmatprep.subr.bf16.mxu0 0
    %3154 = vmatpush1.bf16.xpose.msra.mxu0 0
    %3155 = vmatprep.subr.bf16.mxu0 0
    %3156 = vmatpush1.bf16.xpose.msra.mxu0 %v2793
    %3157 = vmatprep.subr.bf16.mxu0 0
    %3158 = vmatpush2.bf16.xpose.msra.mxu0 0
    %3159 = vmatprep.subr.bf16.mxu0 0
    %3160 = vmatpush2.bf16.xpose.msra.mxu0 0
    %3161 = vmatprep.subr.bf16.mxu0 0
    %3162 = vmatpush2.bf16.xpose.msra.mxu0 0
    %3163 = vmatprep.subr.bf16.mxu0 0
    %3164 = vmatpush2.bf16.xpose.msra.mxu0 0
    %3165 = vmatprep.subr.bf16.mxu0 0
    %3166 = vmatpush2.bf16.xpose.msra.mxu0 0
    %3167 = vmatprep.subr.bf16.mxu0 0
    %3168 = vmatpush2.bf16.xpose.msra.mxu0 0
    %3169 = vmatprep.subr.bf16.mxu0 0
    %3170 = vmatpush2.bf16.xpose.msra.mxu0 0
    %3171 = vmatprep.subr.bf16.mxu0 0
    %3172 = vmatpush2.bf16.xpose.msra.mxu0 0
    %3173 = vmatprep.mubr.bf16.mxu0 0
    %3174 = vmatmul.mubr.bf16.gmra.mxu0 %v3140
    %v3175 = vpop.f32.mrf.mxu0
    %v3176 = vadd.f32 %v281, %v3175
    %v3177 = vpop.f32.mrf.mxu0
    %v3178 = vpop.f32.mrf.mxu0
    %v3179 = vadd.f32 %v282, %v3178
    %v3180 = vpop.f32.mrf.mxu0
    %3181 = vdwg.mxu0
    %v3182 = vsel %vm679, %v3176, -inf
    %3183 = vmax.xlane.f32.xlu0 %v3182
    %v3184 = vpop.xlane.xlu0 %3183
    %v3185 = vsel %vm679, %v3179, -inf
    %3186 = vmax.xlane.f32.xlu0 %v3185
    %v3187 = vpop.xlane.xlu0 %3186
    %v3188 = vsub.f32 %v3176, %v3184
    %v3189 = vsub.f32 %v3179, %v3187
    %v3190 = vmul.f32 %v3188, 1.442695
    %v3191 = vpow.pop %v3190
    %v3192 = vmul.f32 %v3189, 1.442695
    %v3193 = vpow.pop %v3192
    %v3194 = vsel %vm679, %v3191, 0.0
    %3195 = vadd.xlane.f32.xlu0 %v3194
    %v3196 = vpop.xlane.xlu0 %3195
    %v3197 = vsel %vm679, %v3193, 0.0
    %3198 = vadd.xlane.f32.xlu0 %v3197
    %v3199 = vpop.xlane.xlu0 %3198
    %v3200 = vrcp.pop %v3196
    %v3201 = vrcp.pop %v3199
    %v3202 = vmul.f32 %v3191, %v3200
    %v3203 = vmul.f32 %v3193, %v3201
    %v3204 = vmul.f32 %v2779, %v302
    %v3205 = vmul.f32 %v2782, %v302
    %v3206 = vpack.c.bf16 %v3205, %v3204
    %v3207 = vpack.c.bf16 %v3203, %v3202
    %v3209 = vsel %vm679, %v3207, 0
    %3211 = vmatprep.subr.bf16.mxu0 0
    %3212 = vmatpush1.bf16.msra.mxu0 0
    %3213 = vmatprep.subr.bf16.mxu0 0
    %3214 = vmatpush1.bf16.msra.mxu0 0
    %3215 = vmatprep.subr.bf16.mxu0 0
    %3216 = vmatpush1.bf16.msra.mxu0 0
    %3217 = vmatprep.subr.bf16.mxu0 0
    %3218 = vmatpush1.bf16.msra.mxu0 0
    %3219 = vmatprep.subr.bf16.mxu0 0
    %3220 = vmatpush1.bf16.msra.mxu0 0
    %3221 = vmatprep.subr.bf16.mxu0 0
    %3222 = vmatpush1.bf16.msra.mxu0 0
    %3223 = vmatprep.subr.bf16.mxu0 0
    %3224 = vmatpush1.bf16.msra.mxu0 0
    %3225 = vmatprep.subr.bf16.mxu0 0
    %3226 = vmatpush1.bf16.msra.mxu0 %v3206
    %3227 = vmatprep.subr.bf16.mxu0 0
    %3228 = vmatpush2.bf16.msra.mxu0 0
    %3229 = vmatprep.subr.bf16.mxu0 0
    %3230 = vmatpush2.bf16.msra.mxu0 0
    %3231 = vmatprep.subr.bf16.mxu0 0
    %3232 = vmatpush2.bf16.msra.mxu0 0
    %3233 = vmatprep.subr.bf16.mxu0 0
    %3234 = vmatpush2.bf16.msra.mxu0 0
    %3235 = vmatprep.subr.bf16.mxu0 0
    %3236 = vmatpush2.bf16.msra.mxu0 0
    %3237 = vmatprep.subr.bf16.mxu0 0
    %3238 = vmatpush2.bf16.msra.mxu0 0
    %3239 = vmatprep.subr.bf16.mxu0 0
    %3240 = vmatpush2.bf16.msra.mxu0 0
    %3241 = vmatprep.subr.bf16.mxu0 0
    %3242 = vmatpush2.bf16.msra.mxu0 0
    %3243 = vmatprep.mubr.bf16.mxu0 0
    %3244 = vmatmul.mubr.bf16.gmra.mxu0 %v3209
    %v3245 = vpop.f32.mrf.mxu0
    %v3246 = vadd.f32 0.0, %v3245
    %v3247 = vpop.f32.mrf.mxu0
    %v3248 = vpop.f32.mrf.mxu0
    %v3249 = vadd.f32 0.0, %v3248
    %v3250 = vpop.f32.mrf.mxu0
    %3251 = vdwg.mxu0
    %v3252 = vadd.f32 %v3136, %v3246
    %v3253 = vadd.f32 %v3137, %v3249
    %v3254 = vpack.c.bf16 %v2742, %v2738
    %v3255 = vmul.f32 %v2736, %v287
    %v3256 = vmul.f32 %v2740, %v287
    %v3257 = vpack.c.bf16 %v3256, %v3255
    %3258 = vmatprep.subr.bf16.mxu0 0
    %3259 = vmatpush1.bf16.xpose.msra.mxu0 0
    %3260 = vmatprep.subr.bf16.mxu0 0
    %3261 = vmatpush1.bf16.xpose.msra.mxu0 0
    %3262 = vmatprep.subr.bf16.mxu0 0
    %3263 = vmatpush1.bf16.xpose.msra.mxu0 0
    %3264 = vmatprep.subr.bf16.mxu0 0
    %3265 = vmatpush1.bf16.xpose.msra.mxu0 0
    %3266 = vmatprep.subr.bf16.mxu0 0
    %3267 = vmatpush1.bf16.xpose.msra.mxu0 0
    %3268 = vmatprep.subr.bf16.mxu0 0
    %3269 = vmatpush1.bf16.xpose.msra.mxu0 0
    %3270 = vmatprep.subr.bf16.mxu0 0
    %3271 = vmatpush1.bf16.xpose.msra.mxu0 0
    %3272 = vmatprep.subr.bf16.mxu0 0
    %3273 = vmatpush1.bf16.xpose.msra.mxu0 %v3254
    %3274 = vmatprep.subr.bf16.mxu0 0
    %3275 = vmatpush2.bf16.xpose.msra.mxu0 0
    %3276 = vmatprep.subr.bf16.mxu0 0
    %3277 = vmatpush2.bf16.xpose.msra.mxu0 0
    %3278 = vmatprep.subr.bf16.mxu0 0
    %3279 = vmatpush2.bf16.xpose.msra.mxu0 0
    %3280 = vmatprep.subr.bf16.mxu0 0
    %3281 = vmatpush2.bf16.xpose.msra.mxu0 0
    %3282 = vmatprep.subr.bf16.mxu0 0
    %3283 = vmatpush2.bf16.xpose.msra.mxu0 0
    %3284 = vmatprep.subr.bf16.mxu0 0
    %3285 = vmatpush2.bf16.xpose.msra.mxu0 0
    %3286 = vmatprep.subr.bf16.mxu0 0
    %3287 = vmatpush2.bf16.xpose.msra.mxu0 0
    %3288 = vmatprep.subr.bf16.mxu0 0
    %3289 = vmatpush2.bf16.xpose.msra.mxu0 0
    %3290 = vmatprep.mubr.bf16.mxu0 0
    %3291 = vmatmul.mubr.bf16.gmra.mxu0 %v3257
    %v3292 = vpop.f32.mrf.mxu0
    %v3293 = vadd.f32 %v281, %v3292
    %v3294 = vpop.f32.mrf.mxu0
    %v3295 = vpop.f32.mrf.mxu0
    %v3296 = vadd.f32 %v282, %v3295
    %v3297 = vpop.f32.mrf.mxu0
    %3298 = vdwg.mxu0
    %v3299 = vsel %vm679, %v3293, -inf
    %3300 = vmax.xlane.f32.xlu0 %v3299
    %v3301 = vpop.xlane.xlu0 %3300
    %v3302 = vsel %vm679, %v3296, -inf
    %3303 = vmax.xlane.f32.xlu0 %v3302
    %v3304 = vpop.xlane.xlu0 %3303
    %v3305 = vsub.f32 %v3293, %v3301
    %v3306 = vsub.f32 %v3296, %v3304
    %v3307 = vmul.f32 %v3305, 1.442695
    %v3308 = vpow.pop %v3307
    %v3309 = vmul.f32 %v3306, 1.442695
    %v3310 = vpow.pop %v3309
    %v3311 = vsel %vm679, %v3308, 0.0
    %3312 = vadd.xlane.f32.xlu0 %v3311
    %v3313 = vpop.xlane.xlu0 %3312
    %v3314 = vsel %vm679, %v3310, 0.0
    %3315 = vadd.xlane.f32.xlu0 %v3314
    %v3316 = vpop.xlane.xlu0 %3315
    %v3317 = vrcp.pop %v3313
    %v3318 = vrcp.pop %v3316
    %v3319 = vmul.f32 %v3308, %v3317
    %v3320 = vmul.f32 %v3310, %v3318
    %v3321 = vmul.f32 %v2787, %v287
    %v3322 = vmul.f32 %v2790, %v287
    %v3323 = vpack.c.bf16 %v3322, %v3321
    %v3324 = vpack.c.bf16 %v3320, %v3319
    %v3325 = vmul.f32 %v2736, %v292
    %v3326 = vmul.f32 %v2740, %v292
    %v3327 = vpack.c.bf16 %v3326, %v3325
    %3328 = vmatprep.subr.bf16.mxu0 0
    %3329 = vmatpush1.bf16.xpose.msra.mxu0 0
    %3330 = vmatprep.subr.bf16.mxu0 0
    %3331 = vmatpush1.bf16.xpose.msra.mxu0 0
    %3332 = vmatprep.subr.bf16.mxu0 0
    %3333 = vmatpush1.bf16.xpose.msra.mxu0 0
    %3334 = vmatprep.subr.bf16.mxu0 0
    %3335 = vmatpush1.bf16.xpose.msra.mxu0 0
    %3336 = vmatprep.subr.bf16.mxu0 0
    %3337 = vmatpush1.bf16.xpose.msra.mxu0 0
    %3338 = vmatprep.subr.bf16.mxu0 0
    %3339 = vmatpush1.bf16.xpose.msra.mxu0 0
    %3340 = vmatprep.subr.bf16.mxu0 0
    %3341 = vmatpush1.bf16.xpose.msra.mxu0 0
    %3342 = vmatprep.subr.bf16.mxu0 0
    %3343 = vmatpush1.bf16.xpose.msra.mxu0 %v3254
    %3344 = vmatprep.subr.bf16.mxu0 0
    %3345 = vmatpush2.bf16.xpose.msra.mxu0 0
    %3346 = vmatprep.subr.bf16.mxu0 0
    %3347 = vmatpush2.bf16.xpose.msra.mxu0 0
    %3348 = vmatprep.subr.bf16.mxu0 0
    %3349 = vmatpush2.bf16.xpose.msra.mxu0 0
    %3350 = vmatprep.subr.bf16.mxu0 0
    %3351 = vmatpush2.bf16.xpose.msra.mxu0 0
    %3352 = vmatprep.subr.bf16.mxu0 0
    %3353 = vmatpush2.bf16.xpose.msra.mxu0 0
    %3354 = vmatprep.subr.bf16.mxu0 0
    %3355 = vmatpush2.bf16.xpose.msra.mxu0 0
    %3356 = vmatprep.subr.bf16.mxu0 0
    %3357 = vmatpush2.bf16.xpose.msra.mxu0 0
    %3358 = vmatprep.subr.bf16.mxu0 0
    %3359 = vmatpush2.bf16.xpose.msra.mxu0 0
    %3360 = vmatprep.mubr.bf16.mxu0 0
    %3361 = vmatmul.mubr.bf16.gmra.mxu0 %v3327
    %v3362 = vpop.f32.mrf.mxu0
    %v3363 = vadd.f32 %v281, %v3362
    %v3364 = vpop.f32.mrf.mxu0
    %v3365 = vpop.f32.mrf.mxu0
    %v3366 = vadd.f32 %v282, %v3365
    %v3367 = vpop.f32.mrf.mxu0
    %3368 = vdwg.mxu0
    %v3369 = vsel %vm679, %v3363, -inf
    %3370 = vmax.xlane.f32.xlu0 %v3369
    %v3371 = vpop.xlane.xlu0 %3370
    %v3372 = vsel %vm679, %v3366, -inf
    %3373 = vmax.xlane.f32.xlu0 %v3372
    %v3374 = vpop.xlane.xlu0 %3373
    %v3375 = vsub.f32 %v3363, %v3371
    %v3376 = vsub.f32 %v3366, %v3374
    %v3377 = vmul.f32 %v3375, 1.442695
    %v3378 = vpow.pop %v3377
    %v3379 = vmul.f32 %v3376, 1.442695
    %v3380 = vpow.pop %v3379
    %v3381 = vsel %vm679, %v3378, 0.0
    %3382 = vadd.xlane.f32.xlu0 %v3381
    %v3383 = vpop.xlane.xlu0 %3382
    %v3384 = vsel %vm679, %v3380, 0.0
    %3385 = vadd.xlane.f32.xlu0 %v3384
    %v3386 = vpop.xlane.xlu0 %3385
    %v3387 = vrcp.pop %v3383
    %v3388 = vrcp.pop %v3386
    %v3389 = vmul.f32 %v3378, %v3387
    %v3390 = vmul.f32 %v3380, %v3388
    %v3391 = vmul.f32 %v2787, %v292
    %v3392 = vmul.f32 %v2790, %v292
    %v3393 = vpack.c.bf16 %v3392, %v3391
    %v3394 = vpack.c.bf16 %v3390, %v3389
    %v3396 = vsel %vm679, %v3394, 0
    %3398 = vmatprep.subr.bf16.mxu0 0
    %3399 = vmatpush1.bf16.msra.mxu0 0
    %3400 = vmatprep.subr.bf16.mxu0 0
    %3401 = vmatpush1.bf16.msra.mxu0 0
    %3402 = vmatprep.subr.bf16.mxu0 0
    %3403 = vmatpush1.bf16.msra.mxu0 0
    %3404 = vmatprep.subr.bf16.mxu0 0
    %3405 = vmatpush1.bf16.msra.mxu0 0
    %3406 = vmatprep.subr.bf16.mxu0 0
    %3407 = vmatpush1.bf16.msra.mxu0 0
    %3408 = vmatprep.subr.bf16.mxu0 0
    %3409 = vmatpush1.bf16.msra.mxu0 0
    %3410 = vmatprep.subr.bf16.mxu0 0
    %3411 = vmatpush1.bf16.msra.mxu0 0
    %3412 = vmatprep.subr.bf16.mxu0 0
    %3413 = vmatpush1.bf16.msra.mxu0 %v3393
    %3414 = vmatprep.subr.bf16.mxu0 0
    %3415 = vmatpush2.bf16.msra.mxu0 0
    %3416 = vmatprep.subr.bf16.mxu0 0
    %3417 = vmatpush2.bf16.msra.mxu0 0
    %3418 = vmatprep.subr.bf16.mxu0 0
    %3419 = vmatpush2.bf16.msra.mxu0 0
    %3420 = vmatprep.subr.bf16.mxu0 0
    %3421 = vmatpush2.bf16.msra.mxu0 0
    %3422 = vmatprep.subr.bf16.mxu0 0
    %3423 = vmatpush2.bf16.msra.mxu0 0
    %3424 = vmatprep.subr.bf16.mxu0 0
    %3425 = vmatpush2.bf16.msra.mxu0 0
    %3426 = vmatprep.subr.bf16.mxu0 0
    %3427 = vmatpush2.bf16.msra.mxu0 0
    %3428 = vmatprep.subr.bf16.mxu0 0
    %3429 = vmatpush2.bf16.msra.mxu0 0
    %3430 = vmatprep.mubr.bf16.mxu0 0
    %3431 = vmatmul.mubr.bf16.gmra.mxu0 %v3396
    %v3432 = vpop.f32.mrf.mxu0
    %v3433 = vadd.f32 0.0, %v3432
    %v3434 = vpop.f32.mrf.mxu0
    %v3435 = vpop.f32.mrf.mxu0
    %v3436 = vadd.f32 0.0, %v3435
    %v3437 = vpop.f32.mrf.mxu0
    %3438 = vdwg.mxu0
    %v3440 = vsel %vm679, %v3324, 0
    %3442 = vmatprep.subr.bf16.mxu0 0
    %3443 = vmatpush1.bf16.msra.mxu0 0
    %3444 = vmatprep.subr.bf16.mxu0 0
    %3445 = vmatpush1.bf16.msra.mxu0 0
    %3446 = vmatprep.subr.bf16.mxu0 0
    %3447 = vmatpush1.bf16.msra.mxu0 0
    %3448 = vmatprep.subr.bf16.mxu0 0
    %3449 = vmatpush1.bf16.msra.mxu0 0
    %3450 = vmatprep.subr.bf16.mxu0 0
    %3451 = vmatpush1.bf16.msra.mxu0 0
    %3452 = vmatprep.subr.bf16.mxu0 0
    %3453 = vmatpush1.bf16.msra.mxu0 0
    %3454 = vmatprep.subr.bf16.mxu0 0
    %3455 = vmatpush1.bf16.msra.mxu0 0
    %3456 = vmatprep.subr.bf16.mxu0 0
    %3457 = vmatpush1.bf16.msra.mxu0 %v3323
    %3458 = vmatprep.subr.bf16.mxu0 0
    %3459 = vmatpush2.bf16.msra.mxu0 0
    %3460 = vmatprep.subr.bf16.mxu0 0
    %3461 = vmatpush2.bf16.msra.mxu0 0
    %3462 = vmatprep.subr.bf16.mxu0 0
    %3463 = vmatpush2.bf16.msra.mxu0 0
    %3464 = vmatprep.subr.bf16.mxu0 0
    %3465 = vmatpush2.bf16.msra.mxu0 0
    %3466 = vmatprep.subr.bf16.mxu0 0
    %3467 = vmatpush2.bf16.msra.mxu0 0
    %3468 = vmatprep.subr.bf16.mxu0 0
    %3469 = vmatpush2.bf16.msra.mxu0 0
    %3470 = vmatprep.subr.bf16.mxu0 0
    %3471 = vmatpush2.bf16.msra.mxu0 0
    %3472 = vmatprep.subr.bf16.mxu0 0
    %3473 = vmatpush2.bf16.msra.mxu0 0
    %3474 = vmatprep.mubr.bf16.mxu0 0
    %3475 = vmatmul.mubr.bf16.gmra.mxu0 %v3440
    %v3476 = vpop.f32.mrf.mxu0
    %v3477 = vadd.f32 %v3433, %v3476
    %v3478 = vpop.f32.mrf.mxu0
    %v3479 = vpop.f32.mrf.mxu0
    %v3480 = vadd.f32 %v3436, %v3479
    %v3481 = vpop.f32.mrf.mxu0
    %3482 = vdwg.mxu0
    %v3483 = vmul.f32 %v2736, %v297
    %v3484 = vmul.f32 %v2740, %v297
    %v3485 = vpack.c.bf16 %v3484, %v3483
    %3486 = vmatprep.subr.bf16.mxu0 0
    %3487 = vmatpush1.bf16.xpose.msra.mxu0 0
    %3488 = vmatprep.subr.bf16.mxu0 0
    %3489 = vmatpush1.bf16.xpose.msra.mxu0 0
    %3490 = vmatprep.subr.bf16.mxu0 0
    %3491 = vmatpush1.bf16.xpose.msra.mxu0 0
    %3492 = vmatprep.subr.bf16.mxu0 0
    %3493 = vmatpush1.bf16.xpose.msra.mxu0 0
    %3494 = vmatprep.subr.bf16.mxu0 0
    %3495 = vmatpush1.bf16.xpose.msra.mxu0 0
    %3496 = vmatprep.subr.bf16.mxu0 0
    %3497 = vmatpush1.bf16.xpose.msra.mxu0 0
    %3498 = vmatprep.subr.bf16.mxu0 0
    %3499 = vmatpush1.bf16.xpose.msra.mxu0 0
    %3500 = vmatprep.subr.bf16.mxu0 0
    %3501 = vmatpush1.bf16.xpose.msra.mxu0 %v3254
    %3502 = vmatprep.subr.bf16.mxu0 0
    %3503 = vmatpush2.bf16.xpose.msra.mxu0 0
    %3504 = vmatprep.subr.bf16.mxu0 0
    %3505 = vmatpush2.bf16.xpose.msra.mxu0 0
    %3506 = vmatprep.subr.bf16.mxu0 0
    %3507 = vmatpush2.bf16.xpose.msra.mxu0 0
    %3508 = vmatprep.subr.bf16.mxu0 0
    %3509 = vmatpush2.bf16.xpose.msra.mxu0 0
    %3510 = vmatprep.subr.bf16.mxu0 0
    %3511 = vmatpush2.bf16.xpose.msra.mxu0 0
    %3512 = vmatprep.subr.bf16.mxu0 0
    %3513 = vmatpush2.bf16.xpose.msra.mxu0 0
    %3514 = vmatprep.subr.bf16.mxu0 0
    %3515 = vmatpush2.bf16.xpose.msra.mxu0 0
    %3516 = vmatprep.subr.bf16.mxu0 0
    %3517 = vmatpush2.bf16.xpose.msra.mxu0 0
    %3518 = vmatprep.mubr.bf16.mxu0 0
    %3519 = vmatmul.mubr.bf16.gmra.mxu0 %v3485
    %v3520 = vpop.f32.mrf.mxu0
    %v3521 = vadd.f32 %v281, %v3520
    %v3522 = vpop.f32.mrf.mxu0
    %v3523 = vpop.f32.mrf.mxu0
    %v3524 = vadd.f32 %v282, %v3523
    %v3525 = vpop.f32.mrf.mxu0
    %3526 = vdwg.mxu0
    %v3527 = vsel %vm679, %v3521, -inf
    %3528 = vmax.xlane.f32.xlu0 %v3527
    %v3529 = vpop.xlane.xlu0 %3528
    %v3530 = vsel %vm679, %v3524, -inf
    %3531 = vmax.xlane.f32.xlu0 %v3530
    %v3532 = vpop.xlane.xlu0 %3531
    %v3533 = vsub.f32 %v3521, %v3529
    %v3534 = vsub.f32 %v3524, %v3532
    %v3535 = vmul.f32 %v3533, 1.442695
    %v3536 = vpow.pop %v3535
    %v3537 = vmul.f32 %v3534, 1.442695
    %v3538 = vpow.pop %v3537
    %v3539 = vsel %vm679, %v3536, 0.0
    %3540 = vadd.xlane.f32.xlu0 %v3539
    %v3541 = vpop.xlane.xlu0 %3540
    %v3542 = vsel %vm679, %v3538, 0.0
    %3543 = vadd.xlane.f32.xlu0 %v3542
    %v3544 = vpop.xlane.xlu0 %3543
    %v3545 = vrcp.pop %v3541
    %v3546 = vrcp.pop %v3544
    %v3547 = vmul.f32 %v3536, %v3545
    %v3548 = vmul.f32 %v3538, %v3546
    %v3549 = vmul.f32 %v2787, %v297
    %v3550 = vmul.f32 %v2790, %v297
    %v3551 = vpack.c.bf16 %v3550, %v3549
    %v3552 = vpack.c.bf16 %v3548, %v3547
    %v3554 = vsel %vm679, %v3552, 0
    %3556 = vmatprep.subr.bf16.mxu0 0
    %3557 = vmatpush1.bf16.msra.mxu0 0
    %3558 = vmatprep.subr.bf16.mxu0 0
    %3559 = vmatpush1.bf16.msra.mxu0 0
    %3560 = vmatprep.subr.bf16.mxu0 0
    %3561 = vmatpush1.bf16.msra.mxu0 0
    %3562 = vmatprep.subr.bf16.mxu0 0
    %3563 = vmatpush1.bf16.msra.mxu0 0
    %3564 = vmatprep.subr.bf16.mxu0 0
    %3565 = vmatpush1.bf16.msra.mxu0 0
    %3566 = vmatprep.subr.bf16.mxu0 0
    %3567 = vmatpush1.bf16.msra.mxu0 0
    %3568 = vmatprep.subr.bf16.mxu0 0
    %3569 = vmatpush1.bf16.msra.mxu0 0
    %3570 = vmatprep.subr.bf16.mxu0 0
    %3571 = vmatpush1.bf16.msra.mxu0 %v3551
    %3572 = vmatprep.subr.bf16.mxu0 0
    %3573 = vmatpush2.bf16.msra.mxu0 0
    %3574 = vmatprep.subr.bf16.mxu0 0
    %3575 = vmatpush2.bf16.msra.mxu0 0
    %3576 = vmatprep.subr.bf16.mxu0 0
    %3577 = vmatpush2.bf16.msra.mxu0 0
    %3578 = vmatprep.subr.bf16.mxu0 0
    %3579 = vmatpush2.bf16.msra.mxu0 0
    %3580 = vmatprep.subr.bf16.mxu0 0
    %3581 = vmatpush2.bf16.msra.mxu0 0
    %3582 = vmatprep.subr.bf16.mxu0 0
    %3583 = vmatpush2.bf16.msra.mxu0 0
    %3584 = vmatprep.subr.bf16.mxu0 0
    %3585 = vmatpush2.bf16.msra.mxu0 0
    %3586 = vmatprep.subr.bf16.mxu0 0
    %3587 = vmatpush2.bf16.msra.mxu0 0
    %3588 = vmatprep.mubr.bf16.mxu0 0
    %3589 = vmatmul.mubr.bf16.gmra.mxu0 %v3554
    %v3590 = vpop.f32.mrf.mxu0
    %v3591 = vadd.f32 0.0, %v3590
    %v3592 = vpop.f32.mrf.mxu0
    %v3593 = vpop.f32.mrf.mxu0
    %v3594 = vadd.f32 0.0, %v3593
    %v3595 = vpop.f32.mrf.mxu0
    %3596 = vdwg.mxu0
    %v3597 = vadd.f32 %v3477, %v3591
    %v3598 = vadd.f32 %v3480, %v3594
    %v3599 = vmul.f32 %v2736, %v302
    %v3600 = vmul.f32 %v2740, %v302
    %v3601 = vpack.c.bf16 %v3600, %v3599
    %3602 = vmatprep.subr.bf16.mxu0 0
    %3603 = vmatpush1.bf16.xpose.msra.mxu0 0
    %3604 = vmatprep.subr.bf16.mxu0 0
    %3605 = vmatpush1.bf16.xpose.msra.mxu0 0
    %3606 = vmatprep.subr.bf16.mxu0 0
    %3607 = vmatpush1.bf16.xpose.msra.mxu0 0
    %3608 = vmatprep.subr.bf16.mxu0 0
    %3609 = vmatpush1.bf16.xpose.msra.mxu0 0
    %3610 = vmatprep.subr.bf16.mxu0 0
    %3611 = vmatpush1.bf16.xpose.msra.mxu0 0
    %3612 = vmatprep.subr.bf16.mxu0 0
    %3613 = vmatpush1.bf16.xpose.msra.mxu0 0
    %3614 = vmatprep.subr.bf16.mxu0 0
    %3615 = vmatpush1.bf16.xpose.msra.mxu0 0
    %3616 = vmatprep.subr.bf16.mxu0 0
    %3617 = vmatpush1.bf16.xpose.msra.mxu0 %v3254
    %3618 = vmatprep.subr.bf16.mxu0 0
    %3619 = vmatpush2.bf16.xpose.msra.mxu0 0
    %3620 = vmatprep.subr.bf16.mxu0 0
    %3621 = vmatpush2.bf16.xpose.msra.mxu0 0
    %3622 = vmatprep.subr.bf16.mxu0 0
    %3623 = vmatpush2.bf16.xpose.msra.mxu0 0
    %3624 = vmatprep.subr.bf16.mxu0 0
    %3625 = vmatpush2.bf16.xpose.msra.mxu0 0
    %3626 = vmatprep.subr.bf16.mxu0 0
    %3627 = vmatpush2.bf16.xpose.msra.mxu0 0
    %3628 = vmatprep.subr.bf16.mxu0 0
    %3629 = vmatpush2.bf16.xpose.msra.mxu0 0
    %3630 = vmatprep.subr.bf16.mxu0 0
    %3631 = vmatpush2.bf16.xpose.msra.mxu0 0
    %3632 = vmatprep.subr.bf16.mxu0 0
    %3633 = vmatpush2.bf16.xpose.msra.mxu0 0
    %3634 = vmatprep.mubr.bf16.mxu0 0
    %3635 = vmatmul.mubr.bf16.gmra.mxu0 %v3601
    %v3636 = vpop.f32.mrf.mxu0
    %v3637 = vadd.f32 %v281, %v3636
    %v3638 = vpop.f32.mrf.mxu0
    %v3639 = vpop.f32.mrf.mxu0
    %v3640 = vadd.f32 %v282, %v3639
    %v3641 = vpop.f32.mrf.mxu0
    %3642 = vdwg.mxu0
    %v3643 = vsel %vm679, %v3637, -inf
    %3644 = vmax.xlane.f32.xlu0 %v3643
    %v3645 = vpop.xlane.xlu0 %3644
    %v3646 = vsel %vm679, %v3640, -inf
    %3647 = vmax.xlane.f32.xlu0 %v3646
    %v3648 = vpop.xlane.xlu0 %3647
    %v3649 = vsub.f32 %v3637, %v3645
    %v3650 = vsub.f32 %v3640, %v3648
    %v3651 = vmul.f32 %v3649, 1.442695
    %v3652 = vpow.pop %v3651
    %v3653 = vmul.f32 %v3650, 1.442695
    %v3654 = vpow.pop %v3653
    %v3655 = vsel %vm679, %v3652, 0.0
    %3656 = vadd.xlane.f32.xlu0 %v3655
    %v3657 = vpop.xlane.xlu0 %3656
    %v3658 = vsel %vm679, %v3654, 0.0
    %3659 = vadd.xlane.f32.xlu0 %v3658
    %v3660 = vpop.xlane.xlu0 %3659
    %v3661 = vrcp.pop %v3657
    %v3662 = vrcp.pop %v3660
    %v3663 = vmul.f32 %v3652, %v3661
    %v3664 = vmul.f32 %v3654, %v3662
    %v3665 = vmul.f32 %v2787, %v302
    %v3666 = vmul.f32 %v2790, %v302
    %v3667 = vpack.c.bf16 %v3666, %v3665
    %v3668 = vpack.c.bf16 %v3664, %v3663
    %v3670 = vsel %vm679, %v3668, 0
    %3672 = vmatprep.subr.bf16.mxu0 0
    %3673 = vmatpush1.bf16.msra.mxu0 0
    %3674 = vmatprep.subr.bf16.mxu0 0
    %3675 = vmatpush1.bf16.msra.mxu0 0
    %3676 = vmatprep.subr.bf16.mxu0 0
    %3677 = vmatpush1.bf16.msra.mxu0 0
    %3678 = vmatprep.subr.bf16.mxu0 0
    %3679 = vmatpush1.bf16.msra.mxu0 0
    %3680 = vmatprep.subr.bf16.mxu0 0
    %3681 = vmatpush1.bf16.msra.mxu0 0
    %3682 = vmatprep.subr.bf16.mxu0 0
    %3683 = vmatpush1.bf16.msra.mxu0 0
    %3684 = vmatprep.subr.bf16.mxu0 0
    %3685 = vmatpush1.bf16.msra.mxu0 0
    %3686 = vmatprep.subr.bf16.mxu0 0
    %3687 = vmatpush1.bf16.msra.mxu0 %v3667
    %3688 = vmatprep.subr.bf16.mxu0 0
    %3689 = vmatpush2.bf16.msra.mxu0 0
    %3690 = vmatprep.subr.bf16.mxu0 0
    %3691 = vmatpush2.bf16.msra.mxu0 0
    %3692 = vmatprep.subr.bf16.mxu0 0
    %3693 = vmatpush2.bf16.msra.mxu0 0
    %3694 = vmatprep.subr.bf16.mxu0 0
    %3695 = vmatpush2.bf16.msra.mxu0 0
    %3696 = vmatprep.subr.bf16.mxu0 0
    %3697 = vmatpush2.bf16.msra.mxu0 0
    %3698 = vmatprep.subr.bf16.mxu0 0
    %3699 = vmatpush2.bf16.msra.mxu0 0
    %3700 = vmatprep.subr.bf16.mxu0 0
    %3701 = vmatpush2.bf16.msra.mxu0 0
    %3702 = vmatprep.subr.bf16.mxu0 0
    %3703 = vmatpush2.bf16.msra.mxu0 0
    %3704 = vmatprep.mubr.bf16.mxu0 0
    %3705 = vmatmul.mubr.bf16.gmra.mxu0 %v3670
    %v3706 = vpop.f32.mrf.mxu0
    %v3707 = vadd.f32 0.0, %v3706
    %v3708 = vpop.f32.mrf.mxu0
    %v3709 = vpop.f32.mrf.mxu0
    %v3710 = vadd.f32 0.0, %v3709
    %v3711 = vpop.f32.mrf.mxu0
    %3712 = vdwg.mxu0
    %v3713 = vadd.f32 %v3597, %v3707
    %v3714 = vadd.f32 %v3598, %v3710
    %v3715 = vpack.c.bf16 %v3253, %v3252
    %v3716 = vpack.c.bf16 %v3714, %v3713
    %s3717 = scalar_lea.vmem [#allocation7], 64
    %v3718 = vld [vmem:[%s3717] sm:$0xf]
    %v3719 = vld [vmem:[%s3717 + $0x4] sm:$0xf]
    %v3720 = vld [vmem:[%s3717 + $0x8] sm:$0xf]
    %v3721 = vld [vmem:[%s3717 + $0xc] sm:$0xf]
    %v3722 = vld [vmem:[%s3717 + $0x10] sm:$0xf]
    %v3723 = vld [vmem:[%s3717 + $0x14] sm:$0xf]
    %v3724 = vld [vmem:[%s3717 + $0x18] sm:$0xf]
    %v3725 = vld [vmem:[%s3717 + $0x1c] sm:$0xf]
    %v3726 = vld [vmem:[%s3717 + $0x20] sm:$0xf]
    %v3727 = vld [vmem:[%s3717 + $0x24] sm:$0xf]
    %v3728 = vld [vmem:[%s3717 + $0x28] sm:$0xf]
    %v3729 = vld [vmem:[%s3717 + $0x2c] sm:$0xf]
    %v3730 = vld [vmem:[%s3717 + $0x30] sm:$0xf]
    %v3731 = vld [vmem:[%s3717 + $0x34] sm:$0xf]
    %v3732 = vld [vmem:[%s3717 + $0x38] sm:$0xf]
    %v3733 = vld [vmem:[%s3717 + $0x3c] sm:$0xf]
    %s3734 = scalar_lea.vmem %s7, 1
    %v3735 = vld [vmem:[%s3734] sm:$0x1]
    %v3737 = vlaneseq
    %v3738 = vshrl.u32 %v3737, 7
    %v3739 = vsub.s32 0, %v3738
    %v3740 = vrot.slane %v3735, %v3739
    %v3758 = vunpack.c.l.b16 %v3718
    %v3759 = vunpack.c.l.b16 %v3719
    %v3760 = vunpack.c.l.b16 %v3720
    %v3761 = vunpack.c.l.b16 %v3721
    %v3762 = vunpack.c.l.b16 %v3722
    %v3763 = vunpack.c.l.b16 %v3723
    %v3764 = vunpack.c.l.b16 %v3724
    %v3765 = vunpack.c.l.b16 %v3725
    %v3766 = vunpack.c.l.b16 %v3726
    %v3767 = vunpack.c.l.b16 %v3727
    %v3768 = vunpack.c.l.b16 %v3728
    %v3769 = vunpack.c.l.b16 %v3729
    %v3770 = vunpack.c.l.b16 %v3730
    %v3771 = vunpack.c.l.b16 %v3731
    %v3772 = vunpack.c.l.b16 %v3732
    %v3773 = vunpack.c.l.b16 %v3733
    %v3774 = vpack.c.b16 %v3759, %v3758
    %v3775 = vpack.c.b16 %v3761, %v3760
    %v3776 = vpack.c.b16 %v3763, %v3762
    %v3777 = vpack.c.b16 %v3765, %v3764
    %v3778 = vpack.c.b16 %v3767, %v3766
    %v3779 = vpack.c.b16 %v3769, %v3768
    %v3780 = vpack.c.b16 %v3771, %v3770
    %v3781 = vpack.c.b16 %v3773, %v3772
    %3790 = vmatprep.subr.bf16.mxu0 0
    %3791 = vmatpush1.bf16.msra.mxu0 %v3781
    %3792 = vmatprep.subr.bf16.mxu0 0
    %3793 = vmatpush1.bf16.msra.mxu0 %v3780
    %3794 = vmatprep.subr.bf16.mxu0 0
    %3795 = vmatpush1.bf16.msra.mxu0 %v3779
    %3796 = vmatprep.subr.bf16.mxu0 0
    %3797 = vmatpush1.bf16.msra.mxu0 %v3778
    %3798 = vmatprep.subr.bf16.mxu0 0
    %3799 = vmatpush1.bf16.msra.mxu0 %v3777
    %3800 = vmatprep.subr.bf16.mxu0 0
    %3801 = vmatpush1.bf16.msra.mxu0 %v3776
    %3802 = vmatprep.subr.bf16.mxu0 0
    %3803 = vmatpush1.bf16.msra.mxu0 %v3775
    %3804 = vmatprep.subr.bf16.mxu0 0
    %3805 = vmatpush1.bf16.msra.mxu0 %v3774
    %3806 = vmatprep.subr.bf16.mxu0 0
    %3807 = vmatpush2.bf16.msra.mxu0 0
    %3808 = vmatprep.subr.bf16.mxu0 0
    %3809 = vmatpush2.bf16.msra.mxu0 0
    %3810 = vmatprep.subr.bf16.mxu0 0
    %3811 = vmatpush2.bf16.msra.mxu0 0
    %3812 = vmatprep.subr.bf16.mxu0 0
    %3813 = vmatpush2.bf16.msra.mxu0 0
    %3814 = vmatprep.subr.bf16.mxu0 0
    %3815 = vmatpush2.bf16.msra.mxu0 0
    %3816 = vmatprep.subr.bf16.mxu0 0
    %3817 = vmatpush2.bf16.msra.mxu0 0
    %3818 = vmatprep.subr.bf16.mxu0 0
    %3819 = vmatpush2.bf16.msra.mxu0 0
    %3820 = vmatprep.subr.bf16.mxu0 0
    %3821 = vmatpush2.bf16.msra.mxu0 0
    %3822 = vmatprep.mubr.bf16.mxu0 0
    %3823 = vmatmul.mubr.bf16.gmra.mxu0 %v3715
    %v3824 = vpop.f32.mrf.mxu0
    %v3825 = vadd.f32 %v3740, %v3824
    %v3826 = vpop.f32.mrf.mxu0
    %v3827 = vpop.f32.mrf.mxu0
    %v3828 = vadd.f32 %v3740, %v3827
    %v3829 = vpop.f32.mrf.mxu0
    %3830 = vmatprep.mubr.bf16.mxu0 0
    %3831 = vmatmul.mubr.bf16.gmra.mxu0 %v3716
    %v3832 = vpop.f32.mrf.mxu0
    %v3833 = vadd.f32 %v3740, %v3832
    %v3834 = vpop.f32.mrf.mxu0
    %v3835 = vpop.f32.mrf.mxu0
    %v3836 = vadd.f32 %v3740, %v3835
    %v3837 = vpop.f32.mrf.mxu0
    %3838 = vdwg.mxu0
    %v3839 = vadd.f32 %v2456, %v3825
    %v3840 = vadd.f32 %v2457, %v3828
    %v3841 = vadd.f32 %v2458, %v3833
    %v3842 = vadd.f32 %v2459, %v3836
    %s3843 = scalar_lea.vmem %s8, 1
    %v3844 = vld [vmem:[%s3843] sm:$0x1]
    %s3845 = scalar_lea.vmem %s9, 1
    %v3846 = vld [vmem:[%s3845] sm:$0x1]
    %3847 = vadd.xlane.f32.xlu0 %v3839
    %v3848 = vpop.xlane.xlu0 %3847
    %3849 = vadd.xlane.f32.xlu0 %v3840
    %v3850 = vpop.xlane.xlu0 %3849
    %3851 = vadd.xlane.f32.xlu0 %v3841
    %v3852 = vpop.xlane.xlu0 %3851
    %3853 = vadd.xlane.f32.xlu0 %v3842
    %v3854 = vpop.xlane.xlu0 %3853
    %v3855 = vmul.f32 %v3848, %v313
    %v3856 = vmul.f32 %v3850, %v313
    %v3857 = vmul.f32 %v3852, %v313
    %v3858 = vmul.f32 %v3854, %v313
    %v3859 = vsub.f32 %v3839, %v3855
    %v3860 = vsub.f32 %v3840, %v3856
    %v3861 = vsub.f32 %v3841, %v3857
    %v3862 = vsub.f32 %v3842, %v3858
    %v3863 = vmul.f32 %v3859, %v3859
    %v3864 = vmul.f32 %v3860, %v3860
    %v3865 = vmul.f32 %v3861, %v3861
    %v3866 = vmul.f32 %v3862, %v3862
    %3867 = vadd.xlane.f32.xlu0 %v3863
    %v3868 = vpop.xlane.xlu0 %3867
    %3869 = vadd.xlane.f32.xlu0 %v3864
    %v3870 = vpop.xlane.xlu0 %3869
    %3871 = vadd.xlane.f32.xlu0 %v3865
    %v3872 = vpop.xlane.xlu0 %3871
    %3873 = vadd.xlane.f32.xlu0 %v3866
    %v3874 = vpop.xlane.xlu0 %3873
    %v3875 = vmul.f32 %v3868, %v313
    %v3876 = vmul.f32 %v3870, %v313
    %v3877 = vmul.f32 %v3872, %v313
    %v3878 = vmul.f32 %v3874, %v313
    %v3879 = vadd.f32 %v3875, 1e-05
    %v3880 = vadd.f32 %v3876, 1e-05
    %v3881 = vadd.f32 %v3877, 1e-05
    %v3882 = vadd.f32 %v3878, 1e-05
    %v3883 = vrsqrt.pop %v3879
    %v3884 = vrsqrt.pop %v3880
    %v3885 = vrsqrt.pop %v3881
    %v3886 = vrsqrt.pop %v3882
    %v3887 = vmul.f32 %v3859, %v3883
    %v3888 = vmul.f32 %v3860, %v3884
    %v3889 = vmul.f32 %v3861, %v3885
    %v3890 = vmul.f32 %v3862, %v3886
    %v3892 = vlaneseq
    %v3893 = vshrl.u32 %v3892, 7
    %v3894 = vsub.s32 0, %v3893
    %v3895 = vrot.slane %v3844, %v3894
    %v3897 = vmul.f32 %v3887, %v3895
    %v3898 = vmul.f32 %v3888, %v3895
    %v3899 = vmul.f32 %v3889, %v3895
    %v3900 = vmul.f32 %v3890, %v3895
    %v3902 = vlaneseq
    %v3903 = vshrl.u32 %v3902, 7
    %v3904 = vsub.s32 0, %v3903
    %v3905 = vrot.slane %v3846, %v3904
    %v3907 = vadd.f32 %v3897, %v3905
    %v3908 = vadd.f32 %v3898, %v3905
    %v3909 = vadd.f32 %v3899, %v3905
    %v3910 = vadd.f32 %v3900, %v3905
    %v3911 = vpack.c.bf16 %v3908, %v3907
    %v3912 = vpack.c.bf16 %v3910, %v3909
    %s3913 = scalar_lea.vmem [#allocation8], 256
    %v3914 = vld [vmem:[%s3913] sm:$0xff]
    %v3915 = vld [vmem:[%s3913 + $0x8] sm:$0xff]
    %v3916 = vld [vmem:[%s3913 + $0x10] sm:$0xff]
    %v3917 = vld [vmem:[%s3913 + $0x18] sm:$0xff]
    %v3918 = vld [vmem:[%s3913 + $0x20] sm:$0xff]
    %v3919 = vld [vmem:[%s3913 + $0x28] sm:$0xff]
    %v3920 = vld [vmem:[%s3913 + $0x30] sm:$0xff]
    %v3921 = vld [vmem:[%s3913 + $0x38] sm:$0xff]
    %v3922 = vld [vmem:[%s3913 + $0x40] sm:$0xff]
    %v3923 = vld [vmem:[%s3913 + $0x48] sm:$0xff]
    %v3924 = vld [vmem:[%s3913 + $0x50] sm:$0xff]
    %v3925 = vld [vmem:[%s3913 + $0x58] sm:$0xff]
    %v3926 = vld [vmem:[%s3913 + $0x60] sm:$0xff]
    %v3927 = vld [vmem:[%s3913 + $0x68] sm:$0xff]
    %v3928 = vld [vmem:[%s3913 + $0x70] sm:$0xff]
    %v3929 = vld [vmem:[%s3913 + $0x78] sm:$0xff]
    %v3930 = vld [vmem:[%s3913 + $0x80] sm:$0xff]
    %v3931 = vld [vmem:[%s3913 + $0x88] sm:$0xff]
    %v3932 = vld [vmem:[%s3913 + $0x90] sm:$0xff]
    %v3933 = vld [vmem:[%s3913 + $0x98] sm:$0xff]
    %v3934 = vld [vmem:[%s3913 + $0xa0] sm:$0xff]
    %v3935 = vld [vmem:[%s3913 + $0xa8] sm:$0xff]
    %v3936 = vld [vmem:[%s3913 + $0xb0] sm:$0xff]
    %v3937 = vld [vmem:[%s3913 + $0xb8] sm:$0xff]
    %v3938 = vld [vmem:[%s3913 + $0xc0] sm:$0xff]
    %v3939 = vld [vmem:[%s3913 + $0xc8] sm:$0xff]
    %v3940 = vld [vmem:[%s3913 + $0xd0] sm:$0xff]
    %v3941 = vld [vmem:[%s3913 + $0xd8] sm:$0xff]
    %v3942 = vld [vmem:[%s3913 + $0xe0] sm:$0xff]
    %v3943 = vld [vmem:[%s3913 + $0xe8] sm:$0xff]
    %v3944 = vld [vmem:[%s3913 + $0xf0] sm:$0xff]
    %v3945 = vld [vmem:[%s3913 + $0xf8] sm:$0xff]
    %s3946 = scalar_lea.vmem %s11, 4
    %v3947 = vld [vmem:[%s3946] sm:$0xf]
    %v3949 = vlaneseq
    %v3950 = vshrl.u32 %v3949, 7
    %v3951 = vsub.s32 0, %v3950
    %v3952 = vrot.slane %v3947, %v3951
    %v3953 = vlaneseq
    %v3954 = vshrl.u32 %v3953, 7
    %v3955 = vsub.s32 1, %v3954
    %v3956 = vrot.slane %v3947, %v3955
    %v3957 = vlaneseq
    %v3958 = vshrl.u32 %v3957, 7
    %v3959 = vsub.s32 2, %v3958
    %v3960 = vrot.slane %v3947, %v3959
    %v3961 = vlaneseq
    %v3962 = vshrl.u32 %v3961, 7
    %v3963 = vsub.s32 3, %v3962
    %v3964 = vrot.slane %v3947, %v3963
    %v4001 = vunpack.c.l.b16 %v3914
    %v4002 = vunpack.c.h.b16 %v3914
    %v4003 = vunpack.c.l.b16 %v3915
    %v4004 = vunpack.c.h.b16 %v3915
    %v4005 = vunpack.c.l.b16 %v3916
    %v4006 = vunpack.c.h.b16 %v3916
    %v4007 = vunpack.c.l.b16 %v3917
    %v4008 = vunpack.c.h.b16 %v3917
    %v4009 = vunpack.c.l.b16 %v3918
    %v4010 = vunpack.c.h.b16 %v3918
    %v4011 = vunpack.c.l.b16 %v3919
    %v4012 = vunpack.c.h.b16 %v3919
    %v4013 = vunpack.c.l.b16 %v3920
    %v4014 = vunpack.c.h.b16 %v3920
    %v4015 = vunpack.c.l.b16 %v3921
    %v4016 = vunpack.c.h.b16 %v3921
    %v4017 = vunpack.c.l.b16 %v3922
    %v4018 = vunpack.c.h.b16 %v3922
    %v4019 = vunpack.c.l.b16 %v3923
    %v4020 = vunpack.c.h.b16 %v3923
    %v4021 = vunpack.c.l.b16 %v3924
    %v4022 = vunpack.c.h.b16 %v3924
    %v4023 = vunpack.c.l.b16 %v3925
    %v4024 = vunpack.c.h.b16 %v3925
    %v4025 = vunpack.c.l.b16 %v3926
    %v4026 = vunpack.c.h.b16 %v3926
    %v4027 = vunpack.c.l.b16 %v3927
    %v4028 = vunpack.c.h.b16 %v3927
    %v4029 = vunpack.c.l.b16 %v3928
    %v4030 = vunpack.c.h.b16 %v3928
    %v4031 = vunpack.c.l.b16 %v3929
    %v4032 = vunpack.c.h.b16 %v3929
    %v4033 = vunpack.c.l.b16 %v3930
    %v4034 = vunpack.c.h.b16 %v3930
    %v4035 = vunpack.c.l.b16 %v3931
    %v4036 = vunpack.c.h.b16 %v3931
    %v4037 = vunpack.c.l.b16 %v3932
    %v4038 = vunpack.c.h.b16 %v3932
    %v4039 = vunpack.c.l.b16 %v3933
    %v4040 = vunpack.c.h.b16 %v3933
    %v4041 = vunpack.c.l.b16 %v3934
    %v4042 = vunpack.c.h.b16 %v3934
    %v4043 = vunpack.c.l.b16 %v3935
    %v4044 = vunpack.c.h.b16 %v3935
    %v4045 = vunpack.c.l.b16 %v3936
    %v4046 = vunpack.c.h.b16 %v3936
    %v4047 = vunpack.c.l.b16 %v3937
    %v4048 = vunpack.c.h.b16 %v3937
    %v4049 = vunpack.c.l.b16 %v3938
    %v4050 = vunpack.c.h.b16 %v3938
    %v4051 = vunpack.c.l.b16 %v3939
    %v4052 = vunpack.c.h.b16 %v3939
    %v4053 = vunpack.c.l.b16 %v3940
    %v4054 = vunpack.c.h.b16 %v3940
    %v4055 = vunpack.c.l.b16 %v3941
    %v4056 = vunpack.c.h.b16 %v3941
    %v4057 = vunpack.c.l.b16 %v3942
    %v4058 = vunpack.c.h.b16 %v3942
    %v4059 = vunpack.c.l.b16 %v3943
    %v4060 = vunpack.c.h.b16 %v3943
    %v4061 = vunpack.c.l.b16 %v3944
    %v4062 = vunpack.c.h.b16 %v3944
    %v4063 = vunpack.c.l.b16 %v3945
    %v4064 = vunpack.c.h.b16 %v3945
    %v4065 = vpack.c.b16 %v4005, %v4001
    %v4066 = vpack.c.b16 %v4006, %v4002
    %v4067 = vpack.c.b16 %v4007, %v4003
    %v4068 = vpack.c.b16 %v4008, %v4004
    %v4069 = vpack.c.b16 %v4013, %v4009
    %v4070 = vpack.c.b16 %v4014, %v4010
    %v4071 = vpack.c.b16 %v4015, %v4011
    %v4072 = vpack.c.b16 %v4016, %v4012
    %v4073 = vpack.c.b16 %v4021, %v4017
    %v4074 = vpack.c.b16 %v4022, %v4018
    %v4075 = vpack.c.b16 %v4023, %v4019
    %v4076 = vpack.c.b16 %v4024, %v4020
    %v4077 = vpack.c.b16 %v4029, %v4025
    %v4078 = vpack.c.b16 %v4030, %v4026
    %v4079 = vpack.c.b16 %v4031, %v4027
    %v4080 = vpack.c.b16 %v4032, %v4028
    %v4081 = vpack.c.b16 %v4037, %v4033
    %v4082 = vpack.c.b16 %v4038, %v4034
    %v4083 = vpack.c.b16 %v4039, %v4035
    %v4084 = vpack.c.b16 %v4040, %v4036
    %v4085 = vpack.c.b16 %v4045, %v4041
    %v4086 = vpack.c.b16 %v4046, %v4042
    %v4087 = vpack.c.b16 %v4047, %v4043
    %v4088 = vpack.c.b16 %v4048, %v4044
    %v4089 = vpack.c.b16 %v4053, %v4049
    %v4090 = vpack.c.b16 %v4054, %v4050
    %v4091 = vpack.c.b16 %v4055, %v4051
    %v4092 = vpack.c.b16 %v4056, %v4052
    %v4093 = vpack.c.b16 %v4061, %v4057
    %v4094 = vpack.c.b16 %v4062, %v4058
    %v4095 = vpack.c.b16 %v4063, %v4059
    %v4096 = vpack.c.b16 %v4064, %v4060
    %4129 = vmatprep.subr.bf16.mxu0 %v4094
    %4130 = vmatpush1.bf16.msra.mxu0 %v4093
    %4131 = vmatprep.subr.bf16.mxu0 %v4090
    %4132 = vmatpush1.bf16.msra.mxu0 %v4089
    %4133 = vmatprep.subr.bf16.mxu0 %v4086
    %4134 = vmatpush1.bf16.msra.mxu0 %v4085
    %4135 = vmatprep.subr.bf16.mxu0 %v4082
    %4136 = vmatpush1.bf16.msra.mxu0 %v4081
    %4137 = vmatprep.subr.bf16.mxu0 %v4078
    %4138 = vmatpush1.bf16.msra.mxu0 %v4077
    %4139 = vmatprep.subr.bf16.mxu0 %v4074
    %4140 = vmatpush1.bf16.msra.mxu0 %v4073
    %4141 = vmatprep.subr.bf16.mxu0 %v4070
    %4142 = vmatpush1.bf16.msra.mxu0 %v4069
    %4143 = vmatprep.subr.bf16.mxu0 %v4066
    %4144 = vmatpush1.bf16.msra.mxu0 %v4065
    %4145 = vmatprep.subr.bf16.mxu0 0
    %4146 = vmatpush2.bf16.msra.mxu0 0
    %4147 = vmatprep.subr.bf16.mxu0 0
    %4148 = vmatpush2.bf16.msra.mxu0 0
    %4149 = vmatprep.subr.bf16.mxu0 0
    %4150 = vmatpush2.bf16.msra.mxu0 0
    %4151 = vmatprep.subr.bf16.mxu0 0
    %4152 = vmatpush2.bf16.msra.mxu0 0
    %4153 = vmatprep.subr.bf16.mxu0 0
    %4154 = vmatpush2.bf16.msra.mxu0 0
    %4155 = vmatprep.subr.bf16.mxu0 0
    %4156 = vmatpush2.bf16.msra.mxu0 0
    %4157 = vmatprep.subr.bf16.mxu0 0
    %4158 = vmatpush2.bf16.msra.mxu0 0
    %4159 = vmatprep.subr.bf16.mxu0 0
    %4160 = vmatpush2.bf16.msra.mxu0 0
    %4161 = vmatprep.mubr.bf16.mxu0 0
    %4162 = vmatmul.mubr.bf16.gmra.mxu0 %v3911
    %v4163 = vpop.f32.mrf.mxu0
    %v4164 = vadd.f32 %v3952, %v4163
    %v4165 = vpop.f32.mrf.mxu0
    %v4166 = vadd.f32 %v3956, %v4165
    %v4167 = vpop.f32.mrf.mxu0
    %v4168 = vadd.f32 %v3952, %v4167
    %v4169 = vpop.f32.mrf.mxu0
    %v4170 = vadd.f32 %v3956, %v4169
    %4171 = vmatprep.mubr.bf16.mxu0 0
    %4172 = vmatmul.mubr.bf16.gmra.mxu0 %v3912
    %v4173 = vpop.f32.mrf.mxu0
    %v4174 = vadd.f32 %v3952, %v4173
    %v4175 = vpop.f32.mrf.mxu0
    %v4176 = vadd.f32 %v3956, %v4175
    %v4177 = vpop.f32.mrf.mxu0
    %v4178 = vadd.f32 %v3952, %v4177
    %v4179 = vpop.f32.mrf.mxu0
    %v4180 = vadd.f32 %v3956, %v4179
    %4181 = vdwg.mxu0
    %4182 = vmatprep.subr.bf16.mxu0 %v4096
    %4183 = vmatpush1.bf16.msra.mxu0 %v4095
    %4184 = vmatprep.subr.bf16.mxu0 %v4092
    %4185 = vmatpush1.bf16.msra.mxu0 %v4091
    %4186 = vmatprep.subr.bf16.mxu0 %v4088
    %4187 = vmatpush1.bf16.msra.mxu0 %v4087
    %4188 = vmatprep.subr.bf16.mxu0 %v4084
    %4189 = vmatpush1.bf16.msra.mxu0 %v4083
    %4190 = vmatprep.subr.bf16.mxu0 %v4080
    %4191 = vmatpush1.bf16.msra.mxu0 %v4079
    %4192 = vmatprep.subr.bf16.mxu0 %v4076
    %4193 = vmatpush1.bf16.msra.mxu0 %v4075
    %4194 = vmatprep.subr.bf16.mxu0 %v4072
    %4195 = vmatpush1.bf16.msra.mxu0 %v4071
    %4196 = vmatprep.subr.bf16.mxu0 %v4068
    %4197 = vmatpush1.bf16.msra.mxu0 %v4067
    %4198 = vmatprep.subr.bf16.mxu0 0
    %4199 = vmatpush2.bf16.msra.mxu0 0
    %4200 = vmatprep.subr.bf16.mxu0 0
    %4201 = vmatpush2.bf16.msra.mxu0 0
    %4202 = vmatprep.subr.bf16.mxu0 0
    %4203 = vmatpush2.bf16.msra.mxu0 0
    %4204 = vmatprep.subr.bf16.mxu0 0
    %4205 = vmatpush2.bf16.msra.mxu0 0
    %4206 = vmatprep.subr.bf16.mxu0 0
    %4207 = vmatpush2.bf16.msra.mxu0 0
    %4208 = vmatprep.subr.bf16.mxu0 0
    %4209 = vmatpush2.bf16.msra.mxu0 0
    %4210 = vmatprep.subr.bf16.mxu0 0
    %4211 = vmatpush2.bf16.msra.mxu0 0
    %4212 = vmatprep.subr.bf16.mxu0 0
    %4213 = vmatpush2.bf16.msra.mxu0 0
    %4214 = vmatprep.mubr.bf16.mxu0 0
    %4215 = vmatmul.mubr.bf16.gmra.mxu0 %v3911
    %v4216 = vpop.f32.mrf.mxu0
    %v4217 = vadd.f32 %v3960, %v4216
    %v4218 = vpop.f32.mrf.mxu0
    %v4219 = vadd.f32 %v3964, %v4218
    %v4220 = vpop.f32.mrf.mxu0
    %v4221 = vadd.f32 %v3960, %v4220
    %v4222 = vpop.f32.mrf.mxu0
    %v4223 = vadd.f32 %v3964, %v4222
    %4224 = vmatprep.mubr.bf16.mxu0 0
    %4225 = vmatmul.mubr.bf16.gmra.mxu0 %v3912
    %v4226 = vpop.f32.mrf.mxu0
    %v4227 = vadd.f32 %v3960, %v4226
    %v4228 = vpop.f32.mrf.mxu0
    %v4229 = vadd.f32 %v3964, %v4228
    %v4230 = vpop.f32.mrf.mxu0
    %v4231 = vadd.f32 %v3960, %v4230
    %v4232 = vpop.f32.mrf.mxu0
    %v4233 = vadd.f32 %v3964, %v4232
    %4234 = vdwg.mxu0
    %v4235 = vmax.f32 %v4164, 0.0
    %v4236 = vmax.f32 %v4166, 0.0
    %v4237 = vmax.f32 %v4217, 0.0
    %v4238 = vmax.f32 %v4219, 0.0
    %v4239 = vmax.f32 %v4168, 0.0
    %v4240 = vmax.f32 %v4170, 0.0
    %v4241 = vmax.f32 %v4221, 0.0
    %v4242 = vmax.f32 %v4223, 0.0
    %v4243 = vmax.f32 %v4174, 0.0
    %v4244 = vmax.f32 %v4176, 0.0
    %v4245 = vmax.f32 %v4227, 0.0
    %v4246 = vmax.f32 %v4229, 0.0
    %v4247 = vmax.f32 %v4178, 0.0
    %v4248 = vmax.f32 %v4180, 0.0
    %v4249 = vmax.f32 %v4231, 0.0
    %v4250 = vmax.f32 %v4233, 0.0
    %v4251 = vpack.c.bf16 %v4239, %v4235
    %v4252 = vpack.c.bf16 %v4240, %v4236
    %v4253 = vpack.c.bf16 %v4241, %v4237
    %v4254 = vpack.c.bf16 %v4242, %v4238
    %v4255 = vpack.c.bf16 %v4247, %v4243
    %v4256 = vpack.c.bf16 %v4248, %v4244
    %v4257 = vpack.c.bf16 %v4249, %v4245
    %v4258 = vpack.c.bf16 %v4250, %v4246
    %s4259 = scalar_lea.vmem [#allocation10], 256
    %v4260 = vld [vmem:[%s4259] sm:$0xf]
    %v4261 = vld [vmem:[%s4259 + $0x4] sm:$0xf]
    %v4262 = vld [vmem:[%s4259 + $0x8] sm:$0xf]
    %v4263 = vld [vmem:[%s4259 + $0xc] sm:$0xf]
    %v4264 = vld [vmem:[%s4259 + $0x10] sm:$0xf]
    %v4265 = vld [vmem:[%s4259 + $0x14] sm:$0xf]
    %v4266 = vld [vmem:[%s4259 + $0x18] sm:$0xf]
    %v4267 = vld [vmem:[%s4259 + $0x1c] sm:$0xf]
    %v4268 = vld [vmem:[%s4259 + $0x20] sm:$0xf]
    %v4269 = vld [vmem:[%s4259 + $0x24] sm:$0xf]
    %v4270 = vld [vmem:[%s4259 + $0x28] sm:$0xf]
    %v4271 = vld [vmem:[%s4259 + $0x2c] sm:$0xf]
    %v4272 = vld [vmem:[%s4259 + $0x30] sm:$0xf]
    %v4273 = vld [vmem:[%s4259 + $0x34] sm:$0xf]
    %v4274 = vld [vmem:[%s4259 + $0x38] sm:$0xf]
    %v4275 = vld [vmem:[%s4259 + $0x3c] sm:$0xf]
    %v4276 = vld [vmem:[%s4259 + $0x40] sm:$0xf]
    %v4277 = vld [vmem:[%s4259 + $0x44] sm:$0xf]
    %v4278 = vld [vmem:[%s4259 + $0x48] sm:$0xf]
    %v4279 = vld [vmem:[%s4259 + $0x4c] sm:$0xf]
    %v4280 = vld [vmem:[%s4259 + $0x50] sm:$0xf]
    %v4281 = vld [vmem:[%s4259 + $0x54] sm:$0xf]
    %v4282 = vld [vmem:[%s4259 + $0x58] sm:$0xf]
    %v4283 = vld [vmem:[%s4259 + $0x5c] sm:$0xf]
    %v4284 = vld [vmem:[%s4259 + $0x60] sm:$0xf]
    %v4285 = vld [vmem:[%s4259 + $0x64] sm:$0xf]
    %v4286 = vld [vmem:[%s4259 + $0x68] sm:$0xf]
    %v4287 = vld [vmem:[%s4259 + $0x6c] sm:$0xf]
    %v4288 = vld [vmem:[%s4259 + $0x70] sm:$0xf]
    %v4289 = vld [vmem:[%s4259 + $0x74] sm:$0xf]
    %v4290 = vld [vmem:[%s4259 + $0x78] sm:$0xf]
    %v4291 = vld [vmem:[%s4259 + $0x7c] sm:$0xf]
    %v4292 = vld [vmem:[%s4259 + $0x80] sm:$0xf]
    %v4293 = vld [vmem:[%s4259 + $0x84] sm:$0xf]
    %v4294 = vld [vmem:[%s4259 + $0x88] sm:$0xf]
    %v4295 = vld [vmem:[%s4259 + $0x8c] sm:$0xf]
    %v4296 = vld [vmem:[%s4259 + $0x90] sm:$0xf]
    %v4297 = vld [vmem:[%s4259 + $0x94] sm:$0xf]
    %v4298 = vld [vmem:[%s4259 + $0x98] sm:$0xf]
    %v4299 = vld [vmem:[%s4259 + $0x9c] sm:$0xf]
    %v4300 = vld [vmem:[%s4259 + $0xa0] sm:$0xf]
    %v4301 = vld [vmem:[%s4259 + $0xa4] sm:$0xf]
    %v4302 = vld [vmem:[%s4259 + $0xa8] sm:$0xf]
    %v4303 = vld [vmem:[%s4259 + $0xac] sm:$0xf]
    %v4304 = vld [vmem:[%s4259 + $0xb0] sm:$0xf]
    %v4305 = vld [vmem:[%s4259 + $0xb4] sm:$0xf]
    %v4306 = vld [vmem:[%s4259 + $0xb8] sm:$0xf]
    %v4307 = vld [vmem:[%s4259 + $0xbc] sm:$0xf]
    %v4308 = vld [vmem:[%s4259 + $0xc0] sm:$0xf]
    %v4309 = vld [vmem:[%s4259 + $0xc4] sm:$0xf]
    %v4310 = vld [vmem:[%s4259 + $0xc8] sm:$0xf]
    %v4311 = vld [vmem:[%s4259 + $0xcc] sm:$0xf]
    %v4312 = vld [vmem:[%s4259 + $0xd0] sm:$0xf]
    %v4313 = vld [vmem:[%s4259 + $0xd4] sm:$0xf]
    %v4314 = vld [vmem:[%s4259 + $0xd8] sm:$0xf]
    %v4315 = vld [vmem:[%s4259 + $0xdc] sm:$0xf]
    %v4316 = vld [vmem:[%s4259 + $0xe0] sm:$0xf]
    %v4317 = vld [vmem:[%s4259 + $0xe4] sm:$0xf]
    %v4318 = vld [vmem:[%s4259 + $0xe8] sm:$0xf]
    %v4319 = vld [vmem:[%s4259 + $0xec] sm:$0xf]
    %v4320 = vld [vmem:[%s4259 + $0xf0] sm:$0xf]
    %v4321 = vld [vmem:[%s4259 + $0xf4] sm:$0xf]
    %v4322 = vld [vmem:[%s4259 + $0xf8] sm:$0xf]
    %v4323 = vld [vmem:[%s4259 + $0xfc] sm:$0xf]
    %s4324 = scalar_lea.vmem %s13, 1
    %v4325 = vld [vmem:[%s4324] sm:$0x1]
    %v4327 = vlaneseq
    %v4328 = vshrl.u32 %v4327, 7
    %v4329 = vsub.s32 0, %v4328
    %v4330 = vrot.slane %v4325, %v4329
    %v4396 = vunpack.c.l.b16 %v4260
    %v4397 = vunpack.c.l.b16 %v4261
    %v4398 = vunpack.c.l.b16 %v4262
    %v4399 = vunpack.c.l.b16 %v4263
    %v4400 = vunpack.c.l.b16 %v4264
    %v4401 = vunpack.c.l.b16 %v4265
    %v4402 = vunpack.c.l.b16 %v4266
    %v4403 = vunpack.c.l.b16 %v4267
    %v4404 = vunpack.c.l.b16 %v4268
    %v4405 = vunpack.c.l.b16 %v4269
    %v4406 = vunpack.c.l.b16 %v4270
    %v4407 = vunpack.c.l.b16 %v4271
    %v4408 = vunpack.c.l.b16 %v4272
    %v4409 = vunpack.c.l.b16 %v4273
    %v4410 = vunpack.c.l.b16 %v4274
    %v4411 = vunpack.c.l.b16 %v4275
    %v4412 = vunpack.c.l.b16 %v4276
    %v4413 = vunpack.c.l.b16 %v4277
    %v4414 = vunpack.c.l.b16 %v4278
    %v4415 = vunpack.c.l.b16 %v4279
    %v4416 = vunpack.c.l.b16 %v4280
    %v4417 = vunpack.c.l.b16 %v4281
    %v4418 = vunpack.c.l.b16 %v4282
    %v4419 = vunpack.c.l.b16 %v4283
    %v4420 = vunpack.c.l.b16 %v4284
    %v4421 = vunpack.c.l.b16 %v4285
    %v4422 = vunpack.c.l.b16 %v4286
    %v4423 = vunpack.c.l.b16 %v4287
    %v4424 = vunpack.c.l.b16 %v4288
    %v4425 = vunpack.c.l.b16 %v4289
    %v4426 = vunpack.c.l.b16 %v4290
    %v4427 = vunpack.c.l.b16 %v4291
    %v4428 = vunpack.c.l.b16 %v4292
    %v4429 = vunpack.c.l.b16 %v4293
    %v4430 = vunpack.c.l.b16 %v4294
    %v4431 = vunpack.c.l.b16 %v4295
    %v4432 = vunpack.c.l.b16 %v4296
    %v4433 = vunpack.c.l.b16 %v4297
    %v4434 = vunpack.c.l.b16 %v4298
    %v4435 = vunpack.c.l.b16 %v4299
    %v4436 = vunpack.c.l.b16 %v4300
    %v4437 = vunpack.c.l.b16 %v4301
    %v4438 = vunpack.c.l.b16 %v4302
    %v4439 = vunpack.c.l.b16 %v4303
    %v4440 = vunpack.c.l.b16 %v4304
    %v4441 = vunpack.c.l.b16 %v4305
    %v4442 = vunpack.c.l.b16 %v4306
    %v4443 = vunpack.c.l.b16 %v4307
    %v4444 = vunpack.c.l.b16 %v4308
    %v4445 = vunpack.c.l.b16 %v4309
    %v4446 = vunpack.c.l.b16 %v4310
    %v4447 = vunpack.c.l.b16 %v4311
    %v4448 = vunpack.c.l.b16 %v4312
    %v4449 = vunpack.c.l.b16 %v4313
    %v4450 = vunpack.c.l.b16 %v4314
    %v4451 = vunpack.c.l.b16 %v4315
    %v4452 = vunpack.c.l.b16 %v4316
    %v4453 = vunpack.c.l.b16 %v4317
    %v4454 = vunpack.c.l.b16 %v4318
    %v4455 = vunpack.c.l.b16 %v4319
    %v4456 = vunpack.c.l.b16 %v4320
    %v4457 = vunpack.c.l.b16 %v4321
    %v4458 = vunpack.c.l.b16 %v4322
    %v4459 = vunpack.c.l.b16 %v4323
    %v4460 = vpack.c.b16 %v4397, %v4396
    %v4461 = vpack.c.b16 %v4399, %v4398
    %v4462 = vpack.c.b16 %v4401, %v4400
    %v4463 = vpack.c.b16 %v4403, %v4402
    %v4464 = vpack.c.b16 %v4405, %v4404
    %v4465 = vpack.c.b16 %v4407, %v4406
    %v4466 = vpack.c.b16 %v4409, %v4408
    %v4467 = vpack.c.b16 %v4411, %v4410
    %v4468 = vpack.c.b16 %v4413, %v4412
    %v4469 = vpack.c.b16 %v4415, %v4414
    %v4470 = vpack.c.b16 %v4417, %v4416
    %v4471 = vpack.c.b16 %v4419, %v4418
    %v4472 = vpack.c.b16 %v4421, %v4420
    %v4473 = vpack.c.b16 %v4423, %v4422
    %v4474 = vpack.c.b16 %v4425, %v4424
    %v4475 = vpack.c.b16 %v4427, %v4426
    %v4476 = vpack.c.b16 %v4429, %v4428
    %v4477 = vpack.c.b16 %v4431, %v4430
    %v4478 = vpack.c.b16 %v4433, %v4432
    %v4479 = vpack.c.b16 %v4435, %v4434
    %v4480 = vpack.c.b16 %v4437, %v4436
    %v4481 = vpack.c.b16 %v4439, %v4438
    %v4482 = vpack.c.b16 %v4441, %v4440
    %v4483 = vpack.c.b16 %v4443, %v4442
    %v4484 = vpack.c.b16 %v4445, %v4444
    %v4485 = vpack.c.b16 %v4447, %v4446
    %v4486 = vpack.c.b16 %v4449, %v4448
    %v4487 = vpack.c.b16 %v4451, %v4450
    %v4488 = vpack.c.b16 %v4453, %v4452
    %v4489 = vpack.c.b16 %v4455, %v4454
    %v4490 = vpack.c.b16 %v4457, %v4456
    %v4491 = vpack.c.b16 %v4459, %v4458
    %4524 = vmatprep.subr.bf16.mxu0 0
    %4525 = vmatpush1.bf16.msra.mxu0 %v4467
    %4526 = vmatprep.subr.bf16.mxu0 0
    %4527 = vmatpush1.bf16.msra.mxu0 %v4466
    %4528 = vmatprep.subr.bf16.mxu0 0
    %4529 = vmatpush1.bf16.msra.mxu0 %v4465
    %4530 = vmatprep.subr.bf16.mxu0 0
    %4531 = vmatpush1.bf16.msra.mxu0 %v4464
    %4532 = vmatprep.subr.bf16.mxu0 0
    %4533 = vmatpush1.bf16.msra.mxu0 %v4463
    %4534 = vmatprep.subr.bf16.mxu0 0
    %4535 = vmatpush1.bf16.msra.mxu0 %v4462
    %4536 = vmatprep.subr.bf16.mxu0 0
    %4537 = vmatpush1.bf16.msra.mxu0 %v4461
    %4538 = vmatprep.subr.bf16.mxu0 0
    %4539 = vmatpush1.bf16.msra.mxu0 %v4460
    %4540 = vmatprep.subr.bf16.mxu0 0
    %4541 = vmatpush2.bf16.msra.mxu0 %v4475
    %4542 = vmatprep.subr.bf16.mxu0 0
    %4543 = vmatpush2.bf16.msra.mxu0 %v4474
    %4544 = vmatprep.subr.bf16.mxu0 0
    %4545 = vmatpush2.bf16.msra.mxu0 %v4473
    %4546 = vmatprep.subr.bf16.mxu0 0
    %4547 = vmatpush2.bf16.msra.mxu0 %v4472
    %4548 = vmatprep.subr.bf16.mxu0 0
    %4549 = vmatpush2.bf16.msra.mxu0 %v4471
    %4550 = vmatprep.subr.bf16.mxu0 0
    %4551 = vmatpush2.bf16.msra.mxu0 %v4470
    %4552 = vmatprep.subr.bf16.mxu0 0
    %4553 = vmatpush2.bf16.msra.mxu0 %v4469
    %4554 = vmatprep.subr.bf16.mxu0 0
    %4555 = vmatpush2.bf16.msra.mxu0 %v4468
    %4556 = vmatprep.mubr.bf16.mxu0 %v4252
    %4557 = vmatmul.mubr.bf16.gmra.mxu0 %v4251
    %v4558 = vpop.f32.mrf.mxu0
    %v4559 = vadd.f32 %v4330, %v4558
    %v4560 = vpop.f32.mrf.mxu0
    %v4561 = vpop.f32.mrf.mxu0
    %v4562 = vadd.f32 %v4330, %v4561
    %v4563 = vpop.f32.mrf.mxu0
    %4564 = vmatprep.mubr.bf16.mxu0 %v4256
    %4565 = vmatmul.mubr.bf16.gmra.mxu0 %v4255
    %v4566 = vpop.f32.mrf.mxu0
    %v4567 = vadd.f32 %v4330, %v4566
    %v4568 = vpop.f32.mrf.mxu0
    %v4569 = vpop.f32.mrf.mxu0
    %v4570 = vadd.f32 %v4330, %v4569
    %v4571 = vpop.f32.mrf.mxu0
    %4572 = vdwg.mxu0
    %4573 = vmatprep.subr.bf16.mxu0 0
    %4574 = vmatpush1.bf16.msra.mxu0 %v4483
    %4575 = vmatprep.subr.bf16.mxu0 0
    %4576 = vmatpush1.bf16.msra.mxu0 %v4482
    %4577 = vmatprep.subr.bf16.mxu0 0
    %4578 = vmatpush1.bf16.msra.mxu0 %v4481
    %4579 = vmatprep.subr.bf16.mxu0 0
    %4580 = vmatpush1.bf16.msra.mxu0 %v4480
    %4581 = vmatprep.subr.bf16.mxu0 0
    %4582 = vmatpush1.bf16.msra.mxu0 %v4479
    %4583 = vmatprep.subr.bf16.mxu0 0
    %4584 = vmatpush1.bf16.msra.mxu0 %v4478
    %4585 = vmatprep.subr.bf16.mxu0 0
    %4586 = vmatpush1.bf16.msra.mxu0 %v4477
    %4587 = vmatprep.subr.bf16.mxu0 0
    %4588 = vmatpush1.bf16.msra.mxu0 %v4476
    %4589 = vmatprep.subr.bf16.mxu0 0
    %4590 = vmatpush2.bf16.msra.mxu0 %v4491
    %4591 = vmatprep.subr.bf16.mxu0 0
    %4592 = vmatpush2.bf16.msra.mxu0 %v4490
    %4593 = vmatprep.subr.bf16.mxu0 0
    %4594 = vmatpush2.bf16.msra.mxu0 %v4489
    %4595 = vmatprep.subr.bf16.mxu0 0
    %4596 = vmatpush2.bf16.msra.mxu0 %v4488
    %4597 = vmatprep.subr.bf16.mxu0 0
    %4598 = vmatpush2.bf16.msra.mxu0 %v4487
    %4599 = vmatprep.subr.bf16.mxu0 0
    %4600 = vmatpush2.bf16.msra.mxu0 %v4486
    %4601 = vmatprep.subr.bf16.mxu0 0
    %4602 = vmatpush2.bf16.msra.mxu0 %v4485
    %4603 = vmatprep.subr.bf16.mxu0 0
    %4604 = vmatpush2.bf16.msra.mxu0 %v4484
    %4605 = vmatprep.mubr.bf16.mxu0 %v4254
    %4606 = vmatmul.mubr.bf16.gmra.mxu0 %v4253
    %v4607 = vpop.f32.mrf.mxu0
    %v4608 = vadd.f32 %v4559, %v4607
    %v4609 = vpop.f32.mrf.mxu0
    %v4610 = vpop.f32.mrf.mxu0
    %v4611 = vadd.f32 %v4562, %v4610
    %v4612 = vpop.f32.mrf.mxu0
    %4613 = vmatprep.mubr.bf16.mxu0 %v4258
    %4614 = vmatmul.mubr.bf16.gmra.mxu0 %v4257
    %v4615 = vpop.f32.mrf.mxu0
    %v4616 = vadd.f32 %v4567, %v4615
    %v4617 = vpop.f32.mrf.mxu0
    %v4618 = vpop.f32.mrf.mxu0
    %v4619 = vadd.f32 %v4570, %v4618
    %v4620 = vpop.f32.mrf.mxu0
    %4621 = vdwg.mxu0
    %v4622 = vadd.f32 %v3839, %v4608
    %v4623 = vadd.f32 %v3840, %v4611
    %v4624 = vadd.f32 %v3841, %v4616
    %v4625 = vadd.f32 %v3842, %v4619
    %v4626 = vld [vmem:[%s14] sm:$0x1]
    %v4627 = vld [vmem:[%s15] sm:$0x1]
    %4628 = vadd.xlane.f32.xlu0 %v4622
    %v4629 = vpop.xlane.xlu0 %4628
    %4630 = vadd.xlane.f32.xlu0 %v4623
    %v4631 = vpop.xlane.xlu0 %4630
    %4632 = vadd.xlane.f32.xlu0 %v4624
    %v4633 = vpop.xlane.xlu0 %4632
    %4634 = vadd.xlane.f32.xlu0 %v4625
    %v4635 = vpop.xlane.xlu0 %4634
    %v4636 = vmul.f32 %v4629, %v313
    %v4637 = vmul.f32 %v4631, %v313
    %v4638 = vmul.f32 %v4633, %v313
    %v4639 = vmul.f32 %v4635, %v313
    %v4640 = vsub.f32 %v4622, %v4636
    %v4641 = vsub.f32 %v4623, %v4637
    %v4642 = vsub.f32 %v4624, %v4638
    %v4643 = vsub.f32 %v4625, %v4639
    %v4644 = vmul.f32 %v4640, %v4640
    %v4645 = vmul.f32 %v4641, %v4641
    %v4646 = vmul.f32 %v4642, %v4642
    %v4647 = vmul.f32 %v4643, %v4643
    %4648 = vadd.xlane.f32.xlu0 %v4644
    %v4649 = vpop.xlane.xlu0 %4648
    %4650 = vadd.xlane.f32.xlu0 %v4645
    %v4651 = vpop.xlane.xlu0 %4650
    %4652 = vadd.xlane.f32.xlu0 %v4646
    %v4653 = vpop.xlane.xlu0 %4652
    %4654 = vadd.xlane.f32.xlu0 %v4647
    %v4655 = vpop.xlane.xlu0 %4654
    %v4656 = vmul.f32 %v4649, %v313
    %v4657 = vmul.f32 %v4651, %v313
    %v4658 = vmul.f32 %v4653, %v313
    %v4659 = vmul.f32 %v4655, %v313
    %v4660 = vadd.f32 %v4656, 1e-05
    %v4661 = vadd.f32 %v4657, 1e-05
    %v4662 = vadd.f32 %v4658, 1e-05
    %v4663 = vadd.f32 %v4659, 1e-05
    %v4664 = vrsqrt.pop %v4660
    %v4665 = vrsqrt.pop %v4661
    %v4666 = vrsqrt.pop %v4662
    %v4667 = vrsqrt.pop %v4663
    %v4668 = vmul.f32 %v4640, %v4664
    %v4669 = vmul.f32 %v4641, %v4665
    %v4670 = vmul.f32 %v4642, %v4666
    %v4671 = vmul.f32 %v4643, %v4667
    %v4673 = vlaneseq
    %v4674 = vshrl.u32 %v4673, 7
    %v4675 = vsub.s32 0, %v4674
    %v4676 = vrot.slane %v4626, %v4675
    %v4678 = vmul.f32 %v4668, %v4676
    %v4679 = vmul.f32 %v4669, %v4676
    %v4680 = vmul.f32 %v4670, %v4676
    %v4681 = vmul.f32 %v4671, %v4676
    %v4683 = vlaneseq
    %v4684 = vshrl.u32 %v4683, 7
    %v4685 = vsub.s32 0, %v4684
    %v4686 = vrot.slane %v4627, %v4685
    %v4688 = vadd.f32 %v4678, %v4686
    %v4689 = vadd.f32 %v4679, %v4686
    %v4690 = vadd.f32 %v4680, %v4686
    %v4691 = vadd.f32 %v4681, %v4686
    %v4692 = vpack.c.bf16 %v4689, %v4688
    %v4693 = vpack.c.bf16 %v4691, %v4690
    %v4694 = vld [vmem:[#allocation11] sm:$0xf]
    %v4695 = vld [vmem:[#allocation11 + $0x4] sm:$0xf]
    %v4696 = vld [vmem:[#allocation11 + $0x8] sm:$0xf]
    %v4697 = vld [vmem:[#allocation11 + $0xc] sm:$0xf]
    %v4698 = vld [vmem:[#allocation11 + $0x10] sm:$0xf]
    %v4699 = vld [vmem:[#allocation11 + $0x14] sm:$0xf]
    %v4700 = vld [vmem:[#allocation11 + $0x18] sm:$0xf]
    %v4701 = vld [vmem:[#allocation11 + $0x1c] sm:$0xf]
    %v4702 = vld [vmem:[#allocation11 + $0x20] sm:$0xf]
    %v4703 = vld [vmem:[#allocation11 + $0x24] sm:$0xf]
    %v4704 = vld [vmem:[#allocation11 + $0x28] sm:$0xf]
    %v4705 = vld [vmem:[#allocation11 + $0x2c] sm:$0xf]
    %v4706 = vld [vmem:[#allocation11 + $0x30] sm:$0xf]
    %v4707 = vld [vmem:[#allocation11 + $0x34] sm:$0xf]
    %v4708 = vld [vmem:[#allocation11 + $0x38] sm:$0xf]
    %v4709 = vld [vmem:[#allocation11 + $0x3c] sm:$0xf]
    %v4710 = vld [vmem:[%s17] sm:$0x1]
    %v4712 = vlaneseq
    %v4713 = vshrl.u32 %v4712, 7
    %v4714 = vsub.s32 0, %v4713
    %v4715 = vrot.slane %v4710, %v4714
    %v4733 = vunpack.c.l.b16 %v4694
    %v4734 = vunpack.c.l.b16 %v4695
    %v4735 = vunpack.c.l.b16 %v4696
    %v4736 = vunpack.c.l.b16 %v4697
    %v4737 = vunpack.c.l.b16 %v4698
    %v4738 = vunpack.c.l.b16 %v4699
    %v4739 = vunpack.c.l.b16 %v4700
    %v4740 = vunpack.c.l.b16 %v4701
    %v4741 = vunpack.c.l.b16 %v4702
    %v4742 = vunpack.c.l.b16 %v4703
    %v4743 = vunpack.c.l.b16 %v4704
    %v4744 = vunpack.c.l.b16 %v4705
    %v4745 = vunpack.c.l.b16 %v4706
    %v4746 = vunpack.c.l.b16 %v4707
    %v4747 = vunpack.c.l.b16 %v4708
    %v4748 = vunpack.c.l.b16 %v4709
    %v4749 = vpack.c.b16 %v4734, %v4733
    %v4750 = vpack.c.b16 %v4736, %v4735
    %v4751 = vpack.c.b16 %v4738, %v4737
    %v4752 = vpack.c.b16 %v4740, %v4739
    %v4753 = vpack.c.b16 %v4742, %v4741
    %v4754 = vpack.c.b16 %v4744, %v4743
    %v4755 = vpack.c.b16 %v4746, %v4745
    %v4756 = vpack.c.b16 %v4748, %v4747
    %4765 = vmatprep.subr.bf16.mxu0 0
    %4766 = vmatpush1.bf16.msra.mxu0 %v4756
    %4767 = vmatprep.subr.bf16.mxu0 0
    %4768 = vmatpush1.bf16.msra.mxu0 %v4755
    %4769 = vmatprep.subr.bf16.mxu0 0
    %4770 = vmatpush1.bf16.msra.mxu0 %v4754
    %4771 = vmatprep.subr.bf16.mxu0 0
    %4772 = vmatpush1.bf16.msra.mxu0 %v4753
    %4773 = vmatprep.subr.bf16.mxu0 0
    %4774 = vmatpush1.bf16.msra.mxu0 %v4752
    %4775 = vmatprep.subr.bf16.mxu0 0
    %4776 = vmatpush1.bf16.msra.mxu0 %v4751
    %4777 = vmatprep.subr.bf16.mxu0 0
    %4778 = vmatpush1.bf16.msra.mxu0 %v4750
    %4779 = vmatprep.subr.bf16.mxu0 0
    %4780 = vmatpush1.bf16.msra.mxu0 %v4749
    %4781 = vmatprep.subr.bf16.mxu0 0
    %4782 = vmatpush2.bf16.msra.mxu0 0
    %4783 = vmatprep.subr.bf16.mxu0 0
    %4784 = vmatpush2.bf16.msra.mxu0 0
    %4785 = vmatprep.subr.bf16.mxu0 0
    %4786 = vmatpush2.bf16.msra.mxu0 0
    %4787 = vmatprep.subr.bf16.mxu0 0
    %4788 = vmatpush2.bf16.msra.mxu0 0
    %4789 = vmatprep.subr.bf16.mxu0 0
    %4790 = vmatpush2.bf16.msra.mxu0 0
    %4791 = vmatprep.subr.bf16.mxu0 0
    %4792 = vmatpush2.bf16.msra.mxu0 0
    %4793 = vmatprep.subr.bf16.mxu0 0
    %4794 = vmatpush2.bf16.msra.mxu0 0
    %4795 = vmatprep.subr.bf16.mxu0 0
    %4796 = vmatpush2.bf16.msra.mxu0 0
    %4797 = vmatprep.mubr.bf16.mxu0 0
    %4798 = vmatmul.mubr.bf16.gmra.mxu0 %v4692
    %v4799 = vpop.f32.mrf.mxu0
    %v4800 = vadd.f32 %v4715, %v4799
    %v4801 = vpop.f32.mrf.mxu0
    %v4802 = vpop.f32.mrf.mxu0
    %v4803 = vadd.f32 %v4715, %v4802
    %v4804 = vpop.f32.mrf.mxu0
    %4805 = vmatprep.mubr.bf16.mxu0 0
    %4806 = vmatmul.mubr.bf16.gmra.mxu0 %v4693
    %v4807 = vpop.f32.mrf.mxu0
    %v4808 = vadd.f32 %v4715, %v4807
    %v4809 = vpop.f32.mrf.mxu0
    %v4810 = vpop.f32.mrf.mxu0
    %v4811 = vadd.f32 %v4715, %v4810
    %v4812 = vpop.f32.mrf.mxu0
    %4813 = vdwg.mxu0
    %4814 = vst [vmem:[#allocation13] sm:$0xff] %v4800
    %4815 = vst [vmem:[#allocation13 + $0x8] sm:$0xff] %v4803
    %s4816 = scalar_lea.vmem [#allocation13], 16
    %4817 = vst [vmem:[%s4816] sm:$0xff] %v4808
    %4818 = vst [vmem:[%s4816 + $0x8] sm:$0xff] %v4811
    // Predicated region
    $region98: #{bigram_lm_forward.1} parent=1 // pred_check
      _
    $region99: #{bigram_lm_forward.1} parent=1 // pred_check_branch
      %4820 = sbr.rel (0) target = $region101
    $region100: #{bigram_lm_forward.1} parent=1 // pred_region
      %s4822 = ssub.s32 512, 512
      %4823 = vsyncadd [#allocation4], %s4822
      %s4824 = sshll.u32 [#allocation13], 4
      %s4825 = int_to_ptr.vmem [resolvable:$true] %s4824
      %4830 = dma.vmem_to_hbm [thread:$0]  %s4825, 512, %s18, [#allocation4], 128, 128, 8
    $region101: #{bigram_lm_forward.1} parent=1 // pred_fallthru
      _
    // Predicated region
    $region102: #{bigram_lm_forward.1} parent=1 // pred_check
      _
    $region103: #{bigram_lm_forward.1} parent=1 // pred_check_branch
      %4832 = sbr.rel (0) target = $region105
    $region104: #{bigram_lm_forward.1} parent=1 // pred_region
      %4833 = dma.done [#allocation4], 512
    $region105: #{bigram_lm_forward.1} parent=1 // pred_fallthru
      _
    %4834 = vsyncpa [#allocation3], 1
    %4835 = vsyncpa [#allocation6], 1
    %4836 = vsyncpa [#allocation9], 1
    %4837 = vsyncpa [#allocation12], 1
    %4838 = vsyncpa [#allocation4], 1

</llo_original>
